<compile_context>
chip_gen: v7x
topology: tpu7x:2x2x1
jax: 0.10.0
libtpu: 0.0.40
codegen_flags: <defaults>
</compile_context>

<pallas_src>
from functools import partial

import jax
import jax.numpy as jnp
from jax import lax
from jax.experimental import pallas as pl
from jax.experimental.pallas import tpu as pltpu


# ----------------------------------------------------------------------------
# helpers
# ----------------------------------------------------------------------------
def _round_up(x, m):
    return (x + m - 1) // m * m


def _choose_rb(R):
    """Rows per grid step: as large as reasonable while keeping >=2 row steps."""
    for rb in (64, 32, 16, 8):
        if R >= 2 * rb:
            return rb
    return max(1, min(R, 8))


def _layer_norm(x, gamma, beta, eps=1e-12):
    mu = jnp.mean(x, axis=-1, keepdims=True)
    var = jnp.mean((x - mu) ** 2, axis=-1, keepdims=True)
    return (x - mu) * lax.rsqrt(var + eps) * gamma + beta


# ----------------------------------------------------------------------------
# Pallas kernels
# ----------------------------------------------------------------------------
def encoder_pool_kernel(x_ref, mask_ref, embln_ref,
                        wqkv_ref, bqkv_ref, wo_ref, bo_ref, ln1_ref,
                        w1_ref, b1_ref, w2_ref, b2_ref, ln2_ref,
                        out_ref, x_scr, ctx_scr, *, num_heads):
    """One encoder layer for one block of rows.

    Grid = (row_blocks, layers); layers innermost ("arbitrary").  The residual
    stream lives in x_scr across the layer axis; embedding LayerNorm runs on the
    first layer step and masked mean pooling on the last.
    """
    layer = pl.program_id(1)
    n_layers = pl.num_programs(1)
    RB, L, H = x_scr.shape
    dh = H // num_heads
    scale = 1.0 / (dh ** 0.5)

    mask3 = mask_ref[...].astype(jnp.float32)            # (RB, 1, L)
    neg = (1.0 - mask3) * (-1e9)                         # additive attention mask

    # ---- embedding LayerNorm fused into the first layer step --------------
    @pl.when(layer == 0)
    def _():
        xe = x_ref[...].astype(jnp.float32)              # (RB, L, H), bf16 in HBM
        ln = embln_ref[...]
        x_scr[...] = _layer_norm(xe, ln[0:1], ln[1:2])

    x2 = x_scr[...].reshape(RB * L, H)                   # f32 residual stream
    x2b = x2.astype(jnp.bfloat16)

    # ---- Q/K/V: three wide (H -> H) bf16 MXU matmuls (leading-dim weight idx)
    q2 = jnp.dot(x2b, wqkv_ref[0], preferred_element_type=jnp.float32) + bqkv_ref[0]
    k2 = jnp.dot(x2b, wqkv_ref[1], preferred_element_type=jnp.float32) + bqkv_ref[1]
    v2 = jnp.dot(x2b, wqkv_ref[2], preferred_element_type=jnp.float32) + bqkv_ref[2]
    q2 = q2 * scale                                      # fold 1/sqrt(dh) into q once

    q3 = q2.reshape(RB, L, H).astype(jnp.bfloat16)
    k3 = k2.reshape(RB, L, H).astype(jnp.bfloat16)
    v3 = v2.reshape(RB, L, H).astype(jnp.bfloat16)

    # TODO(synk): folding heads into the dot_general batch dim needs a 4-D transpose
    # that Mosaic does not reliably lower at these shapes; heads remain a short
    # static loop, but per-head contexts are assembled once in VMEM and projected
    # by a single H-wide matmul (no per-head accumulation chain / matmuls).
    for h in range(num_heads):
        sl = slice(h * dh, (h + 1) * dh)
        s = lax.dot_general(q3[..., sl], k3[..., sl],
                            (((2,), (2,)), ((0,), (0,))),
                            preferred_element_type=jnp.float32)       # (RB, L, L)
        s = s + neg
        s = s - jnp.max(s, axis=-1, keepdims=True)
        p = jnp.exp(s)
        p = p * pl.reciprocal(jnp.sum(p, axis=-1, keepdims=True), approx=True)
        ctx_scr[:, :, sl] = lax.dot_general(p.astype(jnp.bfloat16), v3[..., sl],
                                            (((2,), (1,)), ((0,), (0,))),
                                            preferred_element_type=jnp.float32)

    attn2 = jnp.dot(ctx_scr[...].reshape(RB * L, H).astype(jnp.bfloat16), wo_ref[...],
                    preferred_element_type=jnp.float32) + bo_ref[...]

    ln1 = ln1_ref[...]
    h1 = _layer_norm(x2 + attn2, ln1[0:1], ln1[1:2])

    ff = jnp.dot(h1.astype(jnp.bfloat16), w1_ref[...],
                 preferred_element_type=jnp.float32) + b1_ref[...]
    ff = jax.nn.gelu(ff, approximate=True)   # TODO(synk): HF BERT uses exact erf GELU
    ff = jnp.dot(ff.astype(jnp.bfloat16), w2_ref[...],
                 preferred_element_type=jnp.float32) + b2_ref[...]

    ln2 = ln2_ref[...]
    xo = _layer_norm(h1 + ff, ln2[0:1], ln2[1:2])
    x_scr[...] = xo.reshape(RB, L, H)

    # ---- SBERT masked mean pooling on the last layer step ------------------
    @pl.when(layer == n_layers - 1)
    def _():
        x3 = xo.reshape(RB, L, H)
        m = mask3[:, 0, :]                               # (RB, L)
        summed = jnp.sum(x3 * m[:, :, None], axis=1)     # (RB, H)
        cnt = jnp.maximum(jnp.sum(m, axis=1, keepdims=True), 1e-9)
        out_ref[...] = (summed / cnt).astype(out_ref.dtype)


def episode_kernel(c_ref, w_ref, b_ref, out_ref):
    """SelfAttention(q=k=v) over E comments, max over E, final Linear."""
    c = c_ref[...].astype(jnp.float32)                   # (blk, E, H)
    H = c.shape[-1]
    cb = c.astype(jnp.bfloat16)
    s = lax.dot_general(cb, cb, (((2,), (2,)), ((0,), (0,))),
                        preferred_element_type=jnp.float32) * (1.0 / (H ** 0.5))
    s = s - jnp.max(s, axis=-1, keepdims=True)
    p = jnp.exp(s)
    p = p * pl.reciprocal(jnp.sum(p, axis=-1, keepdims=True), approx=True)
    a = lax.dot_general(p.astype(jnp.bfloat16), cb, (((2,), (1,)), ((0,), (0,))),
                        preferred_element_type=jnp.float32)           # (blk, E, H)
    mx = jnp.max(a, axis=1)                                            # (blk, H)
    out = jnp.dot(mx.astype(jnp.bfloat16), w_ref[...],
                  preferred_element_type=jnp.float32) + b_ref[...]
    out_ref[...] = out.astype(out_ref.dtype)


# ----------------------------------------------------------------------------
# pallas_call wrappers
# ----------------------------------------------------------------------------
def encoder_and_pool(x, mask3, emb_ln, enc, num_heads):
    """All encoder layers (streamed over a grid axis) + masked mean pooling."""
    R, L, H = x.shape
    NL = enc["wqkv"].shape[0]
    F = enc["w1"].shape[2]

    RB = _choose_rb(R)
    Rp = _round_up(R, RB)
    if Rp != R:                                          # tail handling via padding
        x = jnp.pad(x, ((0, Rp - R), (0, 0), (0, 0)))
        mask3 = jnp.pad(mask3, ((0, Rp - R), (0, 0), (0, 0)))

    def _wspec(shape):
        """Per-layer streamed weight: layer axis squeezed, indexed by grid axis 1."""
        nd = len(shape) - 1
        return pl.BlockSpec((None,) + tuple(shape[1:]),
                            lambda r, l, nd=nd: (l,) + (0,) * nd)

    # Rough VMEM budget: 2x (streamed per-layer weights + activation/mask/out blocks)
    # + scratch, clamped to [32 MiB, 64 MiB] (v7x physical ceiling).
    blk_in_bytes = (RB * L * H * 2 + RB * L * 4 + 2 * H * 4
                    + 3 * H * H * 2 + 3 * H * 4 + H * H * 2 + H * 4 + 2 * H * 4
                    + H * F * 2 + F * 4 + F * H * 2 + H * 4 + 2 * H * 4)
    out_bytes = RB * H * 4
    scratch_bytes = 2 * RB * L * H * 4
    vmem_limit = int(min(max(2 * (blk_in_bytes + out_bytes) + scratch_bytes + (8 << 20),
                             32 << 20), 64 << 20))

    out = pl.pallas_call(
        partial(encoder_pool_kernel, num_heads=num_heads),
        out_shape=jax.ShapeDtypeStruct((Rp, H), jnp.float32),
        grid=(Rp // RB, NL),
        in_specs=[
            pl.BlockSpec((RB, L, H), lambda r, l: (r, 0, 0)),
            pl.BlockSpec((RB, 1, L), lambda r, l: (r, 0, 0)),
            pl.BlockSpec((2, H), lambda r, l: (0, 0)),
            _wspec(enc["wqkv"].shape), _wspec(enc["bqkv"].shape),
            _wspec(enc["wo"].shape), _wspec(enc["bo"].shape),
            _wspec(enc["ln1"].shape),
            _wspec(enc["w1"].shape), _wspec(enc["b1"].shape),
            _wspec(enc["w2"].shape), _wspec(enc["b2"].shape),
            _wspec(enc["ln2"].shape),
        ],
        out_specs=pl.BlockSpec((RB, H), lambda r, l: (r, 0)),
        scratch_shapes=[pltpu.VMEM((RB, L, H), jnp.float32),   # residual stream carry
                        pltpu.VMEM((RB, L, H), jnp.float32)],  # per-head ctx assembly
        compiler_params=pltpu.CompilerParams(
            dimension_semantics=("parallel", "arbitrary"),
            vmem_limit_bytes=vmem_limit),
    )(x, mask3, emb_ln, enc["wqkv"], enc["bqkv"], enc["wo"], enc["bo"], enc["ln1"],
      enc["w1"], enc["b1"], enc["w2"], enc["b2"], enc["ln2"])
    return out[:R]


def episode_embed(comment, w, b, *, blk=8):
    BN, E, H = comment.shape
    D = w.shape[1]
    blk = min(blk, BN)
    BNp = _round_up(BN, blk)
    if BNp != BN:
        comment = jnp.pad(comment, ((0, BNp - BN), (0, 0), (0, 0)))
    out = pl.pallas_call(
        episode_kernel,
        out_shape=jax.ShapeDtypeStruct((BNp, D), jnp.float32),
        grid=(BNp // blk,),
        in_specs=[pl.BlockSpec((blk, E, H), lambda i: (i, 0, 0)),
                  pl.BlockSpec((H, D), lambda i: (0, 0)),
                  pl.BlockSpec((1, D), lambda i: (0, 0))],
        out_specs=pl.BlockSpec((blk, D), lambda i: (i, 0)),
        compiler_params=pltpu.CompilerParams(dimension_semantics=("parallel",)),
    )(comment, w, b)
    return out[:BN]


# ----------------------------------------------------------------------------
# Parameter init (deterministic, synthetic) + forward glue
# ----------------------------------------------------------------------------
def init_params(key, vocab, L, H, F, D, n_layers):
    keys = jax.random.split(key, 3 + n_layers)
    scale = 0.02
    bf = jnp.bfloat16
    ln = jnp.stack([jnp.ones((H,), jnp.float32), jnp.zeros((H,), jnp.float32)])  # (2,H)

    wqkv, wo, w1, w2 = [], [], [], []
    for i in range(n_layers):
        lk = jax.random.split(keys[3 + i], 4)
        wqkv.append(jax.random.normal(lk[0], (3, H, H), jnp.float32) * scale)
        wo.append(jax.random.normal(lk[1], (H, H), jnp.float32) * scale)
        w1.append(jax.random.normal(lk[2], (H, F), jnp.float32) * scale)
        w2.append(jax.random.normal(lk[3], (F, H), jnp.float32) * scale)

    params = {
        "tok_emb": (jax.random.normal(keys[0], (vocab, H), jnp.float32) * scale).astype(bf),
        "pos_emb": (jax.random.normal(keys[1], (L, H), jnp.float32) * scale).astype(bf),
        "emb_ln": ln,
        "enc": {                                          # layer-stacked, grid-streamed
            "wqkv": jnp.stack(wqkv).astype(bf),           # (NL, 3, H, H) q|k|v on dim 1
            "bqkv": jnp.zeros((n_layers, 3, 1, H), jnp.float32),
            "wo":   jnp.stack(wo).astype(bf),             # (NL, H, H)
            "bo":   jnp.zeros((n_layers, 1, H), jnp.float32),
            "ln1":  jnp.tile(ln[None], (n_layers, 1, 1)),
            "w1":   jnp.stack(w1).astype(bf),             # (NL, H, F)
            "b1":   jnp.zeros((n_layers, 1, F), jnp.float32),
            "w2":   jnp.stack(w2).astype(bf),             # (NL, F, H)
            "b2":   jnp.zeros((n_layers, 1, H), jnp.float32),
            "ln2":  jnp.tile(ln[None], (n_layers, 1, 1)),
        },
        "lin_w": (jax.random.normal(keys[2], (H, D), jnp.float32) * scale).astype(bf),
        "lin_b": jnp.zeros((1, D), jnp.float32),
    }
    return params


def erlas_forward(params, input_ids, attention_mask, *, num_heads):
    """Returns (episode_embeddings [B,N,D], comment_embeddings [B*N,E,H])."""
    B, N, E, L = input_ids.shape
    R = B * N * E
    H = params["tok_emb"].shape[1]

    ids = input_ids.reshape(R, L)                         # 'b n e l -> (b n e) l'
    mask3 = attention_mask.reshape(R, 1, L).astype(jnp.float32)

    # Embedding lookup (gather stays in XLA glue); add is bf16 — the embedding
    # LayerNorm is fused into the Pallas kernel (pl.when(layer == 0)).
    x = params["tok_emb"][ids] + params["pos_emb"][None]  # (R, L, H) bf16

    # Streamed transformer encoder + masked mean pooling (Pallas, one call)
    comment = encoder_and_pool(x, mask3, params["emb_ln"], params["enc"], num_heads)
    comment = comment.reshape(B * N, E, H)                # '(b n e) h -> (b n) e h'

    # SelfAttention over comments + max over e + Linear (Pallas, gridded over BN)
    episode = episode_embed(comment, params["lin_w"], params["lin_b"])  # (B*N, D)
    episode = episode.reshape(B, N, -1)                   # '(b n) d -> b n d'
    return episode, comment


if __name__ == "__main__":
    B, N, E, L = 2, 2, 4, 8
    VOCAB, H, F, NUM_HEADS, D, N_LAYERS = 50, 32, 64, 4, 16, 2

    key = jax.random.PRNGKey(0)
    kp, ki, km = jax.random.split(key, 3)
    params = init_params(kp, VOCAB, L, H, F, D, N_LAYERS)

    input_ids = jax.random.randint(ki, (B, N, E, L), 0, VOCAB, dtype=jnp.int32)
    lengths = jax.random.randint(km, (B, N, E), 3, L + 1)
    positions = jnp.arange(L)[None, None, None, :]
    attention_mask = (positions < lengths[..., None]).astype(jnp.int32)

    episode, comment = erlas_forward(params, input_ids, attention_mask,
                                     num_heads=NUM_HEADS)
    jax.block_until_ready((episode, comment))

    assert episode.shape == (B, N, D), episode.shape
    assert comment.shape == (B * N, E, H), comment.shape
    assert jnp.all(jnp.isfinite(episode)) and jnp.all(jnp.isfinite(comment))
    print("KERNEL_OK")
</pallas_src>

<mosaic_0001>
module attributes {stable_mosaic.version = 11 : i64} {
  func.func @encoder_pool_kernel(%arg0: i32, %arg1: i32, %arg2: memref<8x8x32xbf16, #tpu.memory_space<vmem>>, %arg3: memref<8x1x8xf32, #tpu.memory_space<vmem>>, %arg4: memref<2x32xf32, #tpu.memory_space<vmem>>, %arg5: memref<1x3x32x32xbf16, #tpu.memory_space<vmem>>, %arg6: memref<1x3x1x32xf32, #tpu.memory_space<vmem>>, %arg7: memref<1x32x32xbf16, #tpu.memory_space<vmem>>, %arg8: memref<1x1x32xf32, #tpu.memory_space<vmem>>, %arg9: memref<1x2x32xf32, #tpu.memory_space<vmem>>, %arg10: memref<1x32x64xbf16, #tpu.memory_space<vmem>>, %arg11: memref<1x1x64xf32, #tpu.memory_space<vmem>>, %arg12: memref<1x64x32xbf16, #tpu.memory_space<vmem>>, %arg13: memref<1x1x32xf32, #tpu.memory_space<vmem>>, %arg14: memref<1x2x32xf32, #tpu.memory_space<vmem>>, %arg15: memref<8x32xf32, #tpu.memory_space<vmem>>, %arg16: memref<8x8x32xf32, #tpu.memory_space<vmem>>, %arg17: memref<8x8x32xf32, #tpu.memory_space<vmem>>) attributes {dimension_semantics = [#tpu.dimension_semantics<parallel>, #tpu.dimension_semantics<arbitrary>], iteration_bounds = array<i64: 2, 2>, scalar_prefetch = 0 : i64, scratch_operands = 2 : i64, tpu.core_type = #tpu.core_type<tc>, window_params = [{transform_indices = @transform_0, window_bounds = array<i64: 8, 8, 32>}, {transform_indices = @transform_1, window_bounds = array<i64: 8, 1, 8>}, {pipeline_mode = #tpu.pipeline_mode<synchronous>, transform_indices = @transform_2, window_bounds = array<i64: 2, 32>}, {transform_indices = @transform_3, window_bounds = array<i64: 1, 3, 32, 32>}, {transform_indices = @transform_4, window_bounds = array<i64: 1, 3, 1, 32>}, {transform_indices = @transform_5, window_bounds = array<i64: 1, 32, 32>}, {transform_indices = @transform_6, window_bounds = array<i64: 1, 1, 32>}, {transform_indices = @transform_7, window_bounds = array<i64: 1, 2, 32>}, {transform_indices = @transform_8, window_bounds = array<i64: 1, 32, 64>}, {transform_indices = @transform_9, window_bounds = array<i64: 1, 1, 64>}, {transform_indices = @transform_10, window_bounds = array<i64: 1, 64, 32>}, {transform_indices = @transform_11, window_bounds = array<i64: 1, 1, 32>}, {transform_indices = @transform_12, window_bounds = array<i64: 1, 2, 32>}, {transform_indices = @transform_13, window_bounds = array<i64: 8, 32>}]} {
    %c0 = arith.constant 0 : index
    %c0_0 = arith.constant 0 : index
    %c0_1 = arith.constant 0 : index
    %0 = vector.load %arg3[%c0, %c0_0, %c0_1] : memref<8x1x8xf32, #tpu.memory_space<vmem>>, vector<8x1x8xf32>
    %cst = arith.constant 1.000000e+00 : f32
    %1 = vector.broadcast %cst : f32 to vector<8x1x8xf32>
    %2 = arith.subf %1, %0 : vector<8x1x8xf32>
    %cst_2 = arith.constant -1.000000e+09 : f32
    %3 = vector.broadcast %cst_2 : f32 to vector<8x1x8xf32>
    %4 = arith.mulf %2, %3 : vector<8x1x8xf32>
    %c0_i32 = arith.constant 0 : i32
    %5 = arith.cmpi eq, %arg1, %c0_i32 : i32
    %6 = arith.extui %5 : i1 to i32
    %c0_i32_3 = arith.constant 0 : i32
    %7 = arith.cmpi ne, %6, %c0_i32_3 : i32
    scf.if %7 {
      %c0_106 = arith.constant 0 : index
      %c0_107 = arith.constant 0 : index
      %c0_108 = arith.constant 0 : index
      %214 = vector.load %arg2[%c0_106, %c0_107, %c0_108] : memref<8x8x32xbf16, #tpu.memory_space<vmem>>, vector<8x8x32xbf16>
      %215 = arith.extf %214 : vector<8x8x32xbf16> to vector<8x8x32xf32>
      %c0_109 = arith.constant 0 : index
      %c0_110 = arith.constant 0 : index
      %216 = vector.load %arg4[%c0_109, %c0_110] : memref<2x32xf32, #tpu.memory_space<vmem>>, vector<2x32xf32>
      %217 = vector.extract_strided_slice %216 {offsets = [0, 0], sizes = [1, 32], strides = [1, 1]} : vector<2x32xf32> to vector<1x32xf32>
      %218 = vector.extract_strided_slice %216 {offsets = [1, 0], sizes = [1, 32], strides = [1, 1]} : vector<2x32xf32> to vector<1x32xf32>
      %cst_111 = arith.constant dense<0.000000e+00> : vector<8x8xf32>
      %219 = vector.multi_reduction <add>, %215, %cst_111 [2] : vector<8x8x32xf32> to vector<8x8xf32>
      %220 = vector.shape_cast %219 : vector<8x8xf32> to vector<8x8x1xf32>
      %cst_112 = arith.constant 3.200000e+01 : f32
      %221 = vector.broadcast %cst_112 : f32 to vector<8x8x1xf32>
      %222 = arith.divf %220, %221 : vector<8x8x1xf32>
      %223 = vector.broadcast %222 : vector<8x8x1xf32> to vector<8x8x32xf32>
      %224 = arith.subf %215, %223 : vector<8x8x32xf32>
      %225 = arith.mulf %224, %224 : vector<8x8x32xf32>
      %cst_113 = arith.constant dense<0.000000e+00> : vector<8x8xf32>
      %226 = vector.multi_reduction <add>, %225, %cst_113 [2] : vector<8x8x32xf32> to vector<8x8xf32>
      %227 = vector.shape_cast %226 : vector<8x8xf32> to vector<8x8x1xf32>
      %cst_114 = arith.constant 3.200000e+01 : f32
      %228 = vector.broadcast %cst_114 : f32 to vector<8x8x1xf32>
      %229 = arith.divf %227, %228 : vector<8x8x1xf32>
      %230 = vector.broadcast %222 : vector<8x8x1xf32> to vector<8x8x32xf32>
      %231 = arith.subf %215, %230 : vector<8x8x32xf32>
      %cst_115 = arith.constant 9.99999996E-13 : f32
      %232 = vector.broadcast %cst_115 : f32 to vector<8x8x1xf32>
      %233 = arith.addf %229, %232 : vector<8x8x1xf32>
      %234 = math.rsqrt %233 : vector<8x8x1xf32>
      %235 = vector.broadcast %234 : vector<8x8x1xf32> to vector<8x8x32xf32>
      %236 = arith.mulf %231, %235 : vector<8x8x32xf32>
      %237 = vector.shape_cast %217 : vector<1x32xf32> to vector<1x1x32xf32>
      %238 = vector.broadcast %237 : vector<1x1x32xf32> to vector<8x8x32xf32>
      %239 = arith.mulf %236, %238 : vector<8x8x32xf32>
      %240 = vector.shape_cast %218 : vector<1x32xf32> to vector<1x1x32xf32>
      %241 = vector.broadcast %240 : vector<1x1x32xf32> to vector<8x8x32xf32>
      %242 = arith.addf %239, %241 : vector<8x8x32xf32>
      %c0_116 = arith.constant 0 : index
      %c0_117 = arith.constant 0 : index
      %c0_118 = arith.constant 0 : index
      %243 = vector.load %arg16[%c0_116, %c0_117, %c0_118] : memref<8x8x32xf32, #tpu.memory_space<vmem>>, vector<8x8x32xf32>
      tpu.vector_store %arg16[%c0_116, %c0_117, %c0_118], %242 {strides = array<i32>} : memref<8x8x32xf32, #tpu.memory_space<vmem>>, vector<8x8x32xf32>,
    } else {
    }
    %c0_4 = arith.constant 0 : index
    %c0_5 = arith.constant 0 : index
    %c0_6 = arith.constant 0 : index
    %8 = vector.load %arg16[%c0_4, %c0_5, %c0_6] : memref<8x8x32xf32, #tpu.memory_space<vmem>>, vector<8x8x32xf32>
    %9 = vector.shape_cast %8 : vector<8x8x32xf32> to vector<64x32xf32>
    %10 = arith.truncf %9 : vector<64x32xf32> to vector<64x32xbf16>
    %c0_7 = arith.constant 0 : index
    %c0_8 = arith.constant 0 : index
    %c0_9 = arith.constant 0 : index
    %c0_10 = arith.constant 0 : index
    %11 = vector.load %arg5[%c0_7, %c0_8, %c0_9, %c0_10] : memref<1x3x32x32xbf16, #tpu.memory_space<vmem>>, vector<1x1x32x32xbf16>
    %12 = vector.shape_cast %11 : vector<1x1x32x32xbf16> to vector<32x32xbf16>
    %cst_11 = arith.constant dense<0.000000e+00> : vector<64x32xf32>
    %13 = tpu.matmul %10, %12, %cst_11 {dimension_numbers = #tpu.dot_dimension_numbers<[1], [0], [0], [1], [0, 0, 1, 1], [], []>} : vector<64x32xbf16>, vector<32x32xbf16>, vector<64x32xf32> -> vector<64x32xf32>
    %c0_12 = arith.constant 0 : index
    %c0_13 = arith.constant 0 : index
    %c0_14 = arith.constant 0 : index
    %c0_15 = arith.constant 0 : index
    %14 = vector.load %arg6[%c0_12, %c0_13, %c0_14, %c0_15] : memref<1x3x1x32xf32, #tpu.memory_space<vmem>>, vector<1x1x1x32xf32>
    %15 = vector.shape_cast %14 : vector<1x1x1x32xf32> to vector<1x32xf32>
    %16 = vector.broadcast %15 : vector<1x32xf32> to vector<64x32xf32>
    %17 = arith.addf %13, %16 : vector<64x32xf32>
    %c0_16 = arith.constant 0 : index
    %c1 = arith.constant 1 : index
    %c0_17 = arith.constant 0 : index
    %c0_18 = arith.constant 0 : index
    %18 = vector.load %arg5[%c0_16, %c1, %c0_17, %c0_18] : memref<1x3x32x32xbf16, #tpu.memory_space<vmem>>, vector<1x1x32x32xbf16>
    %19 = vector.shape_cast %18 : vector<1x1x32x32xbf16> to vector<32x32xbf16>
    %cst_19 = arith.constant dense<0.000000e+00> : vector<64x32xf32>
    %20 = tpu.matmul %10, %19, %cst_19 {dimension_numbers = #tpu.dot_dimension_numbers<[1], [0], [0], [1], [0, 0, 1, 1], [], []>} : vector<64x32xbf16>, vector<32x32xbf16>, vector<64x32xf32> -> vector<64x32xf32>
    %c0_20 = arith.constant 0 : index
    %c1_21 = arith.constant 1 : index
    %c0_22 = arith.constant 0 : index
    %c0_23 = arith.constant 0 : index
    %21 = vector.load %arg6[%c0_20, %c1_21, %c0_22, %c0_23] : memref<1x3x1x32xf32, #tpu.memory_space<vmem>>, vector<1x1x1x32xf32>
    %22 = vector.shape_cast %21 : vector<1x1x1x32xf32> to vector<1x32xf32>
    %23 = vector.broadcast %22 : vector<1x32xf32> to vector<64x32xf32>
    %24 = arith.addf %20, %23 : vector<64x32xf32>
    %c0_24 = arith.constant 0 : index
    %c2 = arith.constant 2 : index
    %c0_25 = arith.constant 0 : index
    %c0_26 = arith.constant 0 : index
    %25 = vector.load %arg5[%c0_24, %c2, %c0_25, %c0_26] : memref<1x3x32x32xbf16, #tpu.memory_space<vmem>>, vector<1x1x32x32xbf16>
    %26 = vector.shape_cast %25 : vector<1x1x32x32xbf16> to vector<32x32xbf16>
    %cst_27 = arith.constant dense<0.000000e+00> : vector<64x32xf32>
    %27 = tpu.matmul %10, %26, %cst_27 {dimension_numbers = #tpu.dot_dimension_numbers<[1], [0], [0], [1], [0, 0, 1, 1], [], []>} : vector<64x32xbf16>, vector<32x32xbf16>, vector<64x32xf32> -> vector<64x32xf32>
    %c0_28 = arith.constant 0 : index
    %c2_29 = arith.constant 2 : index
    %c0_30 = arith.constant 0 : index
    %c0_31 = arith.constant 0 : index
    %28 = vector.load %arg6[%c0_28, %c2_29, %c0_30, %c0_31] : memref<1x3x1x32xf32, #tpu.memory_space<vmem>>, vector<1x1x1x32xf32>
    %29 = vector.shape_cast %28 : vector<1x1x1x32xf32> to vector<1x32xf32>
    %30 = vector.broadcast %29 : vector<1x32xf32> to vector<64x32xf32>
    %31 = arith.addf %27, %30 : vector<64x32xf32>
    %cst_32 = arith.constant 0.353553385 : f32
    %32 = vector.broadcast %cst_32 : f32 to vector<64x32xf32>
    %33 = arith.mulf %17, %32 : vector<64x32xf32>
    %34 = vector.shape_cast %33 : vector<64x32xf32> to vector<8x8x32xf32>
    %35 = arith.truncf %34 : vector<8x8x32xf32> to vector<8x8x32xbf16>
    %36 = vector.shape_cast %24 : vector<64x32xf32> to vector<8x8x32xf32>
    %37 = arith.truncf %36 : vector<8x8x32xf32> to vector<8x8x32xbf16>
    %38 = vector.shape_cast %31 : vector<64x32xf32> to vector<8x8x32xf32>
    %39 = arith.truncf %38 : vector<8x8x32xf32> to vector<8x8x32xbf16>
    %40 = vector.extract_strided_slice %35 {offsets = [0, 0, 0], sizes = [8, 8, 8], strides = [1, 1, 1]} : vector<8x8x32xbf16> to vector<8x8x8xbf16>
    %41 = vector.extract_strided_slice %37 {offsets = [0, 0, 0], sizes = [8, 8, 8], strides = [1, 1, 1]} : vector<8x8x32xbf16> to vector<8x8x8xbf16>
    %cst_33 = arith.constant dense<0.000000e+00> : vector<8x8x8xf32>
    %42 = tpu.matmul %40, %41, %cst_33 {dimension_numbers = #tpu.dot_dimension_numbers<[2], [2], [1], [1], [0, 0, 0, 1, 1, 1], [0], [0]>} : vector<8x8x8xbf16>, vector<8x8x8xbf16>, vector<8x8x8xf32> -> vector<8x8x8xf32>
    %43 = vector.broadcast %4 : vector<8x1x8xf32> to vector<8x8x8xf32>
    %44 = arith.addf %42, %43 : vector<8x8x8xf32>
    %cst_34 = arith.constant dense<0xFF800000> : vector<8x8xf32>
    %45 = vector.multi_reduction <maximumf>, %44, %cst_34 [2] : vector<8x8x8xf32> to vector<8x8xf32>
    %46 = vector.shape_cast %45 : vector<8x8xf32> to vector<8x8x1xf32>
    %47 = vector.broadcast %46 : vector<8x8x1xf32> to vector<8x8x8xf32>
    %48 = arith.subf %44, %47 : vector<8x8x8xf32>
    %49 = math.exp %48 : vector<8x8x8xf32>
    %cst_35 = arith.constant dense<0.000000e+00> : vector<8x8xf32>
    %50 = vector.multi_reduction <add>, %49, %cst_35 [2] : vector<8x8x8xf32> to vector<8x8xf32>
    %51 = vector.shape_cast %50 : vector<8x8xf32> to vector<8x8x1xf32>
    %52 = tpu.reciprocal %51 {approx = true} : vector<8x8x1xf32> -> vector<8x8x1xf32>
    %53 = vector.broadcast %52 : vector<8x8x1xf32> to vector<8x8x8xf32>
    %54 = arith.mulf %49, %53 : vector<8x8x8xf32>
    %55 = arith.truncf %54 : vector<8x8x8xf32> to vector<8x8x8xbf16>
    %56 = vector.extract_strided_slice %39 {offsets = [0, 0, 0], sizes = [8, 8, 8], strides = [1, 1, 1]} : vector<8x8x32xbf16> to vector<8x8x8xbf16>
    %cst_36 = arith.constant dense<0.000000e+00> : vector<8x8x8xf32>
    %57 = tpu.matmul %55, %56, %cst_36 {dimension_numbers = #tpu.dot_dimension_numbers<[2], [1], [1], [2], [0, 0, 0, 1, 1, 2], [0], [0]>} : vector<8x8x8xbf16>, vector<8x8x8xbf16>, vector<8x8x8xf32> -> vector<8x8x8xf32>
    %c0_37 = arith.constant 0 : index
    %c0_38 = arith.constant 0 : index
    %c0_39 = arith.constant 0 : index
    %58 = vector.load %arg17[%c0_37, %c0_38, %c0_39] : memref<8x8x32xf32, #tpu.memory_space<vmem>>, vector<8x8x8xf32>
    tpu.vector_store %arg17[%c0_37, %c0_38, %c0_39], %57 {strides = array<i32>} : memref<8x8x32xf32, #tpu.memory_space<vmem>>, vector<8x8x8xf32>,
    %59 = vector.extract_strided_slice %35 {offsets = [0, 0, 8], sizes = [8, 8, 8], strides = [1, 1, 1]} : vector<8x8x32xbf16> to vector<8x8x8xbf16>
    %60 = vector.extract_strided_slice %37 {offsets = [0, 0, 8], sizes = [8, 8, 8], strides = [1, 1, 1]} : vector<8x8x32xbf16> to vector<8x8x8xbf16>
    %cst_40 = arith.constant dense<0.000000e+00> : vector<8x8x8xf32>
    %61 = tpu.matmul %59, %60, %cst_40 {dimension_numbers = #tpu.dot_dimension_numbers<[2], [2], [1], [1], [0, 0, 0, 1, 1, 1], [0], [0]>} : vector<8x8x8xbf16>, vector<8x8x8xbf16>, vector<8x8x8xf32> -> vector<8x8x8xf32>
    %62 = vector.broadcast %4 : vector<8x1x8xf32> to vector<8x8x8xf32>
    %63 = arith.addf %61, %62 : vector<8x8x8xf32>
    %cst_41 = arith.constant dense<0xFF800000> : vector<8x8xf32>
    %64 = vector.multi_reduction <maximumf>, %63, %cst_41 [2] : vector<8x8x8xf32> to vector<8x8xf32>
    %65 = vector.shape_cast %64 : vector<8x8xf32> to vector<8x8x1xf32>
    %66 = vector.broadcast %65 : vector<8x8x1xf32> to vector<8x8x8xf32>
    %67 = arith.subf %63, %66 : vector<8x8x8xf32>
    %68 = math.exp %67 : vector<8x8x8xf32>
    %cst_42 = arith.constant dense<0.000000e+00> : vector<8x8xf32>
    %69 = vector.multi_reduction <add>, %68, %cst_42 [2] : vector<8x8x8xf32> to vector<8x8xf32>
    %70 = vector.shape_cast %69 : vector<8x8xf32> to vector<8x8x1xf32>
    %71 = tpu.reciprocal %70 {approx = true} : vector<8x8x1xf32> -> vector<8x8x1xf32>
    %72 = vector.broadcast %71 : vector<8x8x1xf32> to vector<8x8x8xf32>
    %73 = arith.mulf %68, %72 : vector<8x8x8xf32>
    %74 = arith.truncf %73 : vector<8x8x8xf32> to vector<8x8x8xbf16>
    %75 = vector.extract_strided_slice %39 {offsets = [0, 0, 8], sizes = [8, 8, 8], strides = [1, 1, 1]} : vector<8x8x32xbf16> to vector<8x8x8xbf16>
    %cst_43 = arith.constant dense<0.000000e+00> : vector<8x8x8xf32>
    %76 = tpu.matmul %74, %75, %cst_43 {dimension_numbers = #tpu.dot_dimension_numbers<[2], [1], [1], [2], [0, 0, 0, 1, 1, 2], [0], [0]>} : vector<8x8x8xbf16>, vector<8x8x8xbf16>, vector<8x8x8xf32> -> vector<8x8x8xf32>
    %c0_44 = arith.constant 0 : index
    %c0_45 = arith.constant 0 : index
    %c8 = arith.constant 8 : index
    %77 = vector.load %arg17[%c0_44, %c0_45, %c8] : memref<8x8x32xf32, #tpu.memory_space<vmem>>, vector<8x8x8xf32>
    tpu.vector_store %arg17[%c0_44, %c0_45, %c8], %76 {strides = array<i32>} : memref<8x8x32xf32, #tpu.memory_space<vmem>>, vector<8x8x8xf32>,
    %78 = vector.extract_strided_slice %35 {offsets = [0, 0, 16], sizes = [8, 8, 8], strides = [1, 1, 1]} : vector<8x8x32xbf16> to vector<8x8x8xbf16>
    %79 = vector.extract_strided_slice %37 {offsets = [0, 0, 16], sizes = [8, 8, 8], strides = [1, 1, 1]} : vector<8x8x32xbf16> to vector<8x8x8xbf16>
    %cst_46 = arith.constant dense<0.000000e+00> : vector<8x8x8xf32>
    %80 = tpu.matmul %78, %79, %cst_46 {dimension_numbers = #tpu.dot_dimension_numbers<[2], [2], [1], [1], [0, 0, 0, 1, 1, 1], [0], [0]>} : vector<8x8x8xbf16>, vector<8x8x8xbf16>, vector<8x8x8xf32> -> vector<8x8x8xf32>
    %81 = vector.broadcast %4 : vector<8x1x8xf32> to vector<8x8x8xf32>
    %82 = arith.addf %80, %81 : vector<8x8x8xf32>
    %cst_47 = arith.constant dense<0xFF800000> : vector<8x8xf32>
    %83 = vector.multi_reduction <maximumf>, %82, %cst_47 [2] : vector<8x8x8xf32> to vector<8x8xf32>
    %84 = vector.shape_cast %83 : vector<8x8xf32> to vector<8x8x1xf32>
    %85 = vector.broadcast %84 : vector<8x8x1xf32> to vector<8x8x8xf32>
    %86 = arith.subf %82, %85 : vector<8x8x8xf32>
    %87 = math.exp %86 : vector<8x8x8xf32>
    %cst_48 = arith.constant dense<0.000000e+00> : vector<8x8xf32>
    %88 = vector.multi_reduction <add>, %87, %cst_48 [2] : vector<8x8x8xf32> to vector<8x8xf32>
    %89 = vector.shape_cast %88 : vector<8x8xf32> to vector<8x8x1xf32>
    %90 = tpu.reciprocal %89 {approx = true} : vector<8x8x1xf32> -> vector<8x8x1xf32>
    %91 = vector.broadcast %90 : vector<8x8x1xf32> to vector<8x8x8xf32>
    %92 = arith.mulf %87, %91 : vector<8x8x8xf32>
    %93 = arith.truncf %92 : vector<8x8x8xf32> to vector<8x8x8xbf16>
    %94 = vector.extract_strided_slice %39 {offsets = [0, 0, 16], sizes = [8, 8, 8], strides = [1, 1, 1]} : vector<8x8x32xbf16> to vector<8x8x8xbf16>
    %cst_49 = arith.constant dense<0.000000e+00> : vector<8x8x8xf32>
    %95 = tpu.matmul %93, %94, %cst_49 {dimension_numbers = #tpu.dot_dimension_numbers<[2], [1], [1], [2], [0, 0, 0, 1, 1, 2], [0], [0]>} : vector<8x8x8xbf16>, vector<8x8x8xbf16>, vector<8x8x8xf32> -> vector<8x8x8xf32>
    %c0_50 = arith.constant 0 : index
    %c0_51 = arith.constant 0 : index
    %c16 = arith.constant 16 : index
    %96 = vector.load %arg17[%c0_50, %c0_51, %c16] : memref<8x8x32xf32, #tpu.memory_space<vmem>>, vector<8x8x8xf32>
    tpu.vector_store %arg17[%c0_50, %c0_51, %c16], %95 {strides = array<i32>} : memref<8x8x32xf32, #tpu.memory_space<vmem>>, vector<8x8x8xf32>,
    %97 = vector.extract_strided_slice %35 {offsets = [0, 0, 24], sizes = [8, 8, 8], strides = [1, 1, 1]} : vector<8x8x32xbf16> to vector<8x8x8xbf16>
    %98 = vector.extract_strided_slice %37 {offsets = [0, 0, 24], sizes = [8, 8, 8], strides = [1, 1, 1]} : vector<8x8x32xbf16> to vector<8x8x8xbf16>
    %cst_52 = arith.constant dense<0.000000e+00> : vector<8x8x8xf32>
    %99 = tpu.matmul %97, %98, %cst_52 {dimension_numbers = #tpu.dot_dimension_numbers<[2], [2], [1], [1], [0, 0, 0, 1, 1, 1], [0], [0]>} : vector<8x8x8xbf16>, vector<8x8x8xbf16>, vector<8x8x8xf32> -> vector<8x8x8xf32>
    %100 = vector.broadcast %4 : vector<8x1x8xf32> to vector<8x8x8xf32>
    %101 = arith.addf %99, %100 : vector<8x8x8xf32>
    %cst_53 = arith.constant dense<0xFF800000> : vector<8x8xf32>
    %102 = vector.multi_reduction <maximumf>, %101, %cst_53 [2] : vector<8x8x8xf32> to vector<8x8xf32>
    %103 = vector.shape_cast %102 : vector<8x8xf32> to vector<8x8x1xf32>
    %104 = vector.broadcast %103 : vector<8x8x1xf32> to vector<8x8x8xf32>
    %105 = arith.subf %101, %104 : vector<8x8x8xf32>
    %106 = math.exp %105 : vector<8x8x8xf32>
    %cst_54 = arith.constant dense<0.000000e+00> : vector<8x8xf32>
    %107 = vector.multi_reduction <add>, %106, %cst_54 [2] : vector<8x8x8xf32> to vector<8x8xf32>
    %108 = vector.shape_cast %107 : vector<8x8xf32> to vector<8x8x1xf32>
    %109 = tpu.reciprocal %108 {approx = true} : vector<8x8x1xf32> -> vector<8x8x1xf32>
    %110 = vector.broadcast %109 : vector<8x8x1xf32> to vector<8x8x8xf32>
    %111 = arith.mulf %106, %110 : vector<8x8x8xf32>
    %112 = arith.truncf %111 : vector<8x8x8xf32> to vector<8x8x8xbf16>
    %113 = vector.extract_strided_slice %39 {offsets = [0, 0, 24], sizes = [8, 8, 8], strides = [1, 1, 1]} : vector<8x8x32xbf16> to vector<8x8x8xbf16>
    %cst_55 = arith.constant dense<0.000000e+00> : vector<8x8x8xf32>
    %114 = tpu.matmul %112, %113, %cst_55 {dimension_numbers = #tpu.dot_dimension_numbers<[2], [1], [1], [2], [0, 0, 0, 1, 1, 2], [0], [0]>} : vector<8x8x8xbf16>, vector<8x8x8xbf16>, vector<8x8x8xf32> -> vector<8x8x8xf32>
    %c0_56 = arith.constant 0 : index
    %c0_57 = arith.constant 0 : index
    %c24 = arith.constant 24 : index
    %115 = vector.load %arg17[%c0_56, %c0_57, %c24] : memref<8x8x32xf32, #tpu.memory_space<vmem>>, vector<8x8x8xf32>
    tpu.vector_store %arg17[%c0_56, %c0_57, %c24], %114 {strides = array<i32>} : memref<8x8x32xf32, #tpu.memory_space<vmem>>, vector<8x8x8xf32>,
    %c0_58 = arith.constant 0 : index
    %c0_59 = arith.constant 0 : index
    %c0_60 = arith.constant 0 : index
    %116 = vector.load %arg17[%c0_58, %c0_59, %c0_60] : memref<8x8x32xf32, #tpu.memory_space<vmem>>, vector<8x8x32xf32>
    %117 = vector.shape_cast %116 : vector<8x8x32xf32> to vector<64x32xf32>
    %118 = arith.truncf %117 : vector<64x32xf32> to vector<64x32xbf16>
    %c0_61 = arith.constant 0 : index
    %c0_62 = arith.constant 0 : index
    %c0_63 = arith.constant 0 : index
    %119 = vector.load %arg7[%c0_61, %c0_62, %c0_63] : memref<1x32x32xbf16, #tpu.memory_space<vmem>>, vector<1x32x32xbf16>
    %120 = vector.shape_cast %119 : vector<1x32x32xbf16> to vector<32x32xbf16>
    %cst_64 = arith.constant dense<0.000000e+00> : vector<64x32xf32>
    %121 = tpu.matmul %118, %120, %cst_64 {dimension_numbers = #tpu.dot_dimension_numbers<[1], [0], [0], [1], [0, 0, 1, 1], [], []>} : vector<64x32xbf16>, vector<32x32xbf16>, vector<64x32xf32> -> vector<64x32xf32>
    %c0_65 = arith.constant 0 : index
    %c0_66 = arith.constant 0 : index
    %c0_67 = arith.constant 0 : index
    %122 = vector.load %arg8[%c0_65, %c0_66, %c0_67] : memref<1x1x32xf32, #tpu.memory_space<vmem>>, vector<1x1x32xf32>
    %123 = vector.shape_cast %122 : vector<1x1x32xf32> to vector<1x32xf32>
    %124 = vector.broadcast %123 : vector<1x32xf32> to vector<64x32xf32>
    %125 = arith.addf %121, %124 : vector<64x32xf32>
    %c0_68 = arith.constant 0 : index
    %c0_69 = arith.constant 0 : index
    %c0_70 = arith.constant 0 : index
    %126 = vector.load %arg9[%c0_68, %c0_69, %c0_70] : memref<1x2x32xf32, #tpu.memory_space<vmem>>, vector<1x2x32xf32>
    %127 = vector.shape_cast %126 : vector<1x2x32xf32> to vector<2x32xf32>
    %128 = arith.addf %9, %125 : vector<64x32xf32>
    %129 = vector.extract_strided_slice %127 {offsets = [0, 0], sizes = [1, 32], strides = [1, 1]} : vector<2x32xf32> to vector<1x32xf32>
    %130 = vector.extract_strided_slice %127 {offsets = [1, 0], sizes = [1, 32], strides = [1, 1]} : vector<2x32xf32> to vector<1x32xf32>
    %cst_71 = arith.constant dense<0.000000e+00> : vector<64xf32>
    %131 = vector.multi_reduction <add>, %128, %cst_71 [1] : vector<64x32xf32> to vector<64xf32>
    %132 = vector.shape_cast %131 : vector<64xf32> to vector<64x1xf32>
    %cst_72 = arith.constant 3.200000e+01 : f32
    %133 = vector.broadcast %cst_72 : f32 to vector<64x1xf32>
    %134 = arith.divf %132, %133 : vector<64x1xf32>
    %135 = vector.broadcast %134 : vector<64x1xf32> to vector<64x32xf32>
    %136 = arith.subf %128, %135 : vector<64x32xf32>
    %137 = arith.mulf %136, %136 : vector<64x32xf32>
    %cst_73 = arith.constant dense<0.000000e+00> : vector<64xf32>
    %138 = vector.multi_reduction <add>, %137, %cst_73 [1] : vector<64x32xf32> to vector<64xf32>
    %139 = vector.shape_cast %138 : vector<64xf32> to vector<64x1xf32>
    %cst_74 = arith.constant 3.200000e+01 : f32
    %140 = vector.broadcast %cst_74 : f32 to vector<64x1xf32>
    %141 = arith.divf %139, %140 : vector<64x1xf32>
    %142 = vector.broadcast %134 : vector<64x1xf32> to vector<64x32xf32>
    %143 = arith.subf %128, %142 : vector<64x32xf32>
    %cst_75 = arith.constant 9.99999996E-13 : f32
    %144 = vector.broadcast %cst_75 : f32 to vector<64x1xf32>
    %145 = arith.addf %141, %144 : vector<64x1xf32>
    %146 = math.rsqrt %145 : vector<64x1xf32>
    %147 = vector.broadcast %146 : vector<64x1xf32> to vector<64x32xf32>
    %148 = arith.mulf %143, %147 : vector<64x32xf32>
    %149 = vector.broadcast %129 : vector<1x32xf32> to vector<64x32xf32>
    %150 = arith.mulf %148, %149 : vector<64x32xf32>
    %151 = vector.broadcast %130 : vector<1x32xf32> to vector<64x32xf32>
    %152 = arith.addf %150, %151 : vector<64x32xf32>
    %153 = arith.truncf %152 : vector<64x32xf32> to vector<64x32xbf16>
    %c0_76 = arith.constant 0 : index
    %c0_77 = arith.constant 0 : index
    %c0_78 = arith.constant 0 : index
    %154 = vector.load %arg10[%c0_76, %c0_77, %c0_78] : memref<1x32x64xbf16, #tpu.memory_space<vmem>>, vector<1x32x64xbf16>
    %155 = vector.shape_cast %154 : vector<1x32x64xbf16> to vector<32x64xbf16>
    %cst_79 = arith.constant dense<0.000000e+00> : vector<64x64xf32>
    %156 = tpu.matmul %153, %155, %cst_79 {dimension_numbers = #tpu.dot_dimension_numbers<[1], [0], [0], [1], [0, 0, 1, 1], [], []>} : vector<64x32xbf16>, vector<32x64xbf16>, vector<64x64xf32> -> vector<64x64xf32>
    %c0_80 = arith.constant 0 : index
    %c0_81 = arith.constant 0 : index
    %c0_82 = arith.constant 0 : index
    %157 = vector.load %arg11[%c0_80, %c0_81, %c0_82] : memref<1x1x64xf32, #tpu.memory_space<vmem>>, vector<1x1x64xf32>
    %158 = vector.shape_cast %157 : vector<1x1x64xf32> to vector<1x64xf32>
    %159 = vector.broadcast %158 : vector<1x64xf32> to vector<64x64xf32>
    %160 = arith.addf %156, %159 : vector<64x64xf32>
    %161 = arith.mulf %160, %160 : vector<64x64xf32>
    %162 = arith.mulf %160, %161 : vector<64x64xf32>
    %cst_83 = arith.constant 4.471500e-02 : f32
    %163 = vector.broadcast %cst_83 : f32 to vector<64x64xf32>
    %164 = arith.mulf %163, %162 : vector<64x64xf32>
    %165 = arith.addf %160, %164 : vector<64x64xf32>
    %cst_84 = arith.constant 0.797884583 : f32
    %166 = vector.broadcast %cst_84 : f32 to vector<64x64xf32>
    %167 = arith.mulf %166, %165 : vector<64x64xf32>
    %168 = math.tanh %167 : vector<64x64xf32>
    %cst_85 = arith.constant 1.000000e+00 : f32
    %169 = vector.broadcast %cst_85 : f32 to vector<64x64xf32>
    %170 = arith.addf %169, %168 : vector<64x64xf32>
    %cst_86 = arith.constant 5.000000e-01 : f32
    %171 = vector.broadcast %cst_86 : f32 to vector<64x64xf32>
    %172 = arith.mulf %171, %170 : vector<64x64xf32>
    %173 = arith.mulf %160, %172 : vector<64x64xf32>
    %174 = arith.truncf %173 : vector<64x64xf32> to vector<64x64xbf16>
    %c0_87 = arith.constant 0 : index
    %c0_88 = arith.constant 0 : index
    %c0_89 = arith.constant 0 : index
    %175 = vector.load %arg12[%c0_87, %c0_88, %c0_89] : memref<1x64x32xbf16, #tpu.memory_space<vmem>>, vector<1x64x32xbf16>
    %176 = vector.shape_cast %175 : vector<1x64x32xbf16> to vector<64x32xbf16>
    %cst_90 = arith.constant dense<0.000000e+00> : vector<64x32xf32>
    %177 = tpu.matmul %174, %176, %cst_90 {dimension_numbers = #tpu.dot_dimension_numbers<[1], [0], [0], [1], [0, 0, 1, 1], [], []>} : vector<64x64xbf16>, vector<64x32xbf16>, vector<64x32xf32> -> vector<64x32xf32>
    %c0_91 = arith.constant 0 : index
    %c0_92 = arith.constant 0 : index
    %c0_93 = arith.constant 0 : index
    %178 = vector.load %arg13[%c0_91, %c0_92, %c0_93] : memref<1x1x32xf32, #tpu.memory_space<vmem>>, vector<1x1x32xf32>
    %179 = vector.shape_cast %178 : vector<1x1x32xf32> to vector<1x32xf32>
    %180 = vector.broadcast %179 : vector<1x32xf32> to vector<64x32xf32>
    %181 = arith.addf %177, %180 : vector<64x32xf32>
    %c0_94 = arith.constant 0 : index
    %c0_95 = arith.constant 0 : index
    %c0_96 = arith.constant 0 : index
    %182 = vector.load %arg14[%c0_94, %c0_95, %c0_96] : memref<1x2x32xf32, #tpu.memory_space<vmem>>, vector<1x2x32xf32>
    %183 = vector.shape_cast %182 : vector<1x2x32xf32> to vector<2x32xf32>
    %184 = arith.addf %152, %181 : vector<64x32xf32>
    %185 = vector.extract_strided_slice %183 {offsets = [0, 0], sizes = [1, 32], strides = [1, 1]} : vector<2x32xf32> to vector<1x32xf32>
    %186 = vector.extract_strided_slice %183 {offsets = [1, 0], sizes = [1, 32], strides = [1, 1]} : vector<2x32xf32> to vector<1x32xf32>
    %cst_97 = arith.constant dense<0.000000e+00> : vector<64xf32>
    %187 = vector.multi_reduction <add>, %184, %cst_97 [1] : vector<64x32xf32> to vector<64xf32>
    %188 = vector.shape_cast %187 : vector<64xf32> to vector<64x1xf32>
    %cst_98 = arith.constant 3.200000e+01 : f32
    %189 = vector.broadcast %cst_98 : f32 to vector<64x1xf32>
    %190 = arith.divf %188, %189 : vector<64x1xf32>
    %191 = vector.broadcast %190 : vector<64x1xf32> to vector<64x32xf32>
    %192 = arith.subf %184, %191 : vector<64x32xf32>
    %193 = arith.mulf %192, %192 : vector<64x32xf32>
    %cst_99 = arith.constant dense<0.000000e+00> : vector<64xf32>
    %194 = vector.multi_reduction <add>, %193, %cst_99 [1] : vector<64x32xf32> to vector<64xf32>
    %195 = vector.shape_cast %194 : vector<64xf32> to vector<64x1xf32>
    %cst_100 = arith.constant 3.200000e+01 : f32
    %196 = vector.broadcast %cst_100 : f32 to vector<64x1xf32>
    %197 = arith.divf %195, %196 : vector<64x1xf32>
    %198 = vector.broadcast %190 : vector<64x1xf32> to vector<64x32xf32>
    %199 = arith.subf %184, %198 : vector<64x32xf32>
    %cst_101 = arith.constant 9.99999996E-13 : f32
    %200 = vector.broadcast %cst_101 : f32 to vector<64x1xf32>
    %201 = arith.addf %197, %200 : vector<64x1xf32>
    %202 = math.rsqrt %201 : vector<64x1xf32>
    %203 = vector.broadcast %202 : vector<64x1xf32> to vector<64x32xf32>
    %204 = arith.mulf %199, %203 : vector<64x32xf32>
    %205 = vector.broadcast %185 : vector<1x32xf32> to vector<64x32xf32>
    %206 = arith.mulf %204, %205 : vector<64x32xf32>
    %207 = vector.broadcast %186 : vector<1x32xf32> to vector<64x32xf32>
    %208 = arith.addf %206, %207 : vector<64x32xf32>
    %209 = vector.shape_cast %208 : vector<64x32xf32> to vector<8x8x32xf32>
    %c0_102 = arith.constant 0 : index
    %c0_103 = arith.constant 0 : index
    %c0_104 = arith.constant 0 : index
    %210 = vector.load %arg16[%c0_102, %c0_103, %c0_104] : memref<8x8x32xf32, #tpu.memory_space<vmem>>, vector<8x8x32xf32>
    tpu.vector_store %arg16[%c0_102, %c0_103, %c0_104], %209 {strides = array<i32>} : memref<8x8x32xf32, #tpu.memory_space<vmem>>, vector<8x8x32xf32>,
    %c1_i32 = arith.constant 1 : i32
    %211 = arith.cmpi eq, %arg1, %c1_i32 : i32
    %212 = arith.extui %211 : i1 to i32
    %c0_i32_105 = arith.constant 0 : i32
    %213 = arith.cmpi ne, %212, %c0_i32_105 : i32
    scf.if %213 {
      %214 = vector.shape_cast %208 : vector<64x32xf32> to vector<8x8x32xf32>
      %215 = vector.shape_cast %0 : vector<8x1x8xf32> to vector<8x8xf32>
      %216 = vector.shape_cast %215 : vector<8x8xf32> to vector<8x8x1xf32>
      %217 = vector.broadcast %216 : vector<8x8x1xf32> to vector<8x8x32xf32>
      %218 = arith.mulf %214, %217 : vector<8x8x32xf32>
      %cst_106 = arith.constant dense<0.000000e+00> : vector<8x32xf32>
      %219 = vector.multi_reduction <add>, %218, %cst_106 [1] : vector<8x8x32xf32> to vector<8x32xf32>
      %cst_107 = arith.constant dense<0.000000e+00> : vector<8xf32>
      %220 = vector.multi_reduction <add>, %215, %cst_107 [1] : vector<8x8xf32> to vector<8xf32>
      %221 = vector.shape_cast %220 : vector<8xf32> to vector<8x1xf32>
      %cst_108 = arith.constant 9.99999971E-10 : f32
      %222 = vector.broadcast %cst_108 : f32 to vector<8x1xf32>
      %223 = arith.maximumf %221, %222 : vector<8x1xf32>
      %224 = vector.broadcast %223 : vector<8x1xf32> to vector<8x32xf32>
      %225 = arith.divf %219, %224 : vector<8x32xf32>
      %c0_109 = arith.constant 0 : index
      %c0_110 = arith.constant 0 : index
      %226 = vector.load %arg15[%c0_109, %c0_110] : memref<8x32xf32, #tpu.memory_space<vmem>>, vector<8x32xf32>
      tpu.vector_store %arg15[%c0_109, %c0_110], %225 {strides = array<i32>} : memref<8x32xf32, #tpu.memory_space<vmem>>, vector<8x32xf32>,
    } else {
    }
    return
  }
  func.func @transform_0(%arg0: i32, %arg1: i32) -> (i32, i32, i32) {
    %c0_i32 = arith.constant 0 : i32
    %c0_i32_0 = arith.constant 0 : i32
    %c0_i32_1 = arith.constant 0 : i32
    return %arg0, %c0_i32, %c0_i32_0 : i32, i32, i32
  }
  func.func @transform_1(%arg0: i32, %arg1: i32) -> (i32, i32, i32) {
    %c0_i32 = arith.constant 0 : i32
    %c0_i32_0 = arith.constant 0 : i32
    %c0_i32_1 = arith.constant 0 : i32
    return %arg0, %c0_i32, %c0_i32_0 : i32, i32, i32
  }
  func.func @transform_2(%arg0: i32, %arg1: i32) -> (i32, i32) {
    %c0_i32 = arith.constant 0 : i32
    %c0_i32_0 = arith.constant 0 : i32
    %c0_i32_1 = arith.constant 0 : i32
    return %c0_i32, %c0_i32_0 : i32, i32
  }
  func.func @transform_3(%arg0: i32, %arg1: i32) -> (i32, i32, i32, i32) {
    %c0_i32 = arith.constant 0 : i32
    %c0_i32_0 = arith.constant 0 : i32
    %c0_i32_1 = arith.constant 0 : i32
    %c0_i32_2 = arith.constant 0 : i32
    return %arg1, %c0_i32, %c0_i32_0, %c0_i32_1 : i32, i32, i32, i32
  }
  func.func @transform_4(%arg0: i32, %arg1: i32) -> (i32, i32, i32, i32) {
    %c0_i32 = arith.constant 0 : i32
    %c0_i32_0 = arith.constant 0 : i32
    %c0_i32_1 = arith.constant 0 : i32
    %c0_i32_2 = arith.constant 0 : i32
    return %arg1, %c0_i32, %c0_i32_0, %c0_i32_1 : i32, i32, i32, i32
  }
  func.func @transform_5(%arg0: i32, %arg1: i32) -> (i32, i32, i32) {
    %c0_i32 = arith.constant 0 : i32
    %c0_i32_0 = arith.constant 0 : i32
    %c0_i32_1 = arith.constant 0 : i32
    return %arg1, %c0_i32, %c0_i32_0 : i32, i32, i32
  }
  func.func @transform_6(%arg0: i32, %arg1: i32) -> (i32, i32, i32) {
    %c0_i32 = arith.constant 0 : i32
    %c0_i32_0 = arith.constant 0 : i32
    %c0_i32_1 = arith.constant 0 : i32
    return %arg1, %c0_i32, %c0_i32_0 : i32, i32, i32
  }
  func.func @transform_7(%arg0: i32, %arg1: i32) -> (i32, i32, i32) {
    %c0_i32 = arith.constant 0 : i32
    %c0_i32_0 = arith.constant 0 : i32
    %c0_i32_1 = arith.constant 0 : i32
    return %arg1, %c0_i32, %c0_i32_0 : i32, i32, i32
  }
  func.func @transform_8(%arg0: i32, %arg1: i32) -> (i32, i32, i32) {
    %c0_i32 = arith.constant 0 : i32
    %c0_i32_0 = arith.constant 0 : i32
    %c0_i32_1 = arith.constant 0 : i32
    return %arg1, %c0_i32, %c0_i32_0 : i32, i32, i32
  }
  func.func @transform_9(%arg0: i32, %arg1: i32) -> (i32, i32, i32) {
    %c0_i32 = arith.constant 0 : i32
    %c0_i32_0 = arith.constant 0 : i32
    %c0_i32_1 = arith.constant 0 : i32
    return %arg1, %c0_i32, %c0_i32_0 : i32, i32, i32
  }
  func.func @transform_10(%arg0: i32, %arg1: i32) -> (i32, i32, i32) {
    %c0_i32 = arith.constant 0 : i32
    %c0_i32_0 = arith.constant 0 : i32
    %c0_i32_1 = arith.constant 0 : i32
    return %arg1, %c0_i32, %c0_i32_0 : i32, i32, i32
  }
  func.func @transform_11(%arg0: i32, %arg1: i32) -> (i32, i32, i32) {
    %c0_i32 = arith.constant 0 : i32
    %c0_i32_0 = arith.constant 0 : i32
    %c0_i32_1 = arith.constant 0 : i32
    return %arg1, %c0_i32, %c0_i32_0 : i32, i32, i32
  }
  func.func @transform_12(%arg0: i32, %arg1: i32) -> (i32, i32, i32) {
    %c0_i32 = arith.constant 0 : i32
    %c0_i32_0 = arith.constant 0 : i32
    %c0_i32_1 = arith.constant 0 : i32
    return %arg1, %c0_i32, %c0_i32_0 : i32, i32, i32
  }
  func.func @transform_13(%arg0: i32, %arg1: i32) -> (i32, i32) {
    %c0_i32 = arith.constant 0 : i32
    %c0_i32_0 = arith.constant 0 : i32
    return %arg0, %c0_i32 : i32, i32
  }
}

</mosaic_0001>

<llo_original>
// kernel: tpu_custom_call.1
$region0: #{tpu_custom_call.1}
  #allocation0 [shape = 'u32[]', space=smem, size = 0x4, offset = 0x4, fixed_abs, tag = 'smem constant byte address 0x4 - core index']
  #allocation1 [shape = 'u32[144,128]{1,0:T(1,128)}', space=vmem, size = 0x12000, scoped, tag = 'internal scratch']
  #allocation2 [shape = 'f32[8,8,32]{2,1,0:T(8,128)}', space=vmem, size = 0x8000, scoped, tag = 'scratch operand']
  #allocation3 [shape = 'f32[8,8,32]{2,1,0:T(8,128)}', space=vmem, size = 0x8000, scoped, tag = 'scratch operand']
  %s0 = inlined_call_operand.hbm [shape: bf16[16,8,32], index: 0, kind: input, shape index: {}]
  %s1 = inlined_call_operand.vmem [shape: f32[16,1,8], index: 1, kind: input, shape index: {}]
  %s2 = inlined_call_operand.vmem [shape: f32[2,32], index: 2, kind: input, shape index: {}]
  %s3 = inlined_call_operand.vmem [shape: bf16[2,3,32,32], index: 3, kind: input, shape index: {}]
  %s4 = inlined_call_operand.vmem [shape: f32[2,3,1,32], index: 4, kind: input, shape index: {}]
  %s5 = inlined_call_operand.hbm [shape: bf16[2,32,32], index: 5, kind: input, shape index: {}]
  %s6 = inlined_call_operand.vmem [shape: f32[2,1,32], index: 6, kind: input, shape index: {}]
  %s7 = inlined_call_operand.vmem [shape: f32[2,2,32], index: 7, kind: input, shape index: {}]
  %s8 = inlined_call_operand.hbm [shape: bf16[2,32,64], index: 8, kind: input, shape index: {}]
  %s9 = inlined_call_operand.vmem [shape: f32[2,1,64], index: 9, kind: input, shape index: {}]
  %s10 = inlined_call_operand.vmem [shape: bf16[2,64,32], index: 10, kind: input, shape index: {}]
  %s11 = inlined_call_operand.vmem [shape: f32[2,1,32], index: 11, kind: input, shape index: {}]
  %s12 = inlined_call_operand.vmem [shape: f32[2,2,32], index: 12, kind: input, shape index: {}]
  %s13 = inlined_call_operand.hbm [shape: f32[16,32], index: 13, kind: output, shape index: {}]
  %s14 = sld [smem:[#allocation0]]
  $region105: #{tpu_custom_call.1} parent=0
    _
  %s16 = ssub.s32 1, %s14
  %s17 = scalar_select 0, %s16, %s14
  $region1: #{tpu_custom_call.1} parent=0
    #allocation4 [shape = 'u8[32768]{0}', space=vmem, size = 0x8000, scoped, tag = 'input window, operand 0']
    #allocation5 [shape = 's32[2]{0}', space=sflag, size = 0x8, scoped, tag = 'scoped memory for tpu_custom_call.1']
    #allocation6 [shape = 's32[2]{0}', space=sflag, size = 0x8, scoped, tag = 'scoped memory for tpu_custom_call.1']
    #allocation7 [shape = 'u8[16384]{0}', space=vmem, size = 0x4000, scoped, tag = 'input window, operand 5']
    #allocation8 [shape = 's32[2]{0}', space=sflag, size = 0x8, scoped, tag = 'scoped memory for tpu_custom_call.1']
    #allocation9 [shape = 'u8[16384]{0}', space=vmem, size = 0x4000, scoped, tag = 'input window, operand 8']
    #allocation10 [shape = 'u8[8192]{0}', space=vmem, size = 0x2000, scoped, tag = 'output window, operand 0']
    %18 = vsyncpa [#allocation5], 0
    %s19 = scalar_lea.sflag [#allocation5], 1
    %20 = vsyncpa %s19, 0
    %21 = vsyncpa [#allocation8], 0
    %s22 = scalar_lea.sflag [#allocation8], 1
    %23 = vsyncpa %s22, 0
    %24 = vsyncpa [#allocation6], 0
    %s25 = scalar_lea.sflag [#allocation6], 1
    %26 = vsyncpa %s25, 0
    loop: start=0, step=1, limit=6
    $region2: #{tpu_custom_call.1} parent=1 // loop_pre_header
      _
    $region3: #{tpu_custom_call.1} parent=1 // loop_header
      %s28 = sphi 0, %s32
      %p29 = scmp.ge.s32.totalorder %s28, 6
      %s35 = sphi 0, %s47
      %s36 = sphi 0, %s43
      %s37 = sphi 0, %s35
      %s38 = sphi 0, %s36
      %s39 = sphi 0, %s37
      %s40 = sphi 0, %s38
      %s50 = sphi 0, %s52
      %s53 = sphi 0, %s50
      %s54 = sphi 0, %s53
      %s70 = sphi 0, %s54
      %s76 = sphi 0, %s78
      %s79 = sphi 0, %s76
      %s80 = sphi 0, %s79
      %s96 = sphi 0, %s80
      %s100 = sphi 0, %s100
      %s102 = sphi 0, %s100
      %s103 = sphi 0, %s102
      %s117 = sphi 0, %s103
      %s123 = sphi 0, %s125
      %s126 = sphi 0, %s123
      %s127 = sphi 0, %s126
      %s143 = sphi 0, %s127
      %s149 = sphi 0, %s151
      %s152 = sphi 0, %s149
      %s153 = sphi 0, %s152
      %s169 = sphi 0, %s153
      %s175 = sphi 0, %s177
      %s178 = sphi 0, %s175
      %s179 = sphi 0, %s178
      %s195 = sphi 0, %s179
      %s201 = sphi 0, %s203
      %s204 = sphi 0, %s201
      %s205 = sphi 0, %s204
      %s221 = sphi 0, %s205
      %s227 = sphi 0, %s229
      %s230 = sphi 0, %s227
      %s231 = sphi 0, %s230
      %s247 = sphi 0, %s231
      %s253 = sphi 0, %s255
      %s256 = sphi 0, %s253
      %s257 = sphi 0, %s256
      %s273 = sphi 0, %s257
      %s279 = sphi 0, %s281
      %s282 = sphi 0, %s279
      %s283 = sphi 0, %s282
      %s299 = sphi 0, %s283
      %s305 = sphi 0, %s307
      %s308 = sphi 0, %s305
      %s309 = sphi 0, %s308
      %s325 = sphi 0, %s309
      %s331 = sphi 0, %s333
      %s334 = sphi 0, %s331
      %s335 = sphi 0, %s334
      %s351 = sphi 0, %s335
      %s357 = sphi 0, %s359
      %s360 = sphi 0, %s357
      %s361 = sphi 0, %s360
      %s377 = sphi 0, %s361
      %s383 = sphi 0, %s385
      %s386 = sphi 0, %s383
      %s387 = sphi 0, %s386
      %s403 = sphi 0, %s387
    $region4: #{tpu_custom_call.1} parent=1 // loop_header_branch
      %31 = sbr.rel (%p29) target = $region8
    $region5: #{tpu_custom_call.1} parent=1 // loop_body
      %s33 = ssub.s32 %s28, 1
      %s34 = ssub.s32 %s28, 2
      %s41 = sadd.s32 1, %s36
      %p42 = scmp.ge.s32.totalorder %s41, 2
      %s43 = scalar_select %p42, 0, %s41
      %s44 = sadd.s32 1, %s35
      %s45 = scalar_select %p42, %s44, %s35
      %p46 = scmp.ge.s32.totalorder %s45, 2
      %s47 = scalar_select %p46, 0, %s45
      %s48 = ssub.s32 %s35, %s47
      %p49 = scmp.eq.s32.totalorder %s48, 0
      %s51 = sadd.s32 %s50, 1
      %s52 = scalar_select %p49, %s50, %s51
      %p55 = pneg %p49
      %p56 = scmp.eq.s32.totalorder %s28, 3
      %p57 = por %p55, %p56
      %p58 = scmp.ne.s32.totalorder %s50, %s53
      %p59 = scmp.eq.s32.totalorder %s28, 0
      %p60 = por %p58, %p59
      %p61 = scmp.ne.s32.totalorder %s50, %s53
      %p62 = scmp.eq.s32.totalorder %s33, 3
      %p63 = por %p61, %p62
      %p64 = scmp.ne.s32.totalorder %s53, %s54
      %p65 = scmp.eq.s32.totalorder %s33, 0
      %p66 = por %p64, %p65
      %p67 = scmp.ne.s32.totalorder %s53, %s54
      %p68 = scmp.eq.s32.totalorder %s34, 3
      %p69 = por %p67, %p68
      %p71 = scmp.ne.s32.totalorder %s54, %s70
      %p72 = scmp.eq.s32.totalorder %s34, 0
      %p73 = por %p71, %p72
      %s74 = ssub.s32 %s35, %s47
      %p75 = scmp.eq.s32.totalorder %s74, 0
      %s77 = sadd.s32 %s76, 1
      %s78 = scalar_select %p75, %s76, %s77
      %p81 = pneg %p75
      %p82 = scmp.eq.s32.totalorder %s28, 3
      %p83 = por %p81, %p82
      %p84 = scmp.ne.s32.totalorder %s76, %s79
      %p85 = scmp.eq.s32.totalorder %s28, 0
      %p86 = por %p84, %p85
      %p87 = scmp.ne.s32.totalorder %s76, %s79
      %p88 = scmp.eq.s32.totalorder %s33, 3
      %p89 = por %p87, %p88
      %p90 = scmp.ne.s32.totalorder %s79, %s80
      %p91 = scmp.eq.s32.totalorder %s33, 0
      %p92 = por %p90, %p91
      %p93 = scmp.ne.s32.totalorder %s79, %s80
      %p94 = scmp.eq.s32.totalorder %s34, 3
      %p95 = por %p93, %p94
      %p97 = scmp.ne.s32.totalorder %s80, %s96
      %p98 = scmp.eq.s32.totalorder %s34, 0
      %p99 = por %p97, %p98
      %s101 = sadd.s32 %s100, 1
      %p104 = scmp.eq.s32.totalorder %s28, 3
      %p105 = scmp.ne.s32.totalorder %s100, %s102
      %p106 = scmp.eq.s32.totalorder %s28, 0
      %p107 = por %p105, %p106
      %p108 = scmp.ne.s32.totalorder %s100, %s102
      %p109 = scmp.eq.s32.totalorder %s33, 3
      %p110 = por %p108, %p109
      %p111 = scmp.ne.s32.totalorder %s102, %s103
      %p112 = scmp.eq.s32.totalorder %s33, 0
      %p113 = por %p111, %p112
      %p114 = scmp.ne.s32.totalorder %s102, %s103
      %p115 = scmp.eq.s32.totalorder %s34, 3
      %p116 = por %p114, %p115
      %p118 = scmp.ne.s32.totalorder %s103, %s117
      %p119 = scmp.eq.s32.totalorder %s34, 0
      %p120 = por %p118, %p119
      %s121 = ssub.s32 %s36, %s43
      %p122 = scmp.eq.s32.totalorder %s121, 0
      %s124 = sadd.s32 %s123, 1
      %s125 = scalar_select %p122, %s123, %s124
      %p128 = pneg %p122
      %p129 = scmp.eq.s32.totalorder %s28, 3
      %p130 = por %p128, %p129
      %p131 = scmp.ne.s32.totalorder %s123, %s126
      %p132 = scmp.eq.s32.totalorder %s28, 0
      %p133 = por %p131, %p132
      %p134 = scmp.ne.s32.totalorder %s123, %s126
      %p135 = scmp.eq.s32.totalorder %s33, 3
      %p136 = por %p134, %p135
      %p137 = scmp.ne.s32.totalorder %s126, %s127
      %p138 = scmp.eq.s32.totalorder %s33, 0
      %p139 = por %p137, %p138
      %p140 = scmp.ne.s32.totalorder %s126, %s127
      %p141 = scmp.eq.s32.totalorder %s34, 3
      %p142 = por %p140, %p141
      %p144 = scmp.ne.s32.totalorder %s127, %s143
      %p145 = scmp.eq.s32.totalorder %s34, 0
      %p146 = por %p144, %p145
      %s147 = ssub.s32 %s36, %s43
      %p148 = scmp.eq.s32.totalorder %s147, 0
      %s150 = sadd.s32 %s149, 1
      %s151 = scalar_select %p148, %s149, %s150
      %p154 = pneg %p148
      %p155 = scmp.eq.s32.totalorder %s28, 3
      %p156 = por %p154, %p155
      %p157 = scmp.ne.s32.totalorder %s149, %s152
      %p158 = scmp.eq.s32.totalorder %s28, 0
      %p159 = por %p157, %p158
      %p160 = scmp.ne.s32.totalorder %s149, %s152
      %p161 = scmp.eq.s32.totalorder %s33, 3
      %p162 = por %p160, %p161
      %p163 = scmp.ne.s32.totalorder %s152, %s153
      %p164 = scmp.eq.s32.totalorder %s33, 0
      %p165 = por %p163, %p164
      %p166 = scmp.ne.s32.totalorder %s152, %s153
      %p167 = scmp.eq.s32.totalorder %s34, 3
      %p168 = por %p166, %p167
      %p170 = scmp.ne.s32.totalorder %s153, %s169
      %p171 = scmp.eq.s32.totalorder %s34, 0
      %p172 = por %p170, %p171
      %s173 = ssub.s32 %s36, %s43
      %p174 = scmp.eq.s32.totalorder %s173, 0
      %s176 = sadd.s32 %s175, 1
      %s177 = scalar_select %p174, %s175, %s176
      %p180 = pneg %p174
      %p181 = scmp.eq.s32.totalorder %s28, 3
      %p182 = por %p180, %p181
      %p183 = scmp.ne.s32.totalorder %s175, %s178
      %p184 = scmp.eq.s32.totalorder %s28, 0
      %p185 = por %p183, %p184
      %p186 = scmp.ne.s32.totalorder %s175, %s178
      %p187 = scmp.eq.s32.totalorder %s33, 3
      %p188 = por %p186, %p187
      %p189 = scmp.ne.s32.totalorder %s178, %s179
      %p190 = scmp.eq.s32.totalorder %s33, 0
      %p191 = por %p189, %p190
      %p192 = scmp.ne.s32.totalorder %s178, %s179
      %p193 = scmp.eq.s32.totalorder %s34, 3
      %p194 = por %p192, %p193
      %p196 = scmp.ne.s32.totalorder %s179, %s195
      %p197 = scmp.eq.s32.totalorder %s34, 0
      %p198 = por %p196, %p197
      %s199 = ssub.s32 %s36, %s43
      %p200 = scmp.eq.s32.totalorder %s199, 0
      %s202 = sadd.s32 %s201, 1
      %s203 = scalar_select %p200, %s201, %s202
      %p206 = pneg %p200
      %p207 = scmp.eq.s32.totalorder %s28, 3
      %p208 = por %p206, %p207
      %p209 = scmp.ne.s32.totalorder %s201, %s204
      %p210 = scmp.eq.s32.totalorder %s28, 0
      %p211 = por %p209, %p210
      %p212 = scmp.ne.s32.totalorder %s201, %s204
      %p213 = scmp.eq.s32.totalorder %s33, 3
      %p214 = por %p212, %p213
      %p215 = scmp.ne.s32.totalorder %s204, %s205
      %p216 = scmp.eq.s32.totalorder %s33, 0
      %p217 = por %p215, %p216
      %p218 = scmp.ne.s32.totalorder %s204, %s205
      %p219 = scmp.eq.s32.totalorder %s34, 3
      %p220 = por %p218, %p219
      %p222 = scmp.ne.s32.totalorder %s205, %s221
      %p223 = scmp.eq.s32.totalorder %s34, 0
      %p224 = por %p222, %p223
      %s225 = ssub.s32 %s36, %s43
      %p226 = scmp.eq.s32.totalorder %s225, 0
      %s228 = sadd.s32 %s227, 1
      %s229 = scalar_select %p226, %s227, %s228
      %p232 = pneg %p226
      %p233 = scmp.eq.s32.totalorder %s28, 3
      %p234 = por %p232, %p233
      %p235 = scmp.ne.s32.totalorder %s227, %s230
      %p236 = scmp.eq.s32.totalorder %s28, 0
      %p237 = por %p235, %p236
      %p238 = scmp.ne.s32.totalorder %s227, %s230
      %p239 = scmp.eq.s32.totalorder %s33, 3
      %p240 = por %p238, %p239
      %p241 = scmp.ne.s32.totalorder %s230, %s231
      %p242 = scmp.eq.s32.totalorder %s33, 0
      %p243 = por %p241, %p242
      %p244 = scmp.ne.s32.totalorder %s230, %s231
      %p245 = scmp.eq.s32.totalorder %s34, 3
      %p246 = por %p244, %p245
      %p248 = scmp.ne.s32.totalorder %s231, %s247
      %p249 = scmp.eq.s32.totalorder %s34, 0
      %p250 = por %p248, %p249
      %s251 = ssub.s32 %s36, %s43
      %p252 = scmp.eq.s32.totalorder %s251, 0
      %s254 = sadd.s32 %s253, 1
      %s255 = scalar_select %p252, %s253, %s254
      %p258 = pneg %p252
      %p259 = scmp.eq.s32.totalorder %s28, 3
      %p260 = por %p258, %p259
      %p261 = scmp.ne.s32.totalorder %s253, %s256
      %p262 = scmp.eq.s32.totalorder %s28, 0
      %p263 = por %p261, %p262
      %p264 = scmp.ne.s32.totalorder %s253, %s256
      %p265 = scmp.eq.s32.totalorder %s33, 3
      %p266 = por %p264, %p265
      %p267 = scmp.ne.s32.totalorder %s256, %s257
      %p268 = scmp.eq.s32.totalorder %s33, 0
      %p269 = por %p267, %p268
      %p270 = scmp.ne.s32.totalorder %s256, %s257
      %p271 = scmp.eq.s32.totalorder %s34, 3
      %p272 = por %p270, %p271
      %p274 = scmp.ne.s32.totalorder %s257, %s273
      %p275 = scmp.eq.s32.totalorder %s34, 0
      %p276 = por %p274, %p275
      %s277 = ssub.s32 %s36, %s43
      %p278 = scmp.eq.s32.totalorder %s277, 0
      %s280 = sadd.s32 %s279, 1
      %s281 = scalar_select %p278, %s279, %s280
      %p284 = pneg %p278
      %p285 = scmp.eq.s32.totalorder %s28, 3
      %p286 = por %p284, %p285
      %p287 = scmp.ne.s32.totalorder %s279, %s282
      %p288 = scmp.eq.s32.totalorder %s28, 0
      %p289 = por %p287, %p288
      %p290 = scmp.ne.s32.totalorder %s279, %s282
      %p291 = scmp.eq.s32.totalorder %s33, 3
      %p292 = por %p290, %p291
      %p293 = scmp.ne.s32.totalorder %s282, %s283
      %p294 = scmp.eq.s32.totalorder %s33, 0
      %p295 = por %p293, %p294
      %p296 = scmp.ne.s32.totalorder %s282, %s283
      %p297 = scmp.eq.s32.totalorder %s34, 3
      %p298 = por %p296, %p297
      %p300 = scmp.ne.s32.totalorder %s283, %s299
      %p301 = scmp.eq.s32.totalorder %s34, 0
      %p302 = por %p300, %p301
      %s303 = ssub.s32 %s36, %s43
      %p304 = scmp.eq.s32.totalorder %s303, 0
      %s306 = sadd.s32 %s305, 1
      %s307 = scalar_select %p304, %s305, %s306
      %p310 = pneg %p304
      %p311 = scmp.eq.s32.totalorder %s28, 3
      %p312 = por %p310, %p311
      %p313 = scmp.ne.s32.totalorder %s305, %s308
      %p314 = scmp.eq.s32.totalorder %s28, 0
      %p315 = por %p313, %p314
      %p316 = scmp.ne.s32.totalorder %s305, %s308
      %p317 = scmp.eq.s32.totalorder %s33, 3
      %p318 = por %p316, %p317
      %p319 = scmp.ne.s32.totalorder %s308, %s309
      %p320 = scmp.eq.s32.totalorder %s33, 0
      %p321 = por %p319, %p320
      %p322 = scmp.ne.s32.totalorder %s308, %s309
      %p323 = scmp.eq.s32.totalorder %s34, 3
      %p324 = por %p322, %p323
      %p326 = scmp.ne.s32.totalorder %s309, %s325
      %p327 = scmp.eq.s32.totalorder %s34, 0
      %p328 = por %p326, %p327
      %s329 = ssub.s32 %s36, %s43
      %p330 = scmp.eq.s32.totalorder %s329, 0
      %s332 = sadd.s32 %s331, 1
      %s333 = scalar_select %p330, %s331, %s332
      %p336 = pneg %p330
      %p337 = scmp.eq.s32.totalorder %s28, 3
      %p338 = por %p336, %p337
      %p339 = scmp.ne.s32.totalorder %s331, %s334
      %p340 = scmp.eq.s32.totalorder %s28, 0
      %p341 = por %p339, %p340
      %p342 = scmp.ne.s32.totalorder %s331, %s334
      %p343 = scmp.eq.s32.totalorder %s33, 3
      %p344 = por %p342, %p343
      %p345 = scmp.ne.s32.totalorder %s334, %s335
      %p346 = scmp.eq.s32.totalorder %s33, 0
      %p347 = por %p345, %p346
      %p348 = scmp.ne.s32.totalorder %s334, %s335
      %p349 = scmp.eq.s32.totalorder %s34, 3
      %p350 = por %p348, %p349
      %p352 = scmp.ne.s32.totalorder %s335, %s351
      %p353 = scmp.eq.s32.totalorder %s34, 0
      %p354 = por %p352, %p353
      %s355 = ssub.s32 %s36, %s43
      %p356 = scmp.eq.s32.totalorder %s355, 0
      %s358 = sadd.s32 %s357, 1
      %s359 = scalar_select %p356, %s357, %s358
      %p362 = pneg %p356
      %p363 = scmp.eq.s32.totalorder %s28, 3
      %p364 = por %p362, %p363
      %p365 = scmp.ne.s32.totalorder %s357, %s360
      %p366 = scmp.eq.s32.totalorder %s28, 0
      %p367 = por %p365, %p366
      %p368 = scmp.ne.s32.totalorder %s357, %s360
      %p369 = scmp.eq.s32.totalorder %s33, 3
      %p370 = por %p368, %p369
      %p371 = scmp.ne.s32.totalorder %s360, %s361
      %p372 = scmp.eq.s32.totalorder %s33, 0
      %p373 = por %p371, %p372
      %p374 = scmp.ne.s32.totalorder %s360, %s361
      %p375 = scmp.eq.s32.totalorder %s34, 3
      %p376 = por %p374, %p375
      %p378 = scmp.ne.s32.totalorder %s361, %s377
      %p379 = scmp.eq.s32.totalorder %s34, 0
      %p380 = por %p378, %p379
      %s381 = ssub.s32 %s35, %s47
      %p382 = scmp.eq.s32.totalorder %s381, 0
      %s384 = sadd.s32 %s383, 1
      %s385 = scalar_select %p382, %s383, %s384
      %p388 = pneg %p382
      %p389 = scmp.eq.s32.totalorder %s28, 3
      %p390 = por %p388, %p389
      %p391 = scmp.ne.s32.totalorder %s383, %s386
      %p392 = scmp.eq.s32.totalorder %s28, 0
      %p393 = por %p391, %p392
      %p394 = scmp.ne.s32.totalorder %s383, %s386
      %p395 = scmp.eq.s32.totalorder %s33, 3
      %p396 = por %p394, %p395
      %p397 = scmp.ne.s32.totalorder %s386, %s387
      %p398 = scmp.eq.s32.totalorder %s33, 0
      %p399 = por %p397, %p398
      %p400 = scmp.ne.s32.totalorder %s386, %s387
      %p401 = scmp.eq.s32.totalorder %s34, 3
      %p402 = por %p400, %p401
      %p404 = scmp.ne.s32.totalorder %s387, %s403
      %p405 = scmp.eq.s32.totalorder %s34, 0
      %p406 = por %p404, %p405
      %p407 = scmp.le.s32.totalorder 1, %s28
      %p408 = scmp.lt.s32.totalorder %s28, 5
      %p409 = pnand %p407, %p408
      %p410 = pneg %p409
      // Predicated region
      $region9: #{tpu_custom_call.1} parent=5 // pred_check
        _
      $region10: #{tpu_custom_call.1} parent=5 // pred_check_branch
        %412 = sbr.rel (%p409) target = $region12
      $region11: #{tpu_custom_call.1} parent=5 // pred_region
        %s413 = ssub.s32 %s28, 1
        // Predicated region
        $region13: #{tpu_custom_call.1} parent=11 // pred_check
          %p414 = pneg %p113
        $region14: #{tpu_custom_call.1} parent=11 // pred_check_branch
          %416 = sbr.rel (%p414) target = $region16
        $region15: #{tpu_custom_call.1} parent=11 // pred_region
          _
        $region16: #{tpu_custom_call.1} parent=11 // pred_fallthru
          _
      $region12: #{tpu_custom_call.1} parent=5 // pred_fallthru
        _
      %p417 = scmp.lt.s32.totalorder %s28, 4
      // Predicated region
      $region17: #{tpu_custom_call.1} parent=5 // pred_check
        %p418 = pneg %p417
      $region18: #{tpu_custom_call.1} parent=5 // pred_check_branch
        %420 = sbr.rel (%p418) target = $region20
      $region19: #{tpu_custom_call.1} parent=5 // pred_region
        // Predicated region
        $region21: #{tpu_custom_call.1} parent=19 // pred_check
          %p421 = pneg %p60
        $region22: #{tpu_custom_call.1} parent=19 // pred_check_branch
          %423 = sbr.rel (%p421) target = $region24
        $region23: #{tpu_custom_call.1} parent=19 // pred_region
          %s424 = sand.u32 %s50, 1
          %s425 = scalar_lea.sflag [#allocation5], %s424
          %s426 = sand.u32 %s50, 1
          %s427 = smul.addr %s426, 32
          %s428 = scalar_lea.vmem [#allocation4], %s427
          %s429 = smul.u32 8, %s35
          %s431 = ssub.s32 512, 512
          %432 = vsyncadd %s425, %s431
          %s433 = smul.addr %s429, 64
          %s434 = scalar_lea.hbm %s0, %s433
          %s435 = sshll.u32 %s428, 4
          %s436 = int_to_ptr.vmem [resolvable:$true] %s435
          %441 = dma.hbm_to_vmem [thread:$0]  %s434, 512, %s436, %s425, 64, 64, 4
        $region24: #{tpu_custom_call.1} parent=19 // pred_fallthru
          _
        // Predicated region
        $region25: #{tpu_custom_call.1} parent=19 // pred_check
          %p442 = pneg %p86
        $region26: #{tpu_custom_call.1} parent=19 // pred_check_branch
          %444 = sbr.rel (%p442) target = $region28
        $region27: #{tpu_custom_call.1} parent=19 // pred_region
          %s445 = smul.u32 8, %s35
          %p446 = scmp.lt.s32.totalorder %s445, 15
          %s447 = scalar_select %p446, %s445, 15
          %s448 = scalar_lea.vmem %s1, %s447
          %s449 = smul.u32 8, %s35
        $region28: #{tpu_custom_call.1} parent=19 // pred_fallthru
          _
        // Predicated region
        $region29: #{tpu_custom_call.1} parent=19 // pred_check
          %p450 = pneg %p133
        $region30: #{tpu_custom_call.1} parent=19 // pred_check_branch
          %452 = sbr.rel (%p450) target = $region32
        $region31: #{tpu_custom_call.1} parent=19 // pred_region
          %p453 = scmp.lt.s32.totalorder %s36, 1
          %s454 = scalar_select %p453, %s36, 1
          %s455 = smul.addr %s454, 12
          %s456 = smul.addr %s455, 4
          %s457 = scalar_lea.vmem %s3, %s456
        $region32: #{tpu_custom_call.1} parent=19 // pred_fallthru
          _
        // Predicated region
        $region33: #{tpu_custom_call.1} parent=19 // pred_check
          %p458 = pneg %p159
        $region34: #{tpu_custom_call.1} parent=19 // pred_check_branch
          %460 = sbr.rel (%p458) target = $region36
        $region35: #{tpu_custom_call.1} parent=19 // pred_region
          %p461 = scmp.lt.s32.totalorder %s36, 1
          %s462 = scalar_select %p461, %s36, 1
          %s463 = smul.addr %s462, 3
          %s464 = scalar_lea.vmem %s4, %s463
        $region36: #{tpu_custom_call.1} parent=19 // pred_fallthru
          _
        // Predicated region
        $region37: #{tpu_custom_call.1} parent=19 // pred_check
          %p465 = pneg %p185
        $region38: #{tpu_custom_call.1} parent=19 // pred_check_branch
          %467 = sbr.rel (%p465) target = $region40
        $region39: #{tpu_custom_call.1} parent=19 // pred_region
          %s468 = sand.u32 %s28, 1
          %s469 = scalar_lea.sflag [#allocation8], %s468
          %s470 = sand.u32 %s175, 1
          %s471 = smul.addr %s470, 16
          %s472 = scalar_lea.vmem [#allocation7], %s471
          %s474 = ssub.s32 256, 256
          %475 = vsyncadd %s469, %s474
          %s476 = smul.addr %s36, 4
          %s477 = smul.addr %s476, 64
          %s478 = scalar_lea.hbm %s5, %s477
          %s479 = sshll.u32 %s472, 4
          %s480 = int_to_ptr.vmem [resolvable:$true] %s479
          %485 = dma.hbm_to_vmem [thread:$0]  %s478, 256, %s480, %s469, 64, 64, 4
        $region40: #{tpu_custom_call.1} parent=19 // pred_fallthru
          _
        // Predicated region
        $region41: #{tpu_custom_call.1} parent=19 // pred_check
          %p486 = pneg %p211
        $region42: #{tpu_custom_call.1} parent=19 // pred_check_branch
          %488 = sbr.rel (%p486) target = $region44
        $region43: #{tpu_custom_call.1} parent=19 // pred_region
          %p489 = scmp.lt.s32.totalorder %s36, 1
          %s490 = scalar_select %p489, %s36, 1
          %s491 = scalar_lea.vmem %s6, %s490
        $region44: #{tpu_custom_call.1} parent=19 // pred_fallthru
          _
        // Predicated region
        $region45: #{tpu_custom_call.1} parent=19 // pred_check
          %p492 = pneg %p237
        $region46: #{tpu_custom_call.1} parent=19 // pred_check_branch
          %494 = sbr.rel (%p492) target = $region48
        $region47: #{tpu_custom_call.1} parent=19 // pred_region
          %p495 = scmp.lt.s32.totalorder %s36, 1
          %s496 = scalar_select %p495, %s36, 1
          %s497 = smul.addr %s496, 2
          %s498 = scalar_lea.vmem %s7, %s497
        $region48: #{tpu_custom_call.1} parent=19 // pred_fallthru
          _
        // Predicated region
        $region49: #{tpu_custom_call.1} parent=19 // pred_check
          %p499 = pneg %p263
        $region50: #{tpu_custom_call.1} parent=19 // pred_check_branch
          %501 = sbr.rel (%p499) target = $region52
        $region51: #{tpu_custom_call.1} parent=19 // pred_region
          %s502 = sand.u32 %s28, 1
          %s503 = scalar_lea.sflag [#allocation8], %s502
          %s504 = sand.u32 %s253, 1
          %s505 = smul.addr %s504, 16
          %s506 = scalar_lea.vmem [#allocation9], %s505
          %s508 = ssub.s32 256, 256
          %509 = vsyncadd %s503, %s508
          %s510 = smul.addr %s36, 4
          %s511 = smul.addr %s510, 64
          %s512 = scalar_lea.hbm %s8, %s511
          %s513 = sshll.u32 %s506, 4
          %s514 = int_to_ptr.vmem [resolvable:$true] %s513
          %519 = dma.hbm_to_vmem [thread:$0]  %s512, 256, %s514, %s503, 64, 64, 4
        $region52: #{tpu_custom_call.1} parent=19 // pred_fallthru
          _
        // Predicated region
        $region53: #{tpu_custom_call.1} parent=19 // pred_check
          %p520 = pneg %p289
        $region54: #{tpu_custom_call.1} parent=19 // pred_check_branch
          %522 = sbr.rel (%p520) target = $region56
        $region55: #{tpu_custom_call.1} parent=19 // pred_region
          %p523 = scmp.lt.s32.totalorder %s36, 1
          %s524 = scalar_select %p523, %s36, 1
          %s525 = scalar_lea.vmem %s9, %s524
        $region56: #{tpu_custom_call.1} parent=19 // pred_fallthru
          _
        // Predicated region
        $region57: #{tpu_custom_call.1} parent=19 // pred_check
          %p526 = pneg %p315
        $region58: #{tpu_custom_call.1} parent=19 // pred_check_branch
          %528 = sbr.rel (%p526) target = $region60
        $region59: #{tpu_custom_call.1} parent=19 // pred_region
          %p529 = scmp.lt.s32.totalorder %s36, 1
          %s530 = scalar_select %p529, %s36, 1
          %s531 = smul.addr %s530, 8
          %s532 = smul.addr %s531, 4
          %s533 = scalar_lea.vmem %s10, %s532
        $region60: #{tpu_custom_call.1} parent=19 // pred_fallthru
          _
        // Predicated region
        $region61: #{tpu_custom_call.1} parent=19 // pred_check
          %p534 = pneg %p341
        $region62: #{tpu_custom_call.1} parent=19 // pred_check_branch
          %536 = sbr.rel (%p534) target = $region64
        $region63: #{tpu_custom_call.1} parent=19 // pred_region
          %p537 = scmp.lt.s32.totalorder %s36, 1
          %s538 = scalar_select %p537, %s36, 1
          %s539 = scalar_lea.vmem %s11, %s538
        $region64: #{tpu_custom_call.1} parent=19 // pred_fallthru
          _
        // Predicated region
        $region65: #{tpu_custom_call.1} parent=19 // pred_check
          %p540 = pneg %p367
        $region66: #{tpu_custom_call.1} parent=19 // pred_check_branch
          %542 = sbr.rel (%p540) target = $region68
        $region67: #{tpu_custom_call.1} parent=19 // pred_region
          %p543 = scmp.lt.s32.totalorder %s36, 1
          %s544 = scalar_select %p543, %s36, 1
          %s545 = smul.addr %s544, 2
          %s546 = scalar_lea.vmem %s12, %s545
        $region68: #{tpu_custom_call.1} parent=19 // pred_fallthru
          _
      $region20: #{tpu_custom_call.1} parent=5 // pred_fallthru
        _
      %p547 = scmp.le.s32.totalorder 1, %s28
      %p548 = scmp.lt.s32.totalorder %s28, 5
      %p549 = pnand %p547, %p548
      %p550 = pneg %p549
      // Predicated region
      $region69: #{tpu_custom_call.1} parent=5 // pred_check
        _
      $region70: #{tpu_custom_call.1} parent=5 // pred_check_branch
        %552 = sbr.rel (%p549) target = $region72
      $region71: #{tpu_custom_call.1} parent=5 // pred_region
        %s553 = ssub.s32 %s28, 1
        %s554 = sand.u32 %s53, 1
        %s555 = scalar_lea.sflag [#allocation5], %s554
        %s556 = sand.u32 %s53, 1
        %s557 = smul.addr %s556, 32
        %s558 = scalar_lea.vmem [#allocation4], %s557
        // Predicated region
        $region73: #{tpu_custom_call.1} parent=71 // pred_check
          %p559 = pneg %p66
        $region74: #{tpu_custom_call.1} parent=71 // pred_check_branch
          %561 = sbr.rel (%p559) target = $region76
        $region75: #{tpu_custom_call.1} parent=71 // pred_region
          %562 = dma.done %s555, 512
        $region76: #{tpu_custom_call.1} parent=71 // pred_fallthru
          _
        %s563 = sand.u32 %s33, 1
        %s564 = scalar_lea.sflag [#allocation8], %s563
        %s565 = sand.u32 %s178, 1
        %s566 = smul.addr %s565, 16
        %s567 = scalar_lea.vmem [#allocation7], %s566
        // Predicated region
        $region77: #{tpu_custom_call.1} parent=71 // pred_check
          %p568 = pneg %p191
        $region78: #{tpu_custom_call.1} parent=71 // pred_check_branch
          %570 = sbr.rel (%p568) target = $region80
        $region79: #{tpu_custom_call.1} parent=71 // pred_region
          %571 = dma.done %s564, 256
        $region80: #{tpu_custom_call.1} parent=71 // pred_fallthru
          _
        %s572 = sand.u32 %s33, 1
        %s573 = scalar_lea.sflag [#allocation8], %s572
        %s574 = sand.u32 %s256, 1
        %s575 = smul.addr %s574, 16
        %s576 = scalar_lea.vmem [#allocation9], %s575
        // Predicated region
        $region81: #{tpu_custom_call.1} parent=71 // pred_check
          %p577 = pneg %p269
        $region82: #{tpu_custom_call.1} parent=71 // pred_check_branch
          %579 = sbr.rel (%p577) target = $region84
        $region83: #{tpu_custom_call.1} parent=71 // pred_region
          %580 = dma.done %s573, 256
        $region84: #{tpu_custom_call.1} parent=71 // pred_fallthru
          _
        %s581 = sand.u32 %s53, 1
        %s582 = scalar_lea.sflag [#allocation5], %s581
        %s583 = sand.u32 %s53, 1
        %s584 = smul.addr %s583, 32
        %s585 = scalar_lea.vmem [#allocation4], %s584
        %p586 = pneg %p66
        %p587 = pneg %p63
        %s588 = smul.u32 8, %s37
        %p589 = scmp.lt.s32.totalorder %s588, 15
        %s590 = scalar_select %p589, %s588, 15
        %s591 = scalar_lea.vmem %s1, %s590
        %p592 = pneg %p92
        %p593 = pneg %p89
        %p594 = pneg %p113
        %p595 = pneg %p110
        %p596 = scmp.lt.s32.totalorder %s38, 1
        %s597 = scalar_select %p596, %s38, 1
        %s598 = smul.addr %s597, 12
        %s599 = smul.addr %s598, 4
        %s600 = scalar_lea.vmem %s3, %s599
        %p601 = pneg %p139
        %p602 = pneg %p136
        %p603 = scmp.lt.s32.totalorder %s38, 1
        %s604 = scalar_select %p603, %s38, 1
        %s605 = smul.addr %s604, 3
        %s606 = scalar_lea.vmem %s4, %s605
        %p607 = pneg %p165
        %p608 = pneg %p162
        %s609 = sand.u32 %s33, 1
        %s610 = scalar_lea.sflag [#allocation8], %s609
        %s611 = sand.u32 %s178, 1
        %s612 = smul.addr %s611, 16
        %s613 = scalar_lea.vmem [#allocation7], %s612
        %p614 = pneg %p191
        %p615 = pneg %p188
        %p616 = scmp.lt.s32.totalorder %s38, 1
        %s617 = scalar_select %p616, %s38, 1
        %s618 = scalar_lea.vmem %s6, %s617
        %p619 = pneg %p217
        %p620 = pneg %p214
        %p621 = scmp.lt.s32.totalorder %s38, 1
        %s622 = scalar_select %p621, %s38, 1
        %s623 = smul.addr %s622, 2
        %s624 = scalar_lea.vmem %s7, %s623
        %p625 = pneg %p243
        %p626 = pneg %p240
        %s627 = sand.u32 %s33, 1
        %s628 = scalar_lea.sflag [#allocation8], %s627
        %s629 = sand.u32 %s256, 1
        %s630 = smul.addr %s629, 16
        %s631 = scalar_lea.vmem [#allocation9], %s630
        %p632 = pneg %p269
        %p633 = pneg %p266
        %p634 = scmp.lt.s32.totalorder %s38, 1
        %s635 = scalar_select %p634, %s38, 1
        %s636 = scalar_lea.vmem %s9, %s635
        %p637 = pneg %p295
        %p638 = pneg %p292
        %p639 = scmp.lt.s32.totalorder %s38, 1
        %s640 = scalar_select %p639, %s38, 1
        %s641 = smul.addr %s640, 8
        %s642 = smul.addr %s641, 4
        %s643 = scalar_lea.vmem %s10, %s642
        %p644 = pneg %p321
        %p645 = pneg %p318
        %p646 = scmp.lt.s32.totalorder %s38, 1
        %s647 = scalar_select %p646, %s38, 1
        %s648 = scalar_lea.vmem %s11, %s647
        %p649 = pneg %p347
        %p650 = pneg %p344
        %p651 = scmp.lt.s32.totalorder %s38, 1
        %s652 = scalar_select %p651, %s38, 1
        %s653 = smul.addr %s652, 2
        %s654 = scalar_lea.vmem %s12, %s653
        %p655 = pneg %p373
        %p656 = pneg %p370
        %p657 = pneg %p399
        %p658 = pneg %p396
        %s659 = sand.u32 %s386, 1
        %s660 = scalar_lea.sflag [#allocation6], %s659
        %s661 = sand.u32 %s386, 1
        %s662 = smul.addr %s661, 8
        %s663 = scalar_lea.vmem [#allocation10], %s662
        %s664 = smul.u32 8, %s37
        %s665 = smul.u32 8, %s37
        %p666 = scmp.lt.s32.totalorder %s665, 15
        %s667 = scalar_select %p666, %s665, 15
        %s668 = scalar_lea.vmem %s1, %s667
        %s669 = smul.u32 8, %s37
        %p670 = scmp.lt.s32.totalorder %s38, 1
        %s671 = scalar_select %p670, %s38, 1
        %s672 = smul.addr %s671, 12
        %s673 = smul.addr %s672, 4
        %s674 = scalar_lea.vmem %s3, %s673
        %p675 = scmp.lt.s32.totalorder %s38, 1
        %s676 = scalar_select %p675, %s38, 1
        %s677 = smul.addr %s676, 3
        %s678 = scalar_lea.vmem %s4, %s677
        %p679 = scmp.lt.s32.totalorder %s38, 1
        %s680 = scalar_select %p679, %s38, 1
        %s681 = scalar_lea.vmem %s6, %s680
        %p682 = scmp.lt.s32.totalorder %s38, 1
        %s683 = scalar_select %p682, %s38, 1
        %s684 = smul.addr %s683, 2
        %s685 = scalar_lea.vmem %s7, %s684
        %p686 = scmp.lt.s32.totalorder %s38, 1
        %s687 = scalar_select %p686, %s38, 1
        %s688 = scalar_lea.vmem %s9, %s687
        %p689 = scmp.lt.s32.totalorder %s38, 1
        %s690 = scalar_select %p689, %s38, 1
        %s691 = smul.addr %s690, 8
        %s692 = smul.addr %s691, 4
        %s693 = scalar_lea.vmem %s10, %s692
        %p694 = scmp.lt.s32.totalorder %s38, 1
        %s695 = scalar_select %p694, %s38, 1
        %s696 = scalar_lea.vmem %s11, %s695
        %p697 = scmp.lt.s32.totalorder %s38, 1
        %s698 = scalar_select %p697, %s38, 1
        %s699 = smul.addr %s698, 2
        %s700 = scalar_lea.vmem %s12, %s699
        %v702 = vld [vmem:[%s668] sm:$0x1]
        %v703 = vld [vmem:[%s668 + $0x1] sm:$0x1]
        %v704 = vld [vmem:[%s668 + $0x2] sm:$0x1]
        %v705 = vld [vmem:[%s668 + $0x3] sm:$0x1]
        %v706 = vld [vmem:[%s668 + $0x4] sm:$0x1]
        %v707 = vld [vmem:[%s668 + $0x5] sm:$0x1]
        %v708 = vld [vmem:[%s668 + $0x6] sm:$0x1]
        %v709 = vld [vmem:[%s668 + $0x7] sm:$0x1]
        %v710 = vsub.f32 1.0, %v702
        %v711 = vsub.f32 1.0, %v703
        %v712 = vsub.f32 1.0, %v704
        %v713 = vsub.f32 1.0, %v705
        %v714 = vsub.f32 1.0, %v706
        %v715 = vsub.f32 1.0, %v707
        %v716 = vsub.f32 1.0, %v708
        %v717 = vsub.f32 1.0, %v709
        %v718 = vmul.f32 %v710, -1e+09
        %v719 = vmul.f32 %v711, -1e+09
        %v720 = vmul.f32 %v712, -1e+09
        %v721 = vmul.f32 %v713, -1e+09
        %v722 = vmul.f32 %v714, -1e+09
        %v723 = vmul.f32 %v715, -1e+09
        %v724 = vmul.f32 %v716, -1e+09
        %v725 = vmul.f32 %v717, -1e+09
        %p726 = scmp.eq.s32.totalorder %s38, 0
        // Predicated region
        $region85: #{tpu_custom_call.1} parent=71 // pred_check
          %p727 = pneg %p726
        $region86: #{tpu_custom_call.1} parent=71 // pred_check_branch
          %729 = sbr.rel (%p727) target = $region88
        $region87: #{tpu_custom_call.1} parent=71 // pred_region
          %v730 = vld [vmem:[%s558] sm:$0xf]
          %v731 = vld [vmem:[%s558 + $0x4] sm:$0xf]
          %v732 = vld [vmem:[%s558 + $0x8] sm:$0xf]
          %v733 = vld [vmem:[%s558 + $0xc] sm:$0xf]
          %v734 = vld [vmem:[%s558 + $0x10] sm:$0xf]
          %v735 = vld [vmem:[%s558 + $0x14] sm:$0xf]
          %v736 = vld [vmem:[%s558 + $0x18] sm:$0xf]
          %v737 = vld [vmem:[%s558 + $0x1c] sm:$0xf]
          %v738 = vunpack.c.l.bf16 %v730
          %v739 = vunpack.c.l.bf16 %v731
          %v740 = vunpack.c.l.bf16 %v732
          %v741 = vunpack.c.l.bf16 %v733
          %v742 = vunpack.c.l.bf16 %v734
          %v743 = vunpack.c.l.bf16 %v735
          %v744 = vunpack.c.l.bf16 %v736
          %v745 = vunpack.c.l.bf16 %v737
          %v746 = vld [vmem:[%s2] sm:$0x3]
          %vm747 = vcmask 261120
          %v748 = vsel %vm747, %v738, 0.0
          %749 = vadd.xlane.f32.xlu0 %v748
          %v750 = vpop.xlane.xlu0 %749
          %v751 = vsel %vm747, %v739, 0.0
          %752 = vadd.xlane.f32.xlu0 %v751
          %v753 = vpop.xlane.xlu0 %752
          %v754 = vsel %vm747, %v740, 0.0
          %755 = vadd.xlane.f32.xlu0 %v754
          %v756 = vpop.xlane.xlu0 %755
          %v757 = vsel %vm747, %v741, 0.0
          %758 = vadd.xlane.f32.xlu0 %v757
          %v759 = vpop.xlane.xlu0 %758
          %v760 = vsel %vm747, %v742, 0.0
          %761 = vadd.xlane.f32.xlu0 %v760
          %v762 = vpop.xlane.xlu0 %761
          %v763 = vsel %vm747, %v743, 0.0
          %764 = vadd.xlane.f32.xlu0 %v763
          %v765 = vpop.xlane.xlu0 %764
          %v766 = vsel %vm747, %v744, 0.0
          %767 = vadd.xlane.f32.xlu0 %v766
          %v768 = vpop.xlane.xlu0 %767
          %v769 = vsel %vm747, %v745, 0.0
          %770 = vadd.xlane.f32.xlu0 %v769
          %v771 = vpop.xlane.xlu0 %770
          %v772 = vrcp.pop 32.0
          %v773 = vmul.f32 %v750, %v772
          %v774 = vmul.f32 %v753, %v772
          %v775 = vmul.f32 %v756, %v772
          %v776 = vmul.f32 %v759, %v772
          %v777 = vmul.f32 %v762, %v772
          %v778 = vmul.f32 %v765, %v772
          %v779 = vmul.f32 %v768, %v772
          %v780 = vmul.f32 %v771, %v772
          %v781 = vsub.f32 %v738, %v773
          %v782 = vsub.f32 %v739, %v774
          %v783 = vsub.f32 %v740, %v775
          %v784 = vsub.f32 %v741, %v776
          %v785 = vsub.f32 %v742, %v777
          %v786 = vsub.f32 %v743, %v778
          %v787 = vsub.f32 %v744, %v779
          %v788 = vsub.f32 %v745, %v780
          %v789 = vmul.f32 %v781, %v781
          %v790 = vmul.f32 %v782, %v782
          %v791 = vmul.f32 %v783, %v783
          %v792 = vmul.f32 %v784, %v784
          %v793 = vmul.f32 %v785, %v785
          %v794 = vmul.f32 %v786, %v786
          %v795 = vmul.f32 %v787, %v787
          %v796 = vmul.f32 %v788, %v788
          %v797 = vsel %vm747, %v789, 0.0
          %798 = vadd.xlane.f32.xlu0 %v797
          %v799 = vpop.xlane.xlu0 %798
          %v800 = vsel %vm747, %v790, 0.0
          %801 = vadd.xlane.f32.xlu0 %v800
          %v802 = vpop.xlane.xlu0 %801
          %v803 = vsel %vm747, %v791, 0.0
          %804 = vadd.xlane.f32.xlu0 %v803
          %v805 = vpop.xlane.xlu0 %804
          %v806 = vsel %vm747, %v792, 0.0
          %807 = vadd.xlane.f32.xlu0 %v806
          %v808 = vpop.xlane.xlu0 %807
          %v809 = vsel %vm747, %v793, 0.0
          %810 = vadd.xlane.f32.xlu0 %v809
          %v811 = vpop.xlane.xlu0 %810
          %v812 = vsel %vm747, %v794, 0.0
          %813 = vadd.xlane.f32.xlu0 %v812
          %v814 = vpop.xlane.xlu0 %813
          %v815 = vsel %vm747, %v795, 0.0
          %816 = vadd.xlane.f32.xlu0 %v815
          %v817 = vpop.xlane.xlu0 %816
          %v818 = vsel %vm747, %v796, 0.0
          %819 = vadd.xlane.f32.xlu0 %v818
          %v820 = vpop.xlane.xlu0 %819
          %v821 = vmul.f32 %v799, %v772
          %v822 = vmul.f32 %v802, %v772
          %v823 = vmul.f32 %v805, %v772
          %v824 = vmul.f32 %v808, %v772
          %v825 = vmul.f32 %v811, %v772
          %v826 = vmul.f32 %v814, %v772
          %v827 = vmul.f32 %v817, %v772
          %v828 = vmul.f32 %v820, %v772
          %v829 = vadd.f32 %v821, 1e-12
          %v830 = vadd.f32 %v822, 1e-12
          %v831 = vadd.f32 %v823, 1e-12
          %v832 = vadd.f32 %v824, 1e-12
          %v833 = vadd.f32 %v825, 1e-12
          %v834 = vadd.f32 %v826, 1e-12
          %v835 = vadd.f32 %v827, 1e-12
          %v836 = vadd.f32 %v828, 1e-12
          %v837 = vrsqrt.pop %v829
          %v838 = vrsqrt.pop %v830
          %v839 = vrsqrt.pop %v831
          %v840 = vrsqrt.pop %v832
          %v841 = vrsqrt.pop %v833
          %v842 = vrsqrt.pop %v834
          %v843 = vrsqrt.pop %v835
          %v844 = vrsqrt.pop %v836
          %v845 = vmul.f32 %v781, %v837
          %v846 = vmul.f32 %v782, %v838
          %v847 = vmul.f32 %v783, %v839
          %v848 = vmul.f32 %v784, %v840
          %v849 = vmul.f32 %v785, %v841
          %v850 = vmul.f32 %v786, %v842
          %v851 = vmul.f32 %v787, %v843
          %v852 = vmul.f32 %v788, %v844
          %v853 = vlaneseq
          %v854 = vshrl.u32 %v853, 7
          %v855 = vsub.s32 0, %v854
          %v856 = vrot.slane %v746, %v855
          %v857 = vmul.f32 %v845, %v856
          %v858 = vmul.f32 %v846, %v856
          %v859 = vmul.f32 %v847, %v856
          %v860 = vmul.f32 %v848, %v856
          %v861 = vmul.f32 %v849, %v856
          %v862 = vmul.f32 %v850, %v856
          %v863 = vmul.f32 %v851, %v856
          %v864 = vmul.f32 %v852, %v856
          %v865 = vlaneseq
          %v866 = vshrl.u32 %v865, 7
          %v867 = vsub.s32 1, %v866
          %v868 = vrot.slane %v746, %v867
          %v869 = vadd.f32 %v857, %v868
          %v870 = vadd.f32 %v858, %v868
          %v871 = vadd.f32 %v859, %v868
          %v872 = vadd.f32 %v860, %v868
          %v873 = vadd.f32 %v861, %v868
          %v874 = vadd.f32 %v862, %v868
          %v875 = vadd.f32 %v863, %v868
          %v876 = vadd.f32 %v864, %v868
          %877 = vst.msk [vmem:[#allocation2] sm:$0xff] %vm747, %v869
          %878 = vst.msk [vmem:[#allocation2 + $0x8] sm:$0xff] %vm747, %v870
          %879 = vst.msk [vmem:[#allocation2 + $0x10] sm:$0xff] %vm747, %v871
          %880 = vst.msk [vmem:[#allocation2 + $0x18] sm:$0xff] %vm747, %v872
          %881 = vst.msk [vmem:[#allocation2 + $0x20] sm:$0xff] %vm747, %v873
          %882 = vst.msk [vmem:[#allocation2 + $0x28] sm:$0xff] %vm747, %v874
          %883 = vst.msk [vmem:[#allocation2 + $0x30] sm:$0xff] %vm747, %v875
          %884 = vst.msk [vmem:[#allocation2 + $0x38] sm:$0xff] %vm747, %v876
        $region88: #{tpu_custom_call.1} parent=71 // pred_fallthru
          _
        %v885 = vld [vmem:[#allocation2] sm:$0xff]
        %v886 = vld [vmem:[#allocation2 + $0x8] sm:$0xff]
        %v887 = vld [vmem:[#allocation2 + $0x10] sm:$0xff]
        %v888 = vld [vmem:[#allocation2 + $0x18] sm:$0xff]
        %v889 = vld [vmem:[#allocation2 + $0x20] sm:$0xff]
        %v890 = vld [vmem:[#allocation2 + $0x28] sm:$0xff]
        %v891 = vld [vmem:[#allocation2 + $0x30] sm:$0xff]
        %v892 = vld [vmem:[#allocation2 + $0x38] sm:$0xff]
        %v893 = vpack.c.bf16 %v886, %v885
        %v894 = vpack.c.bf16 %v888, %v887
        %v895 = vpack.c.bf16 %v890, %v889
        %v896 = vpack.c.bf16 %v892, %v891
        %v897 = vld [vmem:[%s674] sm:$0xf]
        %v898 = vld [vmem:[%s674 + $0x4] sm:$0xf]
        %v899 = vld [vmem:[%s674 + $0x8] sm:$0xf]
        %v900 = vld [vmem:[%s674 + $0xc] sm:$0xf]
        %v901 = vld [vmem:[%s678] sm:$0x1]
        %v903 = vlaneseq
        %v904 = vshrl.u32 %v903, 7
        %v905 = vsub.s32 0, %v904
        %v906 = vrot.slane %v901, %v905
        %v912 = vunpack.c.l.b16 %v897
        %v913 = vunpack.c.l.b16 %v898
        %v914 = vunpack.c.l.b16 %v899
        %v915 = vunpack.c.l.b16 %v900
        %v916 = vpack.c.b16 %v913, %v912
        %v917 = vpack.c.b16 %v915, %v914
        %vm920 = vcmask 261120
        %v922 = vsel %vm920, %v893, 0
        %v925 = vsel %vm920, %v894, 0
        %v928 = vsel %vm920, %v895, 0
        %v931 = vsel %vm920, %v896, 0
        %933 = vmatprep.subr.bf16.mxu0 0
        %934 = vmatpush1.bf16.msra.mxu0 %v916
        %935 = vmatprep.subr.bf16.mxu0 0
        %936 = vmatpush1.bf16.msra.mxu0 %v917
        %937 = vmatprep.subr.bf16.mxu0 0
        %938 = vmatpush1.bf16.msra.mxu0 0
        %939 = vmatprep.subr.bf16.mxu0 0
        %940 = vmatpush1.bf16.msra.mxu0 0
        %941 = vmatprep.subr.bf16.mxu0 0
        %942 = vmatpush1.bf16.msra.mxu0 0
        %943 = vmatprep.subr.bf16.mxu0 0
        %944 = vmatpush1.bf16.msra.mxu0 0
        %945 = vmatprep.subr.bf16.mxu0 0
        %946 = vmatpush1.bf16.msra.mxu0 0
        %947 = vmatprep.subr.bf16.mxu0 0
        %948 = vmatpush1.bf16.msra.mxu0 0
        %949 = vmatprep.subr.bf16.mxu0 0
        %950 = vmatpush1.bf16.msra.mxu0 0
        %951 = vmatprep.subr.bf16.mxu0 0
        %952 = vmatpush1.bf16.msra.mxu0 0
        %953 = vmatprep.subr.bf16.mxu0 0
        %954 = vmatpush1.bf16.msra.mxu0 0
        %955 = vmatprep.subr.bf16.mxu0 0
        %956 = vmatpush1.bf16.msra.mxu0 0
        %957 = vmatprep.subr.bf16.mxu0 0
        %958 = vmatpush1.bf16.msra.mxu0 0
        %959 = vmatprep.subr.bf16.mxu0 0
        %960 = vmatpush1.bf16.msra.mxu0 0
        %961 = vmatprep.subr.bf16.mxu0 0
        %962 = vmatpush1.bf16.msra.mxu0 0
        %963 = vmatprep.subr.bf16.mxu0 0
        %964 = vmatpush1.bf16.msra.mxu0 0
        %965 = vmatprep.mubr.bf16.mxu0 0
        %966 = vmatmul.mubr.bf16.gmra.mrb[0].mxu0 %v922
        %v967 = vpop.f32.mrb[0].mxu0
        %v968 = vadd.f32 %v906, %v967
        %v969 = vpop.f32.mrb[0].mxu0
        %v970 = vpop.f32.mrb[0].mxu0
        %v971 = vadd.f32 %v906, %v970
        %v972 = vpop.f32.mrb[0].mxu0
        %973 = vmatprep.mubr.bf16.mxu0 0
        %974 = vmatmul.mubr.bf16.gmra.mrb[0].mxu0 %v925
        %v975 = vpop.f32.mrb[0].mxu0
        %v976 = vadd.f32 %v906, %v975
        %v977 = vpop.f32.mrb[0].mxu0
        %v978 = vpop.f32.mrb[0].mxu0
        %v979 = vadd.f32 %v906, %v978
        %v980 = vpop.f32.mrb[0].mxu0
        %981 = vmatprep.mubr.bf16.mxu0 0
        %982 = vmatmul.mubr.bf16.gmra.mrb[0].mxu0 %v928
        %v983 = vpop.f32.mrb[0].mxu0
        %v984 = vadd.f32 %v906, %v983
        %v985 = vpop.f32.mrb[0].mxu0
        %v986 = vpop.f32.mrb[0].mxu0
        %v987 = vadd.f32 %v906, %v986
        %v988 = vpop.f32.mrb[0].mxu0
        %989 = vmatprep.mubr.bf16.mxu0 0
        %990 = vmatmul.mubr.bf16.gmra.mrb[0].mxu0 %v931
        %v991 = vpop.f32.mrb[0].mxu0
        %v992 = vadd.f32 %v906, %v991
        %v993 = vpop.f32.mrb[0].mxu0
        %v994 = vpop.f32.mrb[0].mxu0
        %v995 = vadd.f32 %v906, %v994
        %v996 = vpop.f32.mrb[0].mxu0
        %997 = vdwg.mxu0
        %s998 = scalar_lea.vmem %s674, 16
        %v999 = vld [vmem:[%s998] sm:$0xf]
        %v1000 = vld [vmem:[%s998 + $0x4] sm:$0xf]
        %v1001 = vld [vmem:[%s998 + $0x8] sm:$0xf]
        %v1002 = vld [vmem:[%s998 + $0xc] sm:$0xf]
        %s1003 = scalar_lea.vmem %s678, 1
        %v1004 = vld [vmem:[%s1003] sm:$0x1]
        %v1006 = vlaneseq
        %v1007 = vshrl.u32 %v1006, 7
        %v1008 = vsub.s32 0, %v1007
        %v1009 = vrot.slane %v1004, %v1008
        %v1015 = vunpack.c.l.b16 %v999
        %v1016 = vunpack.c.l.b16 %v1000
        %v1017 = vunpack.c.l.b16 %v1001
        %v1018 = vunpack.c.l.b16 %v1002
        %v1019 = vpack.c.b16 %v1016, %v1015
        %v1020 = vpack.c.b16 %v1018, %v1017
        %1023 = vmatprep.subr.bf16.mxu0 0
        %1024 = vmatpush1.bf16.msra.mxu0 %v1019
        %1025 = vmatprep.subr.bf16.mxu0 0
        %1026 = vmatpush1.bf16.msra.mxu0 %v1020
        %1027 = vmatprep.subr.bf16.mxu0 0
        %1028 = vmatpush1.bf16.msra.mxu0 0
        %1029 = vmatprep.subr.bf16.mxu0 0
        %1030 = vmatpush1.bf16.msra.mxu0 0
        %1031 = vmatprep.subr.bf16.mxu0 0
        %1032 = vmatpush1.bf16.msra.mxu0 0
        %1033 = vmatprep.subr.bf16.mxu0 0
        %1034 = vmatpush1.bf16.msra.mxu0 0
        %1035 = vmatprep.subr.bf16.mxu0 0
        %1036 = vmatpush1.bf16.msra.mxu0 0
        %1037 = vmatprep.subr.bf16.mxu0 0
        %1038 = vmatpush1.bf16.msra.mxu0 0
        %1039 = vmatprep.subr.bf16.mxu0 0
        %1040 = vmatpush1.bf16.msra.mxu0 0
        %1041 = vmatprep.subr.bf16.mxu0 0
        %1042 = vmatpush1.bf16.msra.mxu0 0
        %1043 = vmatprep.subr.bf16.mxu0 0
        %1044 = vmatpush1.bf16.msra.mxu0 0
        %1045 = vmatprep.subr.bf16.mxu0 0
        %1046 = vmatpush1.bf16.msra.mxu0 0
        %1047 = vmatprep.subr.bf16.mxu0 0
        %1048 = vmatpush1.bf16.msra.mxu0 0
        %1049 = vmatprep.subr.bf16.mxu0 0
        %1050 = vmatpush1.bf16.msra.mxu0 0
        %1051 = vmatprep.subr.bf16.mxu0 0
        %1052 = vmatpush1.bf16.msra.mxu0 0
        %1053 = vmatprep.subr.bf16.mxu0 0
        %1054 = vmatpush1.bf16.msra.mxu0 0
        %1055 = vmatprep.mubr.bf16.mxu0 0
        %1056 = vmatmul.mubr.bf16.gmra.mrb[0].mxu0 %v922
        %v1057 = vpop.f32.mrb[0].mxu0
        %v1058 = vadd.f32 %v1009, %v1057
        %v1059 = vpop.f32.mrb[0].mxu0
        %v1060 = vpop.f32.mrb[0].mxu0
        %v1061 = vadd.f32 %v1009, %v1060
        %v1062 = vpop.f32.mrb[0].mxu0
        %1063 = vmatprep.mubr.bf16.mxu0 0
        %1064 = vmatmul.mubr.bf16.gmra.mrb[0].mxu0 %v925
        %v1065 = vpop.f32.mrb[0].mxu0
        %v1066 = vadd.f32 %v1009, %v1065
        %v1067 = vpop.f32.mrb[0].mxu0
        %v1068 = vpop.f32.mrb[0].mxu0
        %v1069 = vadd.f32 %v1009, %v1068
        %v1070 = vpop.f32.mrb[0].mxu0
        %1071 = vmatprep.mubr.bf16.mxu0 0
        %1072 = vmatmul.mubr.bf16.gmra.mrb[0].mxu0 %v928
        %v1073 = vpop.f32.mrb[0].mxu0
        %v1074 = vadd.f32 %v1009, %v1073
        %v1075 = vpop.f32.mrb[0].mxu0
        %v1076 = vpop.f32.mrb[0].mxu0
        %v1077 = vadd.f32 %v1009, %v1076
        %v1078 = vpop.f32.mrb[0].mxu0
        %1079 = vmatprep.mubr.bf16.mxu0 0
        %1080 = vmatmul.mubr.bf16.gmra.mrb[0].mxu0 %v931
        %v1081 = vpop.f32.mrb[0].mxu0
        %v1082 = vadd.f32 %v1009, %v1081
        %v1083 = vpop.f32.mrb[0].mxu0
        %v1084 = vpop.f32.mrb[0].mxu0
        %v1085 = vadd.f32 %v1009, %v1084
        %v1086 = vpop.f32.mrb[0].mxu0
        %1087 = vdwg.mxu0
        %s1088 = scalar_lea.vmem %s674, 32
        %v1089 = vld [vmem:[%s1088] sm:$0xf]
        %v1090 = vld [vmem:[%s1088 + $0x4] sm:$0xf]
        %v1091 = vld [vmem:[%s1088 + $0x8] sm:$0xf]
        %v1092 = vld [vmem:[%s1088 + $0xc] sm:$0xf]
        %s1093 = scalar_lea.vmem %s678, 2
        %v1094 = vld [vmem:[%s1093] sm:$0x1]
        %v1096 = vlaneseq
        %v1097 = vshrl.u32 %v1096, 7
        %v1098 = vsub.s32 0, %v1097
        %v1099 = vrot.slane %v1094, %v1098
        %v1105 = vunpack.c.l.b16 %v1089
        %v1106 = vunpack.c.l.b16 %v1090
        %v1107 = vunpack.c.l.b16 %v1091
        %v1108 = vunpack.c.l.b16 %v1092
        %v1109 = vpack.c.b16 %v1106, %v1105
        %v1110 = vpack.c.b16 %v1108, %v1107
        %1113 = vmatprep.subr.bf16.mxu0 0
        %1114 = vmatpush1.bf16.msra.mxu0 %v1109
        %1115 = vmatprep.subr.bf16.mxu0 0
        %1116 = vmatpush1.bf16.msra.mxu0 %v1110
        %1117 = vmatprep.subr.bf16.mxu0 0
        %1118 = vmatpush1.bf16.msra.mxu0 0
        %1119 = vmatprep.subr.bf16.mxu0 0
        %1120 = vmatpush1.bf16.msra.mxu0 0
        %1121 = vmatprep.subr.bf16.mxu0 0
        %1122 = vmatpush1.bf16.msra.mxu0 0
        %1123 = vmatprep.subr.bf16.mxu0 0
        %1124 = vmatpush1.bf16.msra.mxu0 0
        %1125 = vmatprep.subr.bf16.mxu0 0
        %1126 = vmatpush1.bf16.msra.mxu0 0
        %1127 = vmatprep.subr.bf16.mxu0 0
        %1128 = vmatpush1.bf16.msra.mxu0 0
        %1129 = vmatprep.subr.bf16.mxu0 0
        %1130 = vmatpush1.bf16.msra.mxu0 0
        %1131 = vmatprep.subr.bf16.mxu0 0
        %1132 = vmatpush1.bf16.msra.mxu0 0
        %1133 = vmatprep.subr.bf16.mxu0 0
        %1134 = vmatpush1.bf16.msra.mxu0 0
        %1135 = vmatprep.subr.bf16.mxu0 0
        %1136 = vmatpush1.bf16.msra.mxu0 0
        %1137 = vmatprep.subr.bf16.mxu0 0
        %1138 = vmatpush1.bf16.msra.mxu0 0
        %1139 = vmatprep.subr.bf16.mxu0 0
        %1140 = vmatpush1.bf16.msra.mxu0 0
        %1141 = vmatprep.subr.bf16.mxu0 0
        %1142 = vmatpush1.bf16.msra.mxu0 0
        %1143 = vmatprep.subr.bf16.mxu0 0
        %1144 = vmatpush1.bf16.msra.mxu0 0
        %1145 = vmatprep.mubr.bf16.mxu0 0
        %1146 = vmatmul.mubr.bf16.gmra.mrb[0].mxu0 %v922
        %v1147 = vpop.f32.mrb[0].mxu0
        %v1148 = vadd.f32 %v1099, %v1147
        %v1149 = vpop.f32.mrb[0].mxu0
        %v1150 = vpop.f32.mrb[0].mxu0
        %v1151 = vadd.f32 %v1099, %v1150
        %v1152 = vpop.f32.mrb[0].mxu0
        %1153 = vmatprep.mubr.bf16.mxu0 0
        %1154 = vmatmul.mubr.bf16.gmra.mrb[0].mxu0 %v925
        %v1155 = vpop.f32.mrb[0].mxu0
        %v1156 = vadd.f32 %v1099, %v1155
        %v1157 = vpop.f32.mrb[0].mxu0
        %v1158 = vpop.f32.mrb[0].mxu0
        %v1159 = vadd.f32 %v1099, %v1158
        %v1160 = vpop.f32.mrb[0].mxu0
        %1161 = vmatprep.mubr.bf16.mxu0 0
        %1162 = vmatmul.mubr.bf16.gmra.mrb[0].mxu0 %v928
        %v1163 = vpop.f32.mrb[0].mxu0
        %v1164 = vadd.f32 %v1099, %v1163
        %v1165 = vpop.f32.mrb[0].mxu0
        %v1166 = vpop.f32.mrb[0].mxu0
        %v1167 = vadd.f32 %v1099, %v1166
        %v1168 = vpop.f32.mrb[0].mxu0
        %1169 = vmatprep.mubr.bf16.mxu0 0
        %1170 = vmatmul.mubr.bf16.gmra.mrb[0].mxu0 %v931
        %v1171 = vpop.f32.mrb[0].mxu0
        %v1172 = vadd.f32 %v1099, %v1171
        %v1173 = vpop.f32.mrb[0].mxu0
        %v1174 = vpop.f32.mrb[0].mxu0
        %v1175 = vadd.f32 %v1099, %v1174
        %v1176 = vpop.f32.mrb[0].mxu0
        %1177 = vdwg.mxu0
        %v1178 = vmul.f32 %v968, 0.35355338
        %v1179 = vmul.f32 %v971, 0.35355338
        %v1180 = vmul.f32 %v976, 0.35355338
        %v1181 = vmul.f32 %v979, 0.35355338
        %v1182 = vmul.f32 %v984, 0.35355338
        %v1183 = vmul.f32 %v987, 0.35355338
        %v1184 = vmul.f32 %v992, 0.35355338
        %v1185 = vmul.f32 %v995, 0.35355338
        %v1186 = vpack.c.bf16 %v1178, %v1178
        %v1187 = vpack.c.bf16 %v1179, %v1179
        %v1188 = vpack.c.bf16 %v1180, %v1180
        %v1189 = vpack.c.bf16 %v1181, %v1181
        %v1190 = vpack.c.bf16 %v1182, %v1182
        %v1191 = vpack.c.bf16 %v1183, %v1183
        %v1192 = vpack.c.bf16 %v1184, %v1184
        %v1193 = vpack.c.bf16 %v1185, %v1185
        %v1194 = vpack.c.bf16 %v1058, %v1058
        %v1195 = vpack.c.bf16 %v1061, %v1061
        %v1196 = vpack.c.bf16 %v1066, %v1066
        %v1197 = vpack.c.bf16 %v1069, %v1069
        %v1198 = vpack.c.bf16 %v1074, %v1074
        %v1199 = vpack.c.bf16 %v1077, %v1077
        %v1200 = vpack.c.bf16 %v1082, %v1082
        %v1201 = vpack.c.bf16 %v1085, %v1085
        %v1202 = vpack.c.bf16 %v1148, %v1148
        %v1203 = vpack.c.bf16 %v1151, %v1151
        %v1204 = vpack.c.bf16 %v1156, %v1156
        %v1205 = vpack.c.bf16 %v1159, %v1159
        %v1206 = vpack.c.bf16 %v1164, %v1164
        %v1207 = vpack.c.bf16 %v1167, %v1167
        %v1208 = vpack.c.bf16 %v1172, %v1172
        %v1209 = vpack.c.bf16 %v1175, %v1175
        %v1218 = vlaneseq
        %v1219 = vshrl.u32 %v1218, 7
        %v1220 = vsub.s32 0, %v1219
        %v1221 = vrot.slane %v718, %v1220
        %v1222 = vlaneseq
        %v1223 = vshrl.u32 %v1222, 7
        %v1224 = vsub.s32 0, %v1223
        %v1225 = vrot.slane %v719, %v1224
        %v1226 = vlaneseq
        %v1227 = vshrl.u32 %v1226, 7
        %v1228 = vsub.s32 0, %v1227
        %v1229 = vrot.slane %v720, %v1228
        %v1230 = vlaneseq
        %v1231 = vshrl.u32 %v1230, 7
        %v1232 = vsub.s32 0, %v1231
        %v1233 = vrot.slane %v721, %v1232
        %v1234 = vlaneseq
        %v1235 = vshrl.u32 %v1234, 7
        %v1236 = vsub.s32 0, %v1235
        %v1237 = vrot.slane %v722, %v1236
        %v1238 = vlaneseq
        %v1239 = vshrl.u32 %v1238, 7
        %v1240 = vsub.s32 0, %v1239
        %v1241 = vrot.slane %v723, %v1240
        %v1242 = vlaneseq
        %v1243 = vshrl.u32 %v1242, 7
        %v1244 = vsub.s32 0, %v1243
        %v1245 = vrot.slane %v724, %v1244
        %v1246 = vlaneseq
        %v1247 = vshrl.u32 %v1246, 7
        %v1248 = vsub.s32 0, %v1247
        %v1249 = vrot.slane %v725, %v1248
        %vm1258 = vcmask 64512
        %v1260 = vsel %vm1258, %v1186, 0
        %v1263 = vsel %vm1258, %v1194, 0
        %1265 = vmatprep.subr.bf16.mxu0 0
        %1266 = vmatpush1.bf16.xpose.msra.mxu0 %v1263
        %1267 = vmatprep.subr.bf16.mxu0 0
        %1268 = vmatpush1.bf16.xpose.msra.mxu0 0
        %1269 = vmatprep.subr.bf16.mxu0 0
        %1270 = vmatpush1.bf16.xpose.msra.mxu0 0
        %1271 = vmatprep.subr.bf16.mxu0 0
        %1272 = vmatpush1.bf16.xpose.msra.mxu0 0
        %1273 = vmatprep.subr.bf16.mxu0 0
        %1274 = vmatpush1.bf16.xpose.msra.mxu0 0
        %1275 = vmatprep.subr.bf16.mxu0 0
        %1276 = vmatpush1.bf16.xpose.msra.mxu0 0
        %1277 = vmatprep.subr.bf16.mxu0 0
        %1278 = vmatpush1.bf16.xpose.msra.mxu0 0
        %1279 = vmatprep.subr.bf16.mxu0 0
        %1280 = vmatpush1.bf16.xpose.msra.mxu0 0
        %1281 = vmatprep.subr.bf16.mxu0 0
        %1282 = vmatpush1.bf16.xpose.msra.mxu0 0
        %1283 = vmatprep.subr.bf16.mxu0 0
        %1284 = vmatpush1.bf16.xpose.msra.mxu0 0
        %1285 = vmatprep.subr.bf16.mxu0 0
        %1286 = vmatpush1.bf16.xpose.msra.mxu0 0
        %1287 = vmatprep.subr.bf16.mxu0 0
        %1288 = vmatpush1.bf16.xpose.msra.mxu0 0
        %1289 = vmatprep.subr.bf16.mxu0 0
        %1290 = vmatpush1.bf16.xpose.msra.mxu0 0
        %1291 = vmatprep.subr.bf16.mxu0 0
        %1292 = vmatpush1.bf16.xpose.msra.mxu0 0
        %1293 = vmatprep.subr.bf16.mxu0 0
        %1294 = vmatpush1.bf16.xpose.msra.mxu0 0
        %1295 = vmatprep.subr.bf16.mxu0 0
        %1296 = vmatpush1.bf16.xpose.msra.mxu0 0
        %1297 = vmatprep.mubr.bf16.mxu0 0
        %1298 = vmatmul.mubr.bf16.gmra.mrb[0].mxu0 %v1260
        %v1299 = vpop.f32.mrb[0].mxu0
        %v1300 = vadd.f32 %v1221, %v1299
        %v1301 = vpop.f32.mrb[0].mxu0
        %v1302 = vpop.f32.mrb[0].mxu0
        %v1303 = vpop.f32.mrb[0].mxu0
        %1304 = vdwg.mxu0
        %v1306 = vsel %vm1258, %v1187, 0
        %v1309 = vsel %vm1258, %v1195, 0
        %1311 = vmatprep.subr.bf16.mxu0 0
        %1312 = vmatpush1.bf16.xpose.msra.mxu0 %v1309
        %1313 = vmatprep.subr.bf16.mxu0 0
        %1314 = vmatpush1.bf16.xpose.msra.mxu0 0
        %1315 = vmatprep.subr.bf16.mxu0 0
        %1316 = vmatpush1.bf16.xpose.msra.mxu0 0
        %1317 = vmatprep.subr.bf16.mxu0 0
        %1318 = vmatpush1.bf16.xpose.msra.mxu0 0
        %1319 = vmatprep.subr.bf16.mxu0 0
        %1320 = vmatpush1.bf16.xpose.msra.mxu0 0
        %1321 = vmatprep.subr.bf16.mxu0 0
        %1322 = vmatpush1.bf16.xpose.msra.mxu0 0
        %1323 = vmatprep.subr.bf16.mxu0 0
        %1324 = vmatpush1.bf16.xpose.msra.mxu0 0
        %1325 = vmatprep.subr.bf16.mxu0 0
        %1326 = vmatpush1.bf16.xpose.msra.mxu0 0
        %1327 = vmatprep.subr.bf16.mxu0 0
        %1328 = vmatpush1.bf16.xpose.msra.mxu0 0
        %1329 = vmatprep.subr.bf16.mxu0 0
        %1330 = vmatpush1.bf16.xpose.msra.mxu0 0
        %1331 = vmatprep.subr.bf16.mxu0 0
        %1332 = vmatpush1.bf16.xpose.msra.mxu0 0
        %1333 = vmatprep.subr.bf16.mxu0 0
        %1334 = vmatpush1.bf16.xpose.msra.mxu0 0
        %1335 = vmatprep.subr.bf16.mxu0 0
        %1336 = vmatpush1.bf16.xpose.msra.mxu0 0
        %1337 = vmatprep.subr.bf16.mxu0 0
        %1338 = vmatpush1.bf16.xpose.msra.mxu0 0
        %1339 = vmatprep.subr.bf16.mxu0 0
        %1340 = vmatpush1.bf16.xpose.msra.mxu0 0
        %1341 = vmatprep.subr.bf16.mxu0 0
        %1342 = vmatpush1.bf16.xpose.msra.mxu0 0
        %1343 = vmatprep.mubr.bf16.mxu0 0
        %1344 = vmatmul.mubr.bf16.gmra.mrb[0].mxu0 %v1306
        %v1345 = vpop.f32.mrb[0].mxu0
        %v1346 = vadd.f32 %v1225, %v1345
        %v1347 = vpop.f32.mrb[0].mxu0
        %v1348 = vpop.f32.mrb[0].mxu0
        %v1349 = vpop.f32.mrb[0].mxu0
        %1350 = vdwg.mxu0
        %v1352 = vsel %vm1258, %v1188, 0
        %v1355 = vsel %vm1258, %v1196, 0
        %1357 = vmatprep.subr.bf16.mxu0 0
        %1358 = vmatpush1.bf16.xpose.msra.mxu0 %v1355
        %1359 = vmatprep.subr.bf16.mxu0 0
        %1360 = vmatpush1.bf16.xpose.msra.mxu0 0
        %1361 = vmatprep.subr.bf16.mxu0 0
        %1362 = vmatpush1.bf16.xpose.msra.mxu0 0
        %1363 = vmatprep.subr.bf16.mxu0 0
        %1364 = vmatpush1.bf16.xpose.msra.mxu0 0
        %1365 = vmatprep.subr.bf16.mxu0 0
        %1366 = vmatpush1.bf16.xpose.msra.mxu0 0
        %1367 = vmatprep.subr.bf16.mxu0 0
        %1368 = vmatpush1.bf16.xpose.msra.mxu0 0
        %1369 = vmatprep.subr.bf16.mxu0 0
        %1370 = vmatpush1.bf16.xpose.msra.mxu0 0
        %1371 = vmatprep.subr.bf16.mxu0 0
        %1372 = vmatpush1.bf16.xpose.msra.mxu0 0
        %1373 = vmatprep.subr.bf16.mxu0 0
        %1374 = vmatpush1.bf16.xpose.msra.mxu0 0
        %1375 = vmatprep.subr.bf16.mxu0 0
        %1376 = vmatpush1.bf16.xpose.msra.mxu0 0
        %1377 = vmatprep.subr.bf16.mxu0 0
        %1378 = vmatpush1.bf16.xpose.msra.mxu0 0
        %1379 = vmatprep.subr.bf16.mxu0 0
        %1380 = vmatpush1.bf16.xpose.msra.mxu0 0
        %1381 = vmatprep.subr.bf16.mxu0 0
        %1382 = vmatpush1.bf16.xpose.msra.mxu0 0
        %1383 = vmatprep.subr.bf16.mxu0 0
        %1384 = vmatpush1.bf16.xpose.msra.mxu0 0
        %1385 = vmatprep.subr.bf16.mxu0 0
        %1386 = vmatpush1.bf16.xpose.msra.mxu0 0
        %1387 = vmatprep.subr.bf16.mxu0 0
        %1388 = vmatpush1.bf16.xpose.msra.mxu0 0
        %1389 = vmatprep.mubr.bf16.mxu0 0
        %1390 = vmatmul.mubr.bf16.gmra.mrb[0].mxu0 %v1352
        %v1391 = vpop.f32.mrb[0].mxu0
        %v1392 = vadd.f32 %v1229, %v1391
        %v1393 = vpop.f32.mrb[0].mxu0
        %v1394 = vpop.f32.mrb[0].mxu0
        %v1395 = vpop.f32.mrb[0].mxu0
        %1396 = vdwg.mxu0
        %v1398 = vsel %vm1258, %v1189, 0
        %v1401 = vsel %vm1258, %v1197, 0
        %1403 = vmatprep.subr.bf16.mxu0 0
        %1404 = vmatpush1.bf16.xpose.msra.mxu0 %v1401
        %1405 = vmatprep.subr.bf16.mxu0 0
        %1406 = vmatpush1.bf16.xpose.msra.mxu0 0
        %1407 = vmatprep.subr.bf16.mxu0 0
        %1408 = vmatpush1.bf16.xpose.msra.mxu0 0
        %1409 = vmatprep.subr.bf16.mxu0 0
        %1410 = vmatpush1.bf16.xpose.msra.mxu0 0
        %1411 = vmatprep.subr.bf16.mxu0 0
        %1412 = vmatpush1.bf16.xpose.msra.mxu0 0
        %1413 = vmatprep.subr.bf16.mxu0 0
        %1414 = vmatpush1.bf16.xpose.msra.mxu0 0
        %1415 = vmatprep.subr.bf16.mxu0 0
        %1416 = vmatpush1.bf16.xpose.msra.mxu0 0
        %1417 = vmatprep.subr.bf16.mxu0 0
        %1418 = vmatpush1.bf16.xpose.msra.mxu0 0
        %1419 = vmatprep.subr.bf16.mxu0 0
        %1420 = vmatpush1.bf16.xpose.msra.mxu0 0
        %1421 = vmatprep.subr.bf16.mxu0 0
        %1422 = vmatpush1.bf16.xpose.msra.mxu0 0
        %1423 = vmatprep.subr.bf16.mxu0 0
        %1424 = vmatpush1.bf16.xpose.msra.mxu0 0
        %1425 = vmatprep.subr.bf16.mxu0 0
        %1426 = vmatpush1.bf16.xpose.msra.mxu0 0
        %1427 = vmatprep.subr.bf16.mxu0 0
        %1428 = vmatpush1.bf16.xpose.msra.mxu0 0
        %1429 = vmatprep.subr.bf16.mxu0 0
        %1430 = vmatpush1.bf16.xpose.msra.mxu0 0
        %1431 = vmatprep.subr.bf16.mxu0 0
        %1432 = vmatpush1.bf16.xpose.msra.mxu0 0
        %1433 = vmatprep.subr.bf16.mxu0 0
        %1434 = vmatpush1.bf16.xpose.msra.mxu0 0
        %1435 = vmatprep.mubr.bf16.mxu0 0
        %1436 = vmatmul.mubr.bf16.gmra.mrb[0].mxu0 %v1398
        %v1437 = vpop.f32.mrb[0].mxu0
        %v1438 = vadd.f32 %v1233, %v1437
        %v1439 = vpop.f32.mrb[0].mxu0
        %v1440 = vpop.f32.mrb[0].mxu0
        %v1441 = vpop.f32.mrb[0].mxu0
        %1442 = vdwg.mxu0
        %v1444 = vsel %vm1258, %v1190, 0
        %v1447 = vsel %vm1258, %v1198, 0
        %1449 = vmatprep.subr.bf16.mxu0 0
        %1450 = vmatpush1.bf16.xpose.msra.mxu0 %v1447
        %1451 = vmatprep.subr.bf16.mxu0 0
        %1452 = vmatpush1.bf16.xpose.msra.mxu0 0
        %1453 = vmatprep.subr.bf16.mxu0 0
        %1454 = vmatpush1.bf16.xpose.msra.mxu0 0
        %1455 = vmatprep.subr.bf16.mxu0 0
        %1456 = vmatpush1.bf16.xpose.msra.mxu0 0
        %1457 = vmatprep.subr.bf16.mxu0 0
        %1458 = vmatpush1.bf16.xpose.msra.mxu0 0
        %1459 = vmatprep.subr.bf16.mxu0 0
        %1460 = vmatpush1.bf16.xpose.msra.mxu0 0
        %1461 = vmatprep.subr.bf16.mxu0 0
        %1462 = vmatpush1.bf16.xpose.msra.mxu0 0
        %1463 = vmatprep.subr.bf16.mxu0 0
        %1464 = vmatpush1.bf16.xpose.msra.mxu0 0
        %1465 = vmatprep.subr.bf16.mxu0 0
        %1466 = vmatpush1.bf16.xpose.msra.mxu0 0
        %1467 = vmatprep.subr.bf16.mxu0 0
        %1468 = vmatpush1.bf16.xpose.msra.mxu0 0
        %1469 = vmatprep.subr.bf16.mxu0 0
        %1470 = vmatpush1.bf16.xpose.msra.mxu0 0
        %1471 = vmatprep.subr.bf16.mxu0 0
        %1472 = vmatpush1.bf16.xpose.msra.mxu0 0
        %1473 = vmatprep.subr.bf16.mxu0 0
        %1474 = vmatpush1.bf16.xpose.msra.mxu0 0
        %1475 = vmatprep.subr.bf16.mxu0 0
        %1476 = vmatpush1.bf16.xpose.msra.mxu0 0
        %1477 = vmatprep.subr.bf16.mxu0 0
        %1478 = vmatpush1.bf16.xpose.msra.mxu0 0
        %1479 = vmatprep.subr.bf16.mxu0 0
        %1480 = vmatpush1.bf16.xpose.msra.mxu0 0
        %1481 = vmatprep.mubr.bf16.mxu0 0
        %1482 = vmatmul.mubr.bf16.gmra.mrb[0].mxu0 %v1444
        %v1483 = vpop.f32.mrb[0].mxu0
        %v1484 = vadd.f32 %v1237, %v1483
        %v1485 = vpop.f32.mrb[0].mxu0
        %v1486 = vpop.f32.mrb[0].mxu0
        %v1487 = vpop.f32.mrb[0].mxu0
        %1488 = vdwg.mxu0
        %v1490 = vsel %vm1258, %v1191, 0
        %v1493 = vsel %vm1258, %v1199, 0
        %1495 = vmatprep.subr.bf16.mxu0 0
        %1496 = vmatpush1.bf16.xpose.msra.mxu0 %v1493
        %1497 = vmatprep.subr.bf16.mxu0 0
        %1498 = vmatpush1.bf16.xpose.msra.mxu0 0
        %1499 = vmatprep.subr.bf16.mxu0 0
        %1500 = vmatpush1.bf16.xpose.msra.mxu0 0
        %1501 = vmatprep.subr.bf16.mxu0 0
        %1502 = vmatpush1.bf16.xpose.msra.mxu0 0
        %1503 = vmatprep.subr.bf16.mxu0 0
        %1504 = vmatpush1.bf16.xpose.msra.mxu0 0
        %1505 = vmatprep.subr.bf16.mxu0 0
        %1506 = vmatpush1.bf16.xpose.msra.mxu0 0
        %1507 = vmatprep.subr.bf16.mxu0 0
        %1508 = vmatpush1.bf16.xpose.msra.mxu0 0
        %1509 = vmatprep.subr.bf16.mxu0 0
        %1510 = vmatpush1.bf16.xpose.msra.mxu0 0
        %1511 = vmatprep.subr.bf16.mxu0 0
        %1512 = vmatpush1.bf16.xpose.msra.mxu0 0
        %1513 = vmatprep.subr.bf16.mxu0 0
        %1514 = vmatpush1.bf16.xpose.msra.mxu0 0
        %1515 = vmatprep.subr.bf16.mxu0 0
        %1516 = vmatpush1.bf16.xpose.msra.mxu0 0
        %1517 = vmatprep.subr.bf16.mxu0 0
        %1518 = vmatpush1.bf16.xpose.msra.mxu0 0
        %1519 = vmatprep.subr.bf16.mxu0 0
        %1520 = vmatpush1.bf16.xpose.msra.mxu0 0
        %1521 = vmatprep.subr.bf16.mxu0 0
        %1522 = vmatpush1.bf16.xpose.msra.mxu0 0
        %1523 = vmatprep.subr.bf16.mxu0 0
        %1524 = vmatpush1.bf16.xpose.msra.mxu0 0
        %1525 = vmatprep.subr.bf16.mxu0 0
        %1526 = vmatpush1.bf16.xpose.msra.mxu0 0
        %1527 = vmatprep.mubr.bf16.mxu0 0
        %1528 = vmatmul.mubr.bf16.gmra.mrb[0].mxu0 %v1490
        %v1529 = vpop.f32.mrb[0].mxu0
        %v1530 = vadd.f32 %v1241, %v1529
        %v1531 = vpop.f32.mrb[0].mxu0
        %v1532 = vpop.f32.mrb[0].mxu0
        %v1533 = vpop.f32.mrb[0].mxu0
        %1534 = vdwg.mxu0
        %v1536 = vsel %vm1258, %v1192, 0
        %v1539 = vsel %vm1258, %v1200, 0
        %1541 = vmatprep.subr.bf16.mxu0 0
        %1542 = vmatpush1.bf16.xpose.msra.mxu0 %v1539
        %1543 = vmatprep.subr.bf16.mxu0 0
        %1544 = vmatpush1.bf16.xpose.msra.mxu0 0
        %1545 = vmatprep.subr.bf16.mxu0 0
        %1546 = vmatpush1.bf16.xpose.msra.mxu0 0
        %1547 = vmatprep.subr.bf16.mxu0 0
        %1548 = vmatpush1.bf16.xpose.msra.mxu0 0
        %1549 = vmatprep.subr.bf16.mxu0 0
        %1550 = vmatpush1.bf16.xpose.msra.mxu0 0
        %1551 = vmatprep.subr.bf16.mxu0 0
        %1552 = vmatpush1.bf16.xpose.msra.mxu0 0
        %1553 = vmatprep.subr.bf16.mxu0 0
        %1554 = vmatpush1.bf16.xpose.msra.mxu0 0
        %1555 = vmatprep.subr.bf16.mxu0 0
        %1556 = vmatpush1.bf16.xpose.msra.mxu0 0
        %1557 = vmatprep.subr.bf16.mxu0 0
        %1558 = vmatpush1.bf16.xpose.msra.mxu0 0
        %1559 = vmatprep.subr.bf16.mxu0 0
        %1560 = vmatpush1.bf16.xpose.msra.mxu0 0
        %1561 = vmatprep.subr.bf16.mxu0 0
        %1562 = vmatpush1.bf16.xpose.msra.mxu0 0
        %1563 = vmatprep.subr.bf16.mxu0 0
        %1564 = vmatpush1.bf16.xpose.msra.mxu0 0
        %1565 = vmatprep.subr.bf16.mxu0 0
        %1566 = vmatpush1.bf16.xpose.msra.mxu0 0
        %1567 = vmatprep.subr.bf16.mxu0 0
        %1568 = vmatpush1.bf16.xpose.msra.mxu0 0
        %1569 = vmatprep.subr.bf16.mxu0 0
        %1570 = vmatpush1.bf16.xpose.msra.mxu0 0
        %1571 = vmatprep.subr.bf16.mxu0 0
        %1572 = vmatpush1.bf16.xpose.msra.mxu0 0
        %1573 = vmatprep.mubr.bf16.mxu0 0
        %1574 = vmatmul.mubr.bf16.gmra.mrb[0].mxu0 %v1536
        %v1575 = vpop.f32.mrb[0].mxu0
        %v1576 = vadd.f32 %v1245, %v1575
        %v1577 = vpop.f32.mrb[0].mxu0
        %v1578 = vpop.f32.mrb[0].mxu0
        %v1579 = vpop.f32.mrb[0].mxu0
        %1580 = vdwg.mxu0
        %v1582 = vsel %vm1258, %v1193, 0
        %v1585 = vsel %vm1258, %v1201, 0
        %1587 = vmatprep.subr.bf16.mxu0 0
        %1588 = vmatpush1.bf16.xpose.msra.mxu0 %v1585
        %1589 = vmatprep.subr.bf16.mxu0 0
        %1590 = vmatpush1.bf16.xpose.msra.mxu0 0
        %1591 = vmatprep.subr.bf16.mxu0 0
        %1592 = vmatpush1.bf16.xpose.msra.mxu0 0
        %1593 = vmatprep.subr.bf16.mxu0 0
        %1594 = vmatpush1.bf16.xpose.msra.mxu0 0
        %1595 = vmatprep.subr.bf16.mxu0 0
        %1596 = vmatpush1.bf16.xpose.msra.mxu0 0
        %1597 = vmatprep.subr.bf16.mxu0 0
        %1598 = vmatpush1.bf16.xpose.msra.mxu0 0
        %1599 = vmatprep.subr.bf16.mxu0 0
        %1600 = vmatpush1.bf16.xpose.msra.mxu0 0
        %1601 = vmatprep.subr.bf16.mxu0 0
        %1602 = vmatpush1.bf16.xpose.msra.mxu0 0
        %1603 = vmatprep.subr.bf16.mxu0 0
        %1604 = vmatpush1.bf16.xpose.msra.mxu0 0
        %1605 = vmatprep.subr.bf16.mxu0 0
        %1606 = vmatpush1.bf16.xpose.msra.mxu0 0
        %1607 = vmatprep.subr.bf16.mxu0 0
        %1608 = vmatpush1.bf16.xpose.msra.mxu0 0
        %1609 = vmatprep.subr.bf16.mxu0 0
        %1610 = vmatpush1.bf16.xpose.msra.mxu0 0
        %1611 = vmatprep.subr.bf16.mxu0 0
        %1612 = vmatpush1.bf16.xpose.msra.mxu0 0
        %1613 = vmatprep.subr.bf16.mxu0 0
        %1614 = vmatpush1.bf16.xpose.msra.mxu0 0
        %1615 = vmatprep.subr.bf16.mxu0 0
        %1616 = vmatpush1.bf16.xpose.msra.mxu0 0
        %1617 = vmatprep.subr.bf16.mxu0 0
        %1618 = vmatpush1.bf16.xpose.msra.mxu0 0
        %1619 = vmatprep.mubr.bf16.mxu0 0
        %1620 = vmatmul.mubr.bf16.gmra.mrb[0].mxu0 %v1582
        %v1621 = vpop.f32.mrb[0].mxu0
        %v1622 = vadd.f32 %v1249, %v1621
        %v1623 = vpop.f32.mrb[0].mxu0
        %v1624 = vpop.f32.mrb[0].mxu0
        %v1625 = vpop.f32.mrb[0].mxu0
        %1626 = vdwg.mxu0
        %v1627 = vsel %vm1258, %v1300, -inf
        %1628 = vmax.xlane.f32.xlu0 %v1627
        %v1629 = vpop.xlane.xlu0 %1628
        %v1630 = vsel %vm1258, %v1346, -inf
        %1631 = vmax.xlane.f32.xlu0 %v1630
        %v1632 = vpop.xlane.xlu0 %1631
        %v1633 = vsel %vm1258, %v1392, -inf
        %1634 = vmax.xlane.f32.xlu0 %v1633
        %v1635 = vpop.xlane.xlu0 %1634
        %v1636 = vsel %vm1258, %v1438, -inf
        %1637 = vmax.xlane.f32.xlu0 %v1636
        %v1638 = vpop.xlane.xlu0 %1637
        %v1639 = vsel %vm1258, %v1484, -inf
        %1640 = vmax.xlane.f32.xlu0 %v1639
        %v1641 = vpop.xlane.xlu0 %1640
        %v1642 = vsel %vm1258, %v1530, -inf
        %1643 = vmax.xlane.f32.xlu0 %v1642
        %v1644 = vpop.xlane.xlu0 %1643
        %v1645 = vsel %vm1258, %v1576, -inf
        %1646 = vmax.xlane.f32.xlu0 %v1645
        %v1647 = vpop.xlane.xlu0 %1646
        %v1648 = vsel %vm1258, %v1622, -inf
        %1649 = vmax.xlane.f32.xlu0 %v1648
        %v1650 = vpop.xlane.xlu0 %1649
        %v1651 = vsub.f32 %v1300, %v1629
        %v1652 = vsub.f32 %v1346, %v1632
        %v1653 = vsub.f32 %v1392, %v1635
        %v1654 = vsub.f32 %v1438, %v1638
        %v1655 = vsub.f32 %v1484, %v1641
        %v1656 = vsub.f32 %v1530, %v1644
        %v1657 = vsub.f32 %v1576, %v1647
        %v1658 = vsub.f32 %v1622, %v1650
        %v1659 = vmul.f32 %v1651, 1.442695
        %v1660 = vpow.pop %v1659
        %v1661 = vmul.f32 %v1652, 1.442695
        %v1662 = vpow.pop %v1661
        %v1663 = vmul.f32 %v1653, 1.442695
        %v1664 = vpow.pop %v1663
        %v1665 = vmul.f32 %v1654, 1.442695
        %v1666 = vpow.pop %v1665
        %v1667 = vmul.f32 %v1655, 1.442695
        %v1668 = vpow.pop %v1667
        %v1669 = vmul.f32 %v1656, 1.442695
        %v1670 = vpow.pop %v1669
        %v1671 = vmul.f32 %v1657, 1.442695
        %v1672 = vpow.pop %v1671
        %v1673 = vmul.f32 %v1658, 1.442695
        %v1674 = vpow.pop %v1673
        %v1675 = vsel %vm1258, %v1660, 0.0
        %1676 = vadd.xlane.f32.xlu0 %v1675
        %v1677 = vpop.xlane.xlu0 %1676
        %v1678 = vsel %vm1258, %v1662, 0.0
        %1679 = vadd.xlane.f32.xlu0 %v1678
        %v1680 = vpop.xlane.xlu0 %1679
        %v1681 = vsel %vm1258, %v1664, 0.0
        %1682 = vadd.xlane.f32.xlu0 %v1681
        %v1683 = vpop.xlane.xlu0 %1682
        %v1684 = vsel %vm1258, %v1666, 0.0
        %1685 = vadd.xlane.f32.xlu0 %v1684
        %v1686 = vpop.xlane.xlu0 %1685
        %v1687 = vsel %vm1258, %v1668, 0.0
        %1688 = vadd.xlane.f32.xlu0 %v1687
        %v1689 = vpop.xlane.xlu0 %1688
        %v1690 = vsel %vm1258, %v1670, 0.0
        %1691 = vadd.xlane.f32.xlu0 %v1690
        %v1692 = vpop.xlane.xlu0 %1691
        %v1693 = vsel %vm1258, %v1672, 0.0
        %1694 = vadd.xlane.f32.xlu0 %v1693
        %v1695 = vpop.xlane.xlu0 %1694
        %v1696 = vsel %vm1258, %v1674, 0.0
        %1697 = vadd.xlane.f32.xlu0 %v1696
        %v1698 = vpop.xlane.xlu0 %1697
        %v1699 = vrcp.pop %v1677
        %v1700 = vrcp.pop %v1680
        %v1701 = vrcp.pop %v1683
        %v1702 = vrcp.pop %v1686
        %v1703 = vrcp.pop %v1689
        %v1704 = vrcp.pop %v1692
        %v1705 = vrcp.pop %v1695
        %v1706 = vrcp.pop %v1698
        %v1707 = vmul.f32 %v1660, %v1699
        %v1708 = vmul.f32 %v1662, %v1700
        %v1709 = vmul.f32 %v1664, %v1701
        %v1710 = vmul.f32 %v1666, %v1702
        %v1711 = vmul.f32 %v1668, %v1703
        %v1712 = vmul.f32 %v1670, %v1704
        %v1713 = vmul.f32 %v1672, %v1705
        %v1714 = vmul.f32 %v1674, %v1706
        %v1715 = vpack.c.bf16 %v1707, %v1707
        %v1716 = vpack.c.bf16 %v1708, %v1708
        %v1717 = vpack.c.bf16 %v1709, %v1709
        %v1718 = vpack.c.bf16 %v1710, %v1710
        %v1719 = vpack.c.bf16 %v1711, %v1711
        %v1720 = vpack.c.bf16 %v1712, %v1712
        %v1721 = vpack.c.bf16 %v1713, %v1713
        %v1722 = vpack.c.bf16 %v1714, %v1714
        %v1724 = vsel %vm1258, %v1715, 0
        %vm1726 = vcmask 1043456
        %v1728 = vsel %vm1726, %v1202, 0
        %1730 = vmatprep.subr.bf16.mxu0 0
        %1731 = vmatpush1.bf16.msra.mxu0 %v1728
        %1732 = vmatprep.subr.bf16.mxu0 0
        %1733 = vmatpush1.bf16.msra.mxu0 0
        %1734 = vmatprep.subr.bf16.mxu0 0
        %1735 = vmatpush1.bf16.msra.mxu0 0
        %1736 = vmatprep.subr.bf16.mxu0 0
        %1737 = vmatpush1.bf16.msra.mxu0 0
        %1738 = vmatprep.subr.bf16.mxu0 0
        %1739 = vmatpush1.bf16.msra.mxu0 0
        %1740 = vmatprep.subr.bf16.mxu0 0
        %1741 = vmatpush1.bf16.msra.mxu0 0
        %1742 = vmatprep.subr.bf16.mxu0 0
        %1743 = vmatpush1.bf16.msra.mxu0 0
        %1744 = vmatprep.subr.bf16.mxu0 0
        %1745 = vmatpush1.bf16.msra.mxu0 0
        %1746 = vmatprep.subr.bf16.mxu0 0
        %1747 = vmatpush1.bf16.msra.mxu0 0
        %1748 = vmatprep.subr.bf16.mxu0 0
        %1749 = vmatpush1.bf16.msra.mxu0 0
        %1750 = vmatprep.subr.bf16.mxu0 0
        %1751 = vmatpush1.bf16.msra.mxu0 0
        %1752 = vmatprep.subr.bf16.mxu0 0
        %1753 = vmatpush1.bf16.msra.mxu0 0
        %1754 = vmatprep.subr.bf16.mxu0 0
        %1755 = vmatpush1.bf16.msra.mxu0 0
        %1756 = vmatprep.subr.bf16.mxu0 0
        %1757 = vmatpush1.bf16.msra.mxu0 0
        %1758 = vmatprep.subr.bf16.mxu0 0
        %1759 = vmatpush1.bf16.msra.mxu0 0
        %1760 = vmatprep.subr.bf16.mxu0 0
        %1761 = vmatpush1.bf16.msra.mxu0 0
        %1762 = vmatprep.mubr.bf16.mxu0 0
        %1763 = vmatmul.mubr.bf16.gmra.mrb[0].mxu0 %v1724
        %v1764 = vpop.f32.mrb[0].mxu0
        %v1765 = vadd.f32 0.0, %v1764
        %v1766 = vpop.f32.mrb[0].mxu0
        %v1767 = vpop.f32.mrb[0].mxu0
        %v1768 = vpop.f32.mrb[0].mxu0
        %1769 = vdwg.mxu0
        %v1771 = vsel %vm1258, %v1716, 0
        %v1774 = vsel %vm1726, %v1203, 0
        %1776 = vmatprep.subr.bf16.mxu0 0
        %1777 = vmatpush1.bf16.msra.mxu0 %v1774
        %1778 = vmatprep.subr.bf16.mxu0 0
        %1779 = vmatpush1.bf16.msra.mxu0 0
        %1780 = vmatprep.subr.bf16.mxu0 0
        %1781 = vmatpush1.bf16.msra.mxu0 0
        %1782 = vmatprep.subr.bf16.mxu0 0
        %1783 = vmatpush1.bf16.msra.mxu0 0
        %1784 = vmatprep.subr.bf16.mxu0 0
        %1785 = vmatpush1.bf16.msra.mxu0 0
        %1786 = vmatprep.subr.bf16.mxu0 0
        %1787 = vmatpush1.bf16.msra.mxu0 0
        %1788 = vmatprep.subr.bf16.mxu0 0
        %1789 = vmatpush1.bf16.msra.mxu0 0
        %1790 = vmatprep.subr.bf16.mxu0 0
        %1791 = vmatpush1.bf16.msra.mxu0 0
        %1792 = vmatprep.subr.bf16.mxu0 0
        %1793 = vmatpush1.bf16.msra.mxu0 0
        %1794 = vmatprep.subr.bf16.mxu0 0
        %1795 = vmatpush1.bf16.msra.mxu0 0
        %1796 = vmatprep.subr.bf16.mxu0 0
        %1797 = vmatpush1.bf16.msra.mxu0 0
        %1798 = vmatprep.subr.bf16.mxu0 0
        %1799 = vmatpush1.bf16.msra.mxu0 0
        %1800 = vmatprep.subr.bf16.mxu0 0
        %1801 = vmatpush1.bf16.msra.mxu0 0
        %1802 = vmatprep.subr.bf16.mxu0 0
        %1803 = vmatpush1.bf16.msra.mxu0 0
        %1804 = vmatprep.subr.bf16.mxu0 0
        %1805 = vmatpush1.bf16.msra.mxu0 0
        %1806 = vmatprep.subr.bf16.mxu0 0
        %1807 = vmatpush1.bf16.msra.mxu0 0
        %1808 = vmatprep.mubr.bf16.mxu0 0
        %1809 = vmatmul.mubr.bf16.gmra.mrb[0].mxu0 %v1771
        %v1810 = vpop.f32.mrb[0].mxu0
        %v1811 = vadd.f32 0.0, %v1810
        %v1812 = vpop.f32.mrb[0].mxu0
        %v1813 = vpop.f32.mrb[0].mxu0
        %v1814 = vpop.f32.mrb[0].mxu0
        %1815 = vdwg.mxu0
        %v1817 = vsel %vm1258, %v1717, 0
        %v1820 = vsel %vm1726, %v1204, 0
        %1822 = vmatprep.subr.bf16.mxu0 0
        %1823 = vmatpush1.bf16.msra.mxu0 %v1820
        %1824 = vmatprep.subr.bf16.mxu0 0
        %1825 = vmatpush1.bf16.msra.mxu0 0
        %1826 = vmatprep.subr.bf16.mxu0 0
        %1827 = vmatpush1.bf16.msra.mxu0 0
        %1828 = vmatprep.subr.bf16.mxu0 0
        %1829 = vmatpush1.bf16.msra.mxu0 0
        %1830 = vmatprep.subr.bf16.mxu0 0
        %1831 = vmatpush1.bf16.msra.mxu0 0
        %1832 = vmatprep.subr.bf16.mxu0 0
        %1833 = vmatpush1.bf16.msra.mxu0 0
        %1834 = vmatprep.subr.bf16.mxu0 0
        %1835 = vmatpush1.bf16.msra.mxu0 0
        %1836 = vmatprep.subr.bf16.mxu0 0
        %1837 = vmatpush1.bf16.msra.mxu0 0
        %1838 = vmatprep.subr.bf16.mxu0 0
        %1839 = vmatpush1.bf16.msra.mxu0 0
        %1840 = vmatprep.subr.bf16.mxu0 0
        %1841 = vmatpush1.bf16.msra.mxu0 0
        %1842 = vmatprep.subr.bf16.mxu0 0
        %1843 = vmatpush1.bf16.msra.mxu0 0
        %1844 = vmatprep.subr.bf16.mxu0 0
        %1845 = vmatpush1.bf16.msra.mxu0 0
        %1846 = vmatprep.subr.bf16.mxu0 0
        %1847 = vmatpush1.bf16.msra.mxu0 0
        %1848 = vmatprep.subr.bf16.mxu0 0
        %1849 = vmatpush1.bf16.msra.mxu0 0
        %1850 = vmatprep.subr.bf16.mxu0 0
        %1851 = vmatpush1.bf16.msra.mxu0 0
        %1852 = vmatprep.subr.bf16.mxu0 0
        %1853 = vmatpush1.bf16.msra.mxu0 0
        %1854 = vmatprep.mubr.bf16.mxu0 0
        %1855 = vmatmul.mubr.bf16.gmra.mrb[0].mxu0 %v1817
        %v1856 = vpop.f32.mrb[0].mxu0
        %v1857 = vadd.f32 0.0, %v1856
        %v1858 = vpop.f32.mrb[0].mxu0
        %v1859 = vpop.f32.mrb[0].mxu0
        %v1860 = vpop.f32.mrb[0].mxu0
        %1861 = vdwg.mxu0
        %v1863 = vsel %vm1258, %v1718, 0
        %v1866 = vsel %vm1726, %v1205, 0
        %1868 = vmatprep.subr.bf16.mxu0 0
        %1869 = vmatpush1.bf16.msra.mxu0 %v1866
        %1870 = vmatprep.subr.bf16.mxu0 0
        %1871 = vmatpush1.bf16.msra.mxu0 0
        %1872 = vmatprep.subr.bf16.mxu0 0
        %1873 = vmatpush1.bf16.msra.mxu0 0
        %1874 = vmatprep.subr.bf16.mxu0 0
        %1875 = vmatpush1.bf16.msra.mxu0 0
        %1876 = vmatprep.subr.bf16.mxu0 0
        %1877 = vmatpush1.bf16.msra.mxu0 0
        %1878 = vmatprep.subr.bf16.mxu0 0
        %1879 = vmatpush1.bf16.msra.mxu0 0
        %1880 = vmatprep.subr.bf16.mxu0 0
        %1881 = vmatpush1.bf16.msra.mxu0 0
        %1882 = vmatprep.subr.bf16.mxu0 0
        %1883 = vmatpush1.bf16.msra.mxu0 0
        %1884 = vmatprep.subr.bf16.mxu0 0
        %1885 = vmatpush1.bf16.msra.mxu0 0
        %1886 = vmatprep.subr.bf16.mxu0 0
        %1887 = vmatpush1.bf16.msra.mxu0 0
        %1888 = vmatprep.subr.bf16.mxu0 0
        %1889 = vmatpush1.bf16.msra.mxu0 0
        %1890 = vmatprep.subr.bf16.mxu0 0
        %1891 = vmatpush1.bf16.msra.mxu0 0
        %1892 = vmatprep.subr.bf16.mxu0 0
        %1893 = vmatpush1.bf16.msra.mxu0 0
        %1894 = vmatprep.subr.bf16.mxu0 0
        %1895 = vmatpush1.bf16.msra.mxu0 0
        %1896 = vmatprep.subr.bf16.mxu0 0
        %1897 = vmatpush1.bf16.msra.mxu0 0
        %1898 = vmatprep.subr.bf16.mxu0 0
        %1899 = vmatpush1.bf16.msra.mxu0 0
        %1900 = vmatprep.mubr.bf16.mxu0 0
        %1901 = vmatmul.mubr.bf16.gmra.mrb[0].mxu0 %v1863
        %v1902 = vpop.f32.mrb[0].mxu0
        %v1903 = vadd.f32 0.0, %v1902
        %v1904 = vpop.f32.mrb[0].mxu0
        %v1905 = vpop.f32.mrb[0].mxu0
        %v1906 = vpop.f32.mrb[0].mxu0
        %1907 = vdwg.mxu0
        %v1909 = vsel %vm1258, %v1719, 0
        %v1912 = vsel %vm1726, %v1206, 0
        %1914 = vmatprep.subr.bf16.mxu0 0
        %1915 = vmatpush1.bf16.msra.mxu0 %v1912
        %1916 = vmatprep.subr.bf16.mxu0 0
        %1917 = vmatpush1.bf16.msra.mxu0 0
        %1918 = vmatprep.subr.bf16.mxu0 0
        %1919 = vmatpush1.bf16.msra.mxu0 0
        %1920 = vmatprep.subr.bf16.mxu0 0
        %1921 = vmatpush1.bf16.msra.mxu0 0
        %1922 = vmatprep.subr.bf16.mxu0 0
        %1923 = vmatpush1.bf16.msra.mxu0 0
        %1924 = vmatprep.subr.bf16.mxu0 0
        %1925 = vmatpush1.bf16.msra.mxu0 0
        %1926 = vmatprep.subr.bf16.mxu0 0
        %1927 = vmatpush1.bf16.msra.mxu0 0
        %1928 = vmatprep.subr.bf16.mxu0 0
        %1929 = vmatpush1.bf16.msra.mxu0 0
        %1930 = vmatprep.subr.bf16.mxu0 0
        %1931 = vmatpush1.bf16.msra.mxu0 0
        %1932 = vmatprep.subr.bf16.mxu0 0
        %1933 = vmatpush1.bf16.msra.mxu0 0
        %1934 = vmatprep.subr.bf16.mxu0 0
        %1935 = vmatpush1.bf16.msra.mxu0 0
        %1936 = vmatprep.subr.bf16.mxu0 0
        %1937 = vmatpush1.bf16.msra.mxu0 0
        %1938 = vmatprep.subr.bf16.mxu0 0
        %1939 = vmatpush1.bf16.msra.mxu0 0
        %1940 = vmatprep.subr.bf16.mxu0 0
        %1941 = vmatpush1.bf16.msra.mxu0 0
        %1942 = vmatprep.subr.bf16.mxu0 0
        %1943 = vmatpush1.bf16.msra.mxu0 0
        %1944 = vmatprep.subr.bf16.mxu0 0
        %1945 = vmatpush1.bf16.msra.mxu0 0
        %1946 = vmatprep.mubr.bf16.mxu0 0
        %1947 = vmatmul.mubr.bf16.gmra.mrb[0].mxu0 %v1909
        %v1948 = vpop.f32.mrb[0].mxu0
        %v1949 = vadd.f32 0.0, %v1948
        %v1950 = vpop.f32.mrb[0].mxu0
        %v1951 = vpop.f32.mrb[0].mxu0
        %v1952 = vpop.f32.mrb[0].mxu0
        %1953 = vdwg.mxu0
        %v1955 = vsel %vm1258, %v1720, 0
        %v1958 = vsel %vm1726, %v1207, 0
        %1960 = vmatprep.subr.bf16.mxu0 0
        %1961 = vmatpush1.bf16.msra.mxu0 %v1958
        %1962 = vmatprep.subr.bf16.mxu0 0
        %1963 = vmatpush1.bf16.msra.mxu0 0
        %1964 = vmatprep.subr.bf16.mxu0 0
        %1965 = vmatpush1.bf16.msra.mxu0 0
        %1966 = vmatprep.subr.bf16.mxu0 0
        %1967 = vmatpush1.bf16.msra.mxu0 0
        %1968 = vmatprep.subr.bf16.mxu0 0
        %1969 = vmatpush1.bf16.msra.mxu0 0
        %1970 = vmatprep.subr.bf16.mxu0 0
        %1971 = vmatpush1.bf16.msra.mxu0 0
        %1972 = vmatprep.subr.bf16.mxu0 0
        %1973 = vmatpush1.bf16.msra.mxu0 0
        %1974 = vmatprep.subr.bf16.mxu0 0
        %1975 = vmatpush1.bf16.msra.mxu0 0
        %1976 = vmatprep.subr.bf16.mxu0 0
        %1977 = vmatpush1.bf16.msra.mxu0 0
        %1978 = vmatprep.subr.bf16.mxu0 0
        %1979 = vmatpush1.bf16.msra.mxu0 0
        %1980 = vmatprep.subr.bf16.mxu0 0
        %1981 = vmatpush1.bf16.msra.mxu0 0
        %1982 = vmatprep.subr.bf16.mxu0 0
        %1983 = vmatpush1.bf16.msra.mxu0 0
        %1984 = vmatprep.subr.bf16.mxu0 0
        %1985 = vmatpush1.bf16.msra.mxu0 0
        %1986 = vmatprep.subr.bf16.mxu0 0
        %1987 = vmatpush1.bf16.msra.mxu0 0
        %1988 = vmatprep.subr.bf16.mxu0 0
        %1989 = vmatpush1.bf16.msra.mxu0 0
        %1990 = vmatprep.subr.bf16.mxu0 0
        %1991 = vmatpush1.bf16.msra.mxu0 0
        %1992 = vmatprep.mubr.bf16.mxu0 0
        %1993 = vmatmul.mubr.bf16.gmra.mrb[0].mxu0 %v1955
        %v1994 = vpop.f32.mrb[0].mxu0
        %v1995 = vadd.f32 0.0, %v1994
        %v1996 = vpop.f32.mrb[0].mxu0
        %v1997 = vpop.f32.mrb[0].mxu0
        %v1998 = vpop.f32.mrb[0].mxu0
        %1999 = vdwg.mxu0
        %v2001 = vsel %vm1258, %v1721, 0
        %v2004 = vsel %vm1726, %v1208, 0
        %2006 = vmatprep.subr.bf16.mxu0 0
        %2007 = vmatpush1.bf16.msra.mxu0 %v2004
        %2008 = vmatprep.subr.bf16.mxu0 0
        %2009 = vmatpush1.bf16.msra.mxu0 0
        %2010 = vmatprep.subr.bf16.mxu0 0
        %2011 = vmatpush1.bf16.msra.mxu0 0
        %2012 = vmatprep.subr.bf16.mxu0 0
        %2013 = vmatpush1.bf16.msra.mxu0 0
        %2014 = vmatprep.subr.bf16.mxu0 0
        %2015 = vmatpush1.bf16.msra.mxu0 0
        %2016 = vmatprep.subr.bf16.mxu0 0
        %2017 = vmatpush1.bf16.msra.mxu0 0
        %2018 = vmatprep.subr.bf16.mxu0 0
        %2019 = vmatpush1.bf16.msra.mxu0 0
        %2020 = vmatprep.subr.bf16.mxu0 0
        %2021 = vmatpush1.bf16.msra.mxu0 0
        %2022 = vmatprep.subr.bf16.mxu0 0
        %2023 = vmatpush1.bf16.msra.mxu0 0
        %2024 = vmatprep.subr.bf16.mxu0 0
        %2025 = vmatpush1.bf16.msra.mxu0 0
        %2026 = vmatprep.subr.bf16.mxu0 0
        %2027 = vmatpush1.bf16.msra.mxu0 0
        %2028 = vmatprep.subr.bf16.mxu0 0
        %2029 = vmatpush1.bf16.msra.mxu0 0
        %2030 = vmatprep.subr.bf16.mxu0 0
        %2031 = vmatpush1.bf16.msra.mxu0 0
        %2032 = vmatprep.subr.bf16.mxu0 0
        %2033 = vmatpush1.bf16.msra.mxu0 0
        %2034 = vmatprep.subr.bf16.mxu0 0
        %2035 = vmatpush1.bf16.msra.mxu0 0
        %2036 = vmatprep.subr.bf16.mxu0 0
        %2037 = vmatpush1.bf16.msra.mxu0 0
        %2038 = vmatprep.mubr.bf16.mxu0 0
        %2039 = vmatmul.mubr.bf16.gmra.mrb[0].mxu0 %v2001
        %v2040 = vpop.f32.mrb[0].mxu0
        %v2041 = vadd.f32 0.0, %v2040
        %v2042 = vpop.f32.mrb[0].mxu0
        %v2043 = vpop.f32.mrb[0].mxu0
        %v2044 = vpop.f32.mrb[0].mxu0
        %2045 = vdwg.mxu0
        %v2047 = vsel %vm1258, %v1722, 0
        %v2050 = vsel %vm1726, %v1209, 0
        %2052 = vmatprep.subr.bf16.mxu0 0
        %2053 = vmatpush1.bf16.msra.mxu0 %v2050
        %2054 = vmatprep.subr.bf16.mxu0 0
        %2055 = vmatpush1.bf16.msra.mxu0 0
        %2056 = vmatprep.subr.bf16.mxu0 0
        %2057 = vmatpush1.bf16.msra.mxu0 0
        %2058 = vmatprep.subr.bf16.mxu0 0
        %2059 = vmatpush1.bf16.msra.mxu0 0
        %2060 = vmatprep.subr.bf16.mxu0 0
        %2061 = vmatpush1.bf16.msra.mxu0 0
        %2062 = vmatprep.subr.bf16.mxu0 0
        %2063 = vmatpush1.bf16.msra.mxu0 0
        %2064 = vmatprep.subr.bf16.mxu0 0
        %2065 = vmatpush1.bf16.msra.mxu0 0
        %2066 = vmatprep.subr.bf16.mxu0 0
        %2067 = vmatpush1.bf16.msra.mxu0 0
        %2068 = vmatprep.subr.bf16.mxu0 0
        %2069 = vmatpush1.bf16.msra.mxu0 0
        %2070 = vmatprep.subr.bf16.mxu0 0
        %2071 = vmatpush1.bf16.msra.mxu0 0
        %2072 = vmatprep.subr.bf16.mxu0 0
        %2073 = vmatpush1.bf16.msra.mxu0 0
        %2074 = vmatprep.subr.bf16.mxu0 0
        %2075 = vmatpush1.bf16.msra.mxu0 0
        %2076 = vmatprep.subr.bf16.mxu0 0
        %2077 = vmatpush1.bf16.msra.mxu0 0
        %2078 = vmatprep.subr.bf16.mxu0 0
        %2079 = vmatpush1.bf16.msra.mxu0 0
        %2080 = vmatprep.subr.bf16.mxu0 0
        %2081 = vmatpush1.bf16.msra.mxu0 0
        %2082 = vmatprep.subr.bf16.mxu0 0
        %2083 = vmatpush1.bf16.msra.mxu0 0
        %2084 = vmatprep.mubr.bf16.mxu0 0
        %2085 = vmatmul.mubr.bf16.gmra.mrb[0].mxu0 %v2047
        %v2086 = vpop.f32.mrb[0].mxu0
        %v2087 = vadd.f32 0.0, %v2086
        %v2088 = vpop.f32.mrb[0].mxu0
        %v2089 = vpop.f32.mrb[0].mxu0
        %v2090 = vpop.f32.mrb[0].mxu0
        %2091 = vdwg.mxu0
        %2092 = vst.msk [vmem:[#allocation3] sm:$0xff] %vm1258, %v1765
        %2093 = vst.msk [vmem:[#allocation3 + $0x8] sm:$0xff] %vm1258, %v1811
        %2094 = vst.msk [vmem:[#allocation3 + $0x10] sm:$0xff] %vm1258, %v1857
        %2095 = vst.msk [vmem:[#allocation3 + $0x18] sm:$0xff] %vm1258, %v1903
        %2096 = vst.msk [vmem:[#allocation3 + $0x20] sm:$0xff] %vm1258, %v1949
        %2097 = vst.msk [vmem:[#allocation3 + $0x28] sm:$0xff] %vm1258, %v1995
        %2098 = vst.msk [vmem:[#allocation3 + $0x30] sm:$0xff] %vm1258, %v2041
        %2099 = vst.msk [vmem:[#allocation3 + $0x38] sm:$0xff] %vm1258, %v2087
        %2101 = vrot.lane.b32.xlu0 %v1186, 120
        %v2102 = vpop.permute.xlu0 %2101
        %2104 = vrot.lane.b32.xlu0 %v1194, 120
        %v2105 = vpop.permute.xlu0 %2104
        %v2107 = vsel %vm1258, %v2102, 0
        %v2110 = vsel %vm1258, %v2105, 0
        %2112 = vmatprep.subr.bf16.mxu0 0
        %2113 = vmatpush1.bf16.xpose.msra.mxu0 %v2110
        %2114 = vmatprep.subr.bf16.mxu0 0
        %2115 = vmatpush1.bf16.xpose.msra.mxu0 0
        %2116 = vmatprep.subr.bf16.mxu0 0
        %2117 = vmatpush1.bf16.xpose.msra.mxu0 0
        %2118 = vmatprep.subr.bf16.mxu0 0
        %2119 = vmatpush1.bf16.xpose.msra.mxu0 0
        %2120 = vmatprep.subr.bf16.mxu0 0
        %2121 = vmatpush1.bf16.xpose.msra.mxu0 0
        %2122 = vmatprep.subr.bf16.mxu0 0
        %2123 = vmatpush1.bf16.xpose.msra.mxu0 0
        %2124 = vmatprep.subr.bf16.mxu0 0
        %2125 = vmatpush1.bf16.xpose.msra.mxu0 0
        %2126 = vmatprep.subr.bf16.mxu0 0
        %2127 = vmatpush1.bf16.xpose.msra.mxu0 0
        %2128 = vmatprep.subr.bf16.mxu0 0
        %2129 = vmatpush1.bf16.xpose.msra.mxu0 0
        %2130 = vmatprep.subr.bf16.mxu0 0
        %2131 = vmatpush1.bf16.xpose.msra.mxu0 0
        %2132 = vmatprep.subr.bf16.mxu0 0
        %2133 = vmatpush1.bf16.xpose.msra.mxu0 0
        %2134 = vmatprep.subr.bf16.mxu0 0
        %2135 = vmatpush1.bf16.xpose.msra.mxu0 0
        %2136 = vmatprep.subr.bf16.mxu0 0
        %2137 = vmatpush1.bf16.xpose.msra.mxu0 0
        %2138 = vmatprep.subr.bf16.mxu0 0
        %2139 = vmatpush1.bf16.xpose.msra.mxu0 0
        %2140 = vmatprep.subr.bf16.mxu0 0
        %2141 = vmatpush1.bf16.xpose.msra.mxu0 0
        %2142 = vmatprep.subr.bf16.mxu0 0
        %2143 = vmatpush1.bf16.xpose.msra.mxu0 0
        %2144 = vmatprep.mubr.bf16.mxu0 0
        %2145 = vmatmul.mubr.bf16.gmra.mrb[0].mxu0 %v2107
        %v2146 = vpop.f32.mrb[0].mxu0
        %v2147 = vadd.f32 %v1221, %v2146
        %v2148 = vpop.f32.mrb[0].mxu0
        %v2149 = vpop.f32.mrb[0].mxu0
        %v2150 = vpop.f32.mrb[0].mxu0
        %2151 = vdwg.mxu0
        %2153 = vrot.lane.b32.xlu0 %v1187, 120
        %v2154 = vpop.permute.xlu0 %2153
        %2156 = vrot.lane.b32.xlu0 %v1195, 120
        %v2157 = vpop.permute.xlu0 %2156
        %v2159 = vsel %vm1258, %v2154, 0
        %v2162 = vsel %vm1258, %v2157, 0
        %2164 = vmatprep.subr.bf16.mxu0 0
        %2165 = vmatpush1.bf16.xpose.msra.mxu0 %v2162
        %2166 = vmatprep.subr.bf16.mxu0 0
        %2167 = vmatpush1.bf16.xpose.msra.mxu0 0
        %2168 = vmatprep.subr.bf16.mxu0 0
        %2169 = vmatpush1.bf16.xpose.msra.mxu0 0
        %2170 = vmatprep.subr.bf16.mxu0 0
        %2171 = vmatpush1.bf16.xpose.msra.mxu0 0
        %2172 = vmatprep.subr.bf16.mxu0 0
        %2173 = vmatpush1.bf16.xpose.msra.mxu0 0
        %2174 = vmatprep.subr.bf16.mxu0 0
        %2175 = vmatpush1.bf16.xpose.msra.mxu0 0
        %2176 = vmatprep.subr.bf16.mxu0 0
        %2177 = vmatpush1.bf16.xpose.msra.mxu0 0
        %2178 = vmatprep.subr.bf16.mxu0 0
        %2179 = vmatpush1.bf16.xpose.msra.mxu0 0
        %2180 = vmatprep.subr.bf16.mxu0 0
        %2181 = vmatpush1.bf16.xpose.msra.mxu0 0
        %2182 = vmatprep.subr.bf16.mxu0 0
        %2183 = vmatpush1.bf16.xpose.msra.mxu0 0
        %2184 = vmatprep.subr.bf16.mxu0 0
        %2185 = vmatpush1.bf16.xpose.msra.mxu0 0
        %2186 = vmatprep.subr.bf16.mxu0 0
        %2187 = vmatpush1.bf16.xpose.msra.mxu0 0
        %2188 = vmatprep.subr.bf16.mxu0 0
        %2189 = vmatpush1.bf16.xpose.msra.mxu0 0
        %2190 = vmatprep.subr.bf16.mxu0 0
        %2191 = vmatpush1.bf16.xpose.msra.mxu0 0
        %2192 = vmatprep.subr.bf16.mxu0 0
        %2193 = vmatpush1.bf16.xpose.msra.mxu0 0
        %2194 = vmatprep.subr.bf16.mxu0 0
        %2195 = vmatpush1.bf16.xpose.msra.mxu0 0
        %2196 = vmatprep.mubr.bf16.mxu0 0
        %2197 = vmatmul.mubr.bf16.gmra.mrb[0].mxu0 %v2159
        %v2198 = vpop.f32.mrb[0].mxu0
        %v2199 = vadd.f32 %v1225, %v2198
        %v2200 = vpop.f32.mrb[0].mxu0
        %v2201 = vpop.f32.mrb[0].mxu0
        %v2202 = vpop.f32.mrb[0].mxu0
        %2203 = vdwg.mxu0
        %2205 = vrot.lane.b32.xlu0 %v1188, 120
        %v2206 = vpop.permute.xlu0 %2205
        %2208 = vrot.lane.b32.xlu0 %v1196, 120
        %v2209 = vpop.permute.xlu0 %2208
        %v2211 = vsel %vm1258, %v2206, 0
        %v2214 = vsel %vm1258, %v2209, 0
        %2216 = vmatprep.subr.bf16.mxu0 0
        %2217 = vmatpush1.bf16.xpose.msra.mxu0 %v2214
        %2218 = vmatprep.subr.bf16.mxu0 0
        %2219 = vmatpush1.bf16.xpose.msra.mxu0 0
        %2220 = vmatprep.subr.bf16.mxu0 0
        %2221 = vmatpush1.bf16.xpose.msra.mxu0 0
        %2222 = vmatprep.subr.bf16.mxu0 0
        %2223 = vmatpush1.bf16.xpose.msra.mxu0 0
        %2224 = vmatprep.subr.bf16.mxu0 0
        %2225 = vmatpush1.bf16.xpose.msra.mxu0 0
        %2226 = vmatprep.subr.bf16.mxu0 0
        %2227 = vmatpush1.bf16.xpose.msra.mxu0 0
        %2228 = vmatprep.subr.bf16.mxu0 0
        %2229 = vmatpush1.bf16.xpose.msra.mxu0 0
        %2230 = vmatprep.subr.bf16.mxu0 0
        %2231 = vmatpush1.bf16.xpose.msra.mxu0 0
        %2232 = vmatprep.subr.bf16.mxu0 0
        %2233 = vmatpush1.bf16.xpose.msra.mxu0 0
        %2234 = vmatprep.subr.bf16.mxu0 0
        %2235 = vmatpush1.bf16.xpose.msra.mxu0 0
        %2236 = vmatprep.subr.bf16.mxu0 0
        %2237 = vmatpush1.bf16.xpose.msra.mxu0 0
        %2238 = vmatprep.subr.bf16.mxu0 0
        %2239 = vmatpush1.bf16.xpose.msra.mxu0 0
        %2240 = vmatprep.subr.bf16.mxu0 0
        %2241 = vmatpush1.bf16.xpose.msra.mxu0 0
        %2242 = vmatprep.subr.bf16.mxu0 0
        %2243 = vmatpush1.bf16.xpose.msra.mxu0 0
        %2244 = vmatprep.subr.bf16.mxu0 0
        %2245 = vmatpush1.bf16.xpose.msra.mxu0 0
        %2246 = vmatprep.subr.bf16.mxu0 0
        %2247 = vmatpush1.bf16.xpose.msra.mxu0 0
        %2248 = vmatprep.mubr.bf16.mxu0 0
        %2249 = vmatmul.mubr.bf16.gmra.mrb[0].mxu0 %v2211
        %v2250 = vpop.f32.mrb[0].mxu0
        %v2251 = vadd.f32 %v1229, %v2250
        %v2252 = vpop.f32.mrb[0].mxu0
        %v2253 = vpop.f32.mrb[0].mxu0
        %v2254 = vpop.f32.mrb[0].mxu0
        %2255 = vdwg.mxu0
        %2257 = vrot.lane.b32.xlu0 %v1189, 120
        %v2258 = vpop.permute.xlu0 %2257
        %2260 = vrot.lane.b32.xlu0 %v1197, 120
        %v2261 = vpop.permute.xlu0 %2260
        %v2263 = vsel %vm1258, %v2258, 0
        %v2266 = vsel %vm1258, %v2261, 0
        %2268 = vmatprep.subr.bf16.mxu0 0
        %2269 = vmatpush1.bf16.xpose.msra.mxu0 %v2266
        %2270 = vmatprep.subr.bf16.mxu0 0
        %2271 = vmatpush1.bf16.xpose.msra.mxu0 0
        %2272 = vmatprep.subr.bf16.mxu0 0
        %2273 = vmatpush1.bf16.xpose.msra.mxu0 0
        %2274 = vmatprep.subr.bf16.mxu0 0
        %2275 = vmatpush1.bf16.xpose.msra.mxu0 0
        %2276 = vmatprep.subr.bf16.mxu0 0
        %2277 = vmatpush1.bf16.xpose.msra.mxu0 0
        %2278 = vmatprep.subr.bf16.mxu0 0
        %2279 = vmatpush1.bf16.xpose.msra.mxu0 0
        %2280 = vmatprep.subr.bf16.mxu0 0
        %2281 = vmatpush1.bf16.xpose.msra.mxu0 0
        %2282 = vmatprep.subr.bf16.mxu0 0
        %2283 = vmatpush1.bf16.xpose.msra.mxu0 0
        %2284 = vmatprep.subr.bf16.mxu0 0
        %2285 = vmatpush1.bf16.xpose.msra.mxu0 0
        %2286 = vmatprep.subr.bf16.mxu0 0
        %2287 = vmatpush1.bf16.xpose.msra.mxu0 0
        %2288 = vmatprep.subr.bf16.mxu0 0
        %2289 = vmatpush1.bf16.xpose.msra.mxu0 0
        %2290 = vmatprep.subr.bf16.mxu0 0
        %2291 = vmatpush1.bf16.xpose.msra.mxu0 0
        %2292 = vmatprep.subr.bf16.mxu0 0
        %2293 = vmatpush1.bf16.xpose.msra.mxu0 0
        %2294 = vmatprep.subr.bf16.mxu0 0
        %2295 = vmatpush1.bf16.xpose.msra.mxu0 0
        %2296 = vmatprep.subr.bf16.mxu0 0
        %2297 = vmatpush1.bf16.xpose.msra.mxu0 0
        %2298 = vmatprep.subr.bf16.mxu0 0
        %2299 = vmatpush1.bf16.xpose.msra.mxu0 0
        %2300 = vmatprep.mubr.bf16.mxu0 0
        %2301 = vmatmul.mubr.bf16.gmra.mrb[0].mxu0 %v2263
        %v2302 = vpop.f32.mrb[0].mxu0
        %v2303 = vadd.f32 %v1233, %v2302
        %v2304 = vpop.f32.mrb[0].mxu0
        %v2305 = vpop.f32.mrb[0].mxu0
        %v2306 = vpop.f32.mrb[0].mxu0
        %2307 = vdwg.mxu0
        %2309 = vrot.lane.b32.xlu0 %v1190, 120
        %v2310 = vpop.permute.xlu0 %2309
        %2312 = vrot.lane.b32.xlu0 %v1198, 120
        %v2313 = vpop.permute.xlu0 %2312
        %v2315 = vsel %vm1258, %v2310, 0
        %v2318 = vsel %vm1258, %v2313, 0
        %2320 = vmatprep.subr.bf16.mxu0 0
        %2321 = vmatpush1.bf16.xpose.msra.mxu0 %v2318
        %2322 = vmatprep.subr.bf16.mxu0 0
        %2323 = vmatpush1.bf16.xpose.msra.mxu0 0
        %2324 = vmatprep.subr.bf16.mxu0 0
        %2325 = vmatpush1.bf16.xpose.msra.mxu0 0
        %2326 = vmatprep.subr.bf16.mxu0 0
        %2327 = vmatpush1.bf16.xpose.msra.mxu0 0
        %2328 = vmatprep.subr.bf16.mxu0 0
        %2329 = vmatpush1.bf16.xpose.msra.mxu0 0
        %2330 = vmatprep.subr.bf16.mxu0 0
        %2331 = vmatpush1.bf16.xpose.msra.mxu0 0
        %2332 = vmatprep.subr.bf16.mxu0 0
        %2333 = vmatpush1.bf16.xpose.msra.mxu0 0
        %2334 = vmatprep.subr.bf16.mxu0 0
        %2335 = vmatpush1.bf16.xpose.msra.mxu0 0
        %2336 = vmatprep.subr.bf16.mxu0 0
        %2337 = vmatpush1.bf16.xpose.msra.mxu0 0
        %2338 = vmatprep.subr.bf16.mxu0 0
        %2339 = vmatpush1.bf16.xpose.msra.mxu0 0
        %2340 = vmatprep.subr.bf16.mxu0 0
        %2341 = vmatpush1.bf16.xpose.msra.mxu0 0
        %2342 = vmatprep.subr.bf16.mxu0 0
        %2343 = vmatpush1.bf16.xpose.msra.mxu0 0
        %2344 = vmatprep.subr.bf16.mxu0 0
        %2345 = vmatpush1.bf16.xpose.msra.mxu0 0
        %2346 = vmatprep.subr.bf16.mxu0 0
        %2347 = vmatpush1.bf16.xpose.msra.mxu0 0
        %2348 = vmatprep.subr.bf16.mxu0 0
        %2349 = vmatpush1.bf16.xpose.msra.mxu0 0
        %2350 = vmatprep.subr.bf16.mxu0 0
        %2351 = vmatpush1.bf16.xpose.msra.mxu0 0
        %2352 = vmatprep.mubr.bf16.mxu0 0
        %2353 = vmatmul.mubr.bf16.gmra.mrb[0].mxu0 %v2315
        %v2354 = vpop.f32.mrb[0].mxu0
        %v2355 = vadd.f32 %v1237, %v2354
        %v2356 = vpop.f32.mrb[0].mxu0
        %v2357 = vpop.f32.mrb[0].mxu0
        %v2358 = vpop.f32.mrb[0].mxu0
        %2359 = vdwg.mxu0
        %2361 = vrot.lane.b32.xlu0 %v1191, 120
        %v2362 = vpop.permute.xlu0 %2361
        %2364 = vrot.lane.b32.xlu0 %v1199, 120
        %v2365 = vpop.permute.xlu0 %2364
        %v2367 = vsel %vm1258, %v2362, 0
        %v2370 = vsel %vm1258, %v2365, 0
        %2372 = vmatprep.subr.bf16.mxu0 0
        %2373 = vmatpush1.bf16.xpose.msra.mxu0 %v2370
        %2374 = vmatprep.subr.bf16.mxu0 0
        %2375 = vmatpush1.bf16.xpose.msra.mxu0 0
        %2376 = vmatprep.subr.bf16.mxu0 0
        %2377 = vmatpush1.bf16.xpose.msra.mxu0 0
        %2378 = vmatprep.subr.bf16.mxu0 0
        %2379 = vmatpush1.bf16.xpose.msra.mxu0 0
        %2380 = vmatprep.subr.bf16.mxu0 0
        %2381 = vmatpush1.bf16.xpose.msra.mxu0 0
        %2382 = vmatprep.subr.bf16.mxu0 0
        %2383 = vmatpush1.bf16.xpose.msra.mxu0 0
        %2384 = vmatprep.subr.bf16.mxu0 0
        %2385 = vmatpush1.bf16.xpose.msra.mxu0 0
        %2386 = vmatprep.subr.bf16.mxu0 0
        %2387 = vmatpush1.bf16.xpose.msra.mxu0 0
        %2388 = vmatprep.subr.bf16.mxu0 0
        %2389 = vmatpush1.bf16.xpose.msra.mxu0 0
        %2390 = vmatprep.subr.bf16.mxu0 0
        %2391 = vmatpush1.bf16.xpose.msra.mxu0 0
        %2392 = vmatprep.subr.bf16.mxu0 0
        %2393 = vmatpush1.bf16.xpose.msra.mxu0 0
        %2394 = vmatprep.subr.bf16.mxu0 0
        %2395 = vmatpush1.bf16.xpose.msra.mxu0 0
        %2396 = vmatprep.subr.bf16.mxu0 0
        %2397 = vmatpush1.bf16.xpose.msra.mxu0 0
        %2398 = vmatprep.subr.bf16.mxu0 0
        %2399 = vmatpush1.bf16.xpose.msra.mxu0 0
        %2400 = vmatprep.subr.bf16.mxu0 0
        %2401 = vmatpush1.bf16.xpose.msra.mxu0 0
        %2402 = vmatprep.subr.bf16.mxu0 0
        %2403 = vmatpush1.bf16.xpose.msra.mxu0 0
        %2404 = vmatprep.mubr.bf16.mxu0 0
        %2405 = vmatmul.mubr.bf16.gmra.mrb[0].mxu0 %v2367
        %v2406 = vpop.f32.mrb[0].mxu0
        %v2407 = vadd.f32 %v1241, %v2406
        %v2408 = vpop.f32.mrb[0].mxu0
        %v2409 = vpop.f32.mrb[0].mxu0
        %v2410 = vpop.f32.mrb[0].mxu0
        %2411 = vdwg.mxu0
        %2413 = vrot.lane.b32.xlu0 %v1192, 120
        %v2414 = vpop.permute.xlu0 %2413
        %2416 = vrot.lane.b32.xlu0 %v1200, 120
        %v2417 = vpop.permute.xlu0 %2416
        %v2419 = vsel %vm1258, %v2414, 0
        %v2422 = vsel %vm1258, %v2417, 0
        %2424 = vmatprep.subr.bf16.mxu0 0
        %2425 = vmatpush1.bf16.xpose.msra.mxu0 %v2422
        %2426 = vmatprep.subr.bf16.mxu0 0
        %2427 = vmatpush1.bf16.xpose.msra.mxu0 0
        %2428 = vmatprep.subr.bf16.mxu0 0
        %2429 = vmatpush1.bf16.xpose.msra.mxu0 0
        %2430 = vmatprep.subr.bf16.mxu0 0
        %2431 = vmatpush1.bf16.xpose.msra.mxu0 0
        %2432 = vmatprep.subr.bf16.mxu0 0
        %2433 = vmatpush1.bf16.xpose.msra.mxu0 0
        %2434 = vmatprep.subr.bf16.mxu0 0
        %2435 = vmatpush1.bf16.xpose.msra.mxu0 0
        %2436 = vmatprep.subr.bf16.mxu0 0
        %2437 = vmatpush1.bf16.xpose.msra.mxu0 0
        %2438 = vmatprep.subr.bf16.mxu0 0
        %2439 = vmatpush1.bf16.xpose.msra.mxu0 0
        %2440 = vmatprep.subr.bf16.mxu0 0
        %2441 = vmatpush1.bf16.xpose.msra.mxu0 0
        %2442 = vmatprep.subr.bf16.mxu0 0
        %2443 = vmatpush1.bf16.xpose.msra.mxu0 0
        %2444 = vmatprep.subr.bf16.mxu0 0
        %2445 = vmatpush1.bf16.xpose.msra.mxu0 0
        %2446 = vmatprep.subr.bf16.mxu0 0
        %2447 = vmatpush1.bf16.xpose.msra.mxu0 0
        %2448 = vmatprep.subr.bf16.mxu0 0
        %2449 = vmatpush1.bf16.xpose.msra.mxu0 0
        %2450 = vmatprep.subr.bf16.mxu0 0
        %2451 = vmatpush1.bf16.xpose.msra.mxu0 0
        %2452 = vmatprep.subr.bf16.mxu0 0
        %2453 = vmatpush1.bf16.xpose.msra.mxu0 0
        %2454 = vmatprep.subr.bf16.mxu0 0
        %2455 = vmatpush1.bf16.xpose.msra.mxu0 0
        %2456 = vmatprep.mubr.bf16.mxu0 0
        %2457 = vmatmul.mubr.bf16.gmra.mrb[0].mxu0 %v2419
        %v2458 = vpop.f32.mrb[0].mxu0
        %v2459 = vadd.f32 %v1245, %v2458
        %v2460 = vpop.f32.mrb[0].mxu0
        %v2461 = vpop.f32.mrb[0].mxu0
        %v2462 = vpop.f32.mrb[0].mxu0
        %2463 = vdwg.mxu0
        %2465 = vrot.lane.b32.xlu0 %v1193, 120
        %v2466 = vpop.permute.xlu0 %2465
        %2468 = vrot.lane.b32.xlu0 %v1201, 120
        %v2469 = vpop.permute.xlu0 %2468
        %v2471 = vsel %vm1258, %v2466, 0
        %v2474 = vsel %vm1258, %v2469, 0
        %2476 = vmatprep.subr.bf16.mxu0 0
        %2477 = vmatpush1.bf16.xpose.msra.mxu0 %v2474
        %2478 = vmatprep.subr.bf16.mxu0 0
        %2479 = vmatpush1.bf16.xpose.msra.mxu0 0
        %2480 = vmatprep.subr.bf16.mxu0 0
        %2481 = vmatpush1.bf16.xpose.msra.mxu0 0
        %2482 = vmatprep.subr.bf16.mxu0 0
        %2483 = vmatpush1.bf16.xpose.msra.mxu0 0
        %2484 = vmatprep.subr.bf16.mxu0 0
        %2485 = vmatpush1.bf16.xpose.msra.mxu0 0
        %2486 = vmatprep.subr.bf16.mxu0 0
        %2487 = vmatpush1.bf16.xpose.msra.mxu0 0
        %2488 = vmatprep.subr.bf16.mxu0 0
        %2489 = vmatpush1.bf16.xpose.msra.mxu0 0
        %2490 = vmatprep.subr.bf16.mxu0 0
        %2491 = vmatpush1.bf16.xpose.msra.mxu0 0
        %2492 = vmatprep.subr.bf16.mxu0 0
        %2493 = vmatpush1.bf16.xpose.msra.mxu0 0
        %2494 = vmatprep.subr.bf16.mxu0 0
        %2495 = vmatpush1.bf16.xpose.msra.mxu0 0
        %2496 = vmatprep.subr.bf16.mxu0 0
        %2497 = vmatpush1.bf16.xpose.msra.mxu0 0
        %2498 = vmatprep.subr.bf16.mxu0 0
        %2499 = vmatpush1.bf16.xpose.msra.mxu0 0
        %2500 = vmatprep.subr.bf16.mxu0 0
        %2501 = vmatpush1.bf16.xpose.msra.mxu0 0
        %2502 = vmatprep.subr.bf16.mxu0 0
        %2503 = vmatpush1.bf16.xpose.msra.mxu0 0
        %2504 = vmatprep.subr.bf16.mxu0 0
        %2505 = vmatpush1.bf16.xpose.msra.mxu0 0
        %2506 = vmatprep.subr.bf16.mxu0 0
        %2507 = vmatpush1.bf16.xpose.msra.mxu0 0
        %2508 = vmatprep.mubr.bf16.mxu0 0
        %2509 = vmatmul.mubr.bf16.gmra.mrb[0].mxu0 %v2471
        %v2510 = vpop.f32.mrb[0].mxu0
        %v2511 = vadd.f32 %v1249, %v2510
        %v2512 = vpop.f32.mrb[0].mxu0
        %v2513 = vpop.f32.mrb[0].mxu0
        %v2514 = vpop.f32.mrb[0].mxu0
        %2515 = vdwg.mxu0
        %v2516 = vsel %vm1258, %v2147, -inf
        %2517 = vmax.xlane.f32.xlu0 %v2516
        %v2518 = vpop.xlane.xlu0 %2517
        %v2519 = vsel %vm1258, %v2199, -inf
        %2520 = vmax.xlane.f32.xlu0 %v2519
        %v2521 = vpop.xlane.xlu0 %2520
        %v2522 = vsel %vm1258, %v2251, -inf
        %2523 = vmax.xlane.f32.xlu0 %v2522
        %v2524 = vpop.xlane.xlu0 %2523
        %v2525 = vsel %vm1258, %v2303, -inf
        %2526 = vmax.xlane.f32.xlu0 %v2525
        %v2527 = vpop.xlane.xlu0 %2526
        %v2528 = vsel %vm1258, %v2355, -inf
        %2529 = vmax.xlane.f32.xlu0 %v2528
        %v2530 = vpop.xlane.xlu0 %2529
        %v2531 = vsel %vm1258, %v2407, -inf
        %2532 = vmax.xlane.f32.xlu0 %v2531
        %v2533 = vpop.xlane.xlu0 %2532
        %v2534 = vsel %vm1258, %v2459, -inf
        %2535 = vmax.xlane.f32.xlu0 %v2534
        %v2536 = vpop.xlane.xlu0 %2535
        %v2537 = vsel %vm1258, %v2511, -inf
        %2538 = vmax.xlane.f32.xlu0 %v2537
        %v2539 = vpop.xlane.xlu0 %2538
        %v2540 = vsub.f32 %v2147, %v2518
        %v2541 = vsub.f32 %v2199, %v2521
        %v2542 = vsub.f32 %v2251, %v2524
        %v2543 = vsub.f32 %v2303, %v2527
        %v2544 = vsub.f32 %v2355, %v2530
        %v2545 = vsub.f32 %v2407, %v2533
        %v2546 = vsub.f32 %v2459, %v2536
        %v2547 = vsub.f32 %v2511, %v2539
        %v2548 = vmul.f32 %v2540, 1.442695
        %v2549 = vpow.pop %v2548
        %v2550 = vmul.f32 %v2541, 1.442695
        %v2551 = vpow.pop %v2550
        %v2552 = vmul.f32 %v2542, 1.442695
        %v2553 = vpow.pop %v2552
        %v2554 = vmul.f32 %v2543, 1.442695
        %v2555 = vpow.pop %v2554
        %v2556 = vmul.f32 %v2544, 1.442695
        %v2557 = vpow.pop %v2556
        %v2558 = vmul.f32 %v2545, 1.442695
        %v2559 = vpow.pop %v2558
        %v2560 = vmul.f32 %v2546, 1.442695
        %v2561 = vpow.pop %v2560
        %v2562 = vmul.f32 %v2547, 1.442695
        %v2563 = vpow.pop %v2562
        %v2564 = vsel %vm1258, %v2549, 0.0
        %2565 = vadd.xlane.f32.xlu0 %v2564
        %v2566 = vpop.xlane.xlu0 %2565
        %v2567 = vsel %vm1258, %v2551, 0.0
        %2568 = vadd.xlane.f32.xlu0 %v2567
        %v2569 = vpop.xlane.xlu0 %2568
        %v2570 = vsel %vm1258, %v2553, 0.0
        %2571 = vadd.xlane.f32.xlu0 %v2570
        %v2572 = vpop.xlane.xlu0 %2571
        %v2573 = vsel %vm1258, %v2555, 0.0
        %2574 = vadd.xlane.f32.xlu0 %v2573
        %v2575 = vpop.xlane.xlu0 %2574
        %v2576 = vsel %vm1258, %v2557, 0.0
        %2577 = vadd.xlane.f32.xlu0 %v2576
        %v2578 = vpop.xlane.xlu0 %2577
        %v2579 = vsel %vm1258, %v2559, 0.0
        %2580 = vadd.xlane.f32.xlu0 %v2579
        %v2581 = vpop.xlane.xlu0 %2580
        %v2582 = vsel %vm1258, %v2561, 0.0
        %2583 = vadd.xlane.f32.xlu0 %v2582
        %v2584 = vpop.xlane.xlu0 %2583
        %v2585 = vsel %vm1258, %v2563, 0.0
        %2586 = vadd.xlane.f32.xlu0 %v2585
        %v2587 = vpop.xlane.xlu0 %2586
        %v2588 = vrcp.pop %v2566
        %v2589 = vrcp.pop %v2569
        %v2590 = vrcp.pop %v2572
        %v2591 = vrcp.pop %v2575
        %v2592 = vrcp.pop %v2578
        %v2593 = vrcp.pop %v2581
        %v2594 = vrcp.pop %v2584
        %v2595 = vrcp.pop %v2587
        %v2596 = vmul.f32 %v2549, %v2588
        %v2597 = vmul.f32 %v2551, %v2589
        %v2598 = vmul.f32 %v2553, %v2590
        %v2599 = vmul.f32 %v2555, %v2591
        %v2600 = vmul.f32 %v2557, %v2592
        %v2601 = vmul.f32 %v2559, %v2593
        %v2602 = vmul.f32 %v2561, %v2594
        %v2603 = vmul.f32 %v2563, %v2595
        %v2604 = vpack.c.bf16 %v2596, %v2596
        %v2605 = vpack.c.bf16 %v2597, %v2597
        %v2606 = vpack.c.bf16 %v2598, %v2598
        %v2607 = vpack.c.bf16 %v2599, %v2599
        %v2608 = vpack.c.bf16 %v2600, %v2600
        %v2609 = vpack.c.bf16 %v2601, %v2601
        %v2610 = vpack.c.bf16 %v2602, %v2602
        %v2611 = vpack.c.bf16 %v2603, %v2603
        %2613 = vrot.lane.b32.xlu0 %v1202, 120
        %v2614 = vpop.permute.xlu0 %2613
        %v2616 = vsel %vm1258, %v2604, 0
        %v2619 = vsel %vm1726, %v2614, 0
        %2621 = vmatprep.subr.bf16.mxu0 0
        %2622 = vmatpush1.bf16.msra.mxu0 %v2619
        %2623 = vmatprep.subr.bf16.mxu0 0
        %2624 = vmatpush1.bf16.msra.mxu0 0
        %2625 = vmatprep.subr.bf16.mxu0 0
        %2626 = vmatpush1.bf16.msra.mxu0 0
        %2627 = vmatprep.subr.bf16.mxu0 0
        %2628 = vmatpush1.bf16.msra.mxu0 0
        %2629 = vmatprep.subr.bf16.mxu0 0
        %2630 = vmatpush1.bf16.msra.mxu0 0
        %2631 = vmatprep.subr.bf16.mxu0 0
        %2632 = vmatpush1.bf16.msra.mxu0 0
        %2633 = vmatprep.subr.bf16.mxu0 0
        %2634 = vmatpush1.bf16.msra.mxu0 0
        %2635 = vmatprep.subr.bf16.mxu0 0
        %2636 = vmatpush1.bf16.msra.mxu0 0
        %2637 = vmatprep.subr.bf16.mxu0 0
        %2638 = vmatpush1.bf16.msra.mxu0 0
        %2639 = vmatprep.subr.bf16.mxu0 0
        %2640 = vmatpush1.bf16.msra.mxu0 0
        %2641 = vmatprep.subr.bf16.mxu0 0
        %2642 = vmatpush1.bf16.msra.mxu0 0
        %2643 = vmatprep.subr.bf16.mxu0 0
        %2644 = vmatpush1.bf16.msra.mxu0 0
        %2645 = vmatprep.subr.bf16.mxu0 0
        %2646 = vmatpush1.bf16.msra.mxu0 0
        %2647 = vmatprep.subr.bf16.mxu0 0
        %2648 = vmatpush1.bf16.msra.mxu0 0
        %2649 = vmatprep.subr.bf16.mxu0 0
        %2650 = vmatpush1.bf16.msra.mxu0 0
        %2651 = vmatprep.subr.bf16.mxu0 0
        %2652 = vmatpush1.bf16.msra.mxu0 0
        %2653 = vmatprep.mubr.bf16.mxu0 0
        %2654 = vmatmul.mubr.bf16.gmra.mrb[0].mxu0 %v2616
        %v2655 = vpop.f32.mrb[0].mxu0
        %v2656 = vadd.f32 0.0, %v2655
        %v2657 = vpop.f32.mrb[0].mxu0
        %v2658 = vpop.f32.mrb[0].mxu0
        %v2659 = vpop.f32.mrb[0].mxu0
        %2660 = vdwg.mxu0
        %2662 = vrot.lane.b32.xlu0 %v1203, 120
        %v2663 = vpop.permute.xlu0 %2662
        %v2665 = vsel %vm1258, %v2605, 0
        %v2668 = vsel %vm1726, %v2663, 0
        %2670 = vmatprep.subr.bf16.mxu0 0
        %2671 = vmatpush1.bf16.msra.mxu0 %v2668
        %2672 = vmatprep.subr.bf16.mxu0 0
        %2673 = vmatpush1.bf16.msra.mxu0 0
        %2674 = vmatprep.subr.bf16.mxu0 0
        %2675 = vmatpush1.bf16.msra.mxu0 0
        %2676 = vmatprep.subr.bf16.mxu0 0
        %2677 = vmatpush1.bf16.msra.mxu0 0
        %2678 = vmatprep.subr.bf16.mxu0 0
        %2679 = vmatpush1.bf16.msra.mxu0 0
        %2680 = vmatprep.subr.bf16.mxu0 0
        %2681 = vmatpush1.bf16.msra.mxu0 0
        %2682 = vmatprep.subr.bf16.mxu0 0
        %2683 = vmatpush1.bf16.msra.mxu0 0
        %2684 = vmatprep.subr.bf16.mxu0 0
        %2685 = vmatpush1.bf16.msra.mxu0 0
        %2686 = vmatprep.subr.bf16.mxu0 0
        %2687 = vmatpush1.bf16.msra.mxu0 0
        %2688 = vmatprep.subr.bf16.mxu0 0
        %2689 = vmatpush1.bf16.msra.mxu0 0
        %2690 = vmatprep.subr.bf16.mxu0 0
        %2691 = vmatpush1.bf16.msra.mxu0 0
        %2692 = vmatprep.subr.bf16.mxu0 0
        %2693 = vmatpush1.bf16.msra.mxu0 0
        %2694 = vmatprep.subr.bf16.mxu0 0
        %2695 = vmatpush1.bf16.msra.mxu0 0
        %2696 = vmatprep.subr.bf16.mxu0 0
        %2697 = vmatpush1.bf16.msra.mxu0 0
        %2698 = vmatprep.subr.bf16.mxu0 0
        %2699 = vmatpush1.bf16.msra.mxu0 0
        %2700 = vmatprep.subr.bf16.mxu0 0
        %2701 = vmatpush1.bf16.msra.mxu0 0
        %2702 = vmatprep.mubr.bf16.mxu0 0
        %2703 = vmatmul.mubr.bf16.gmra.mrb[0].mxu0 %v2665
        %v2704 = vpop.f32.mrb[0].mxu0
        %v2705 = vadd.f32 0.0, %v2704
        %v2706 = vpop.f32.mrb[0].mxu0
        %v2707 = vpop.f32.mrb[0].mxu0
        %v2708 = vpop.f32.mrb[0].mxu0
        %2709 = vdwg.mxu0
        %2711 = vrot.lane.b32.xlu0 %v1204, 120
        %v2712 = vpop.permute.xlu0 %2711
        %v2714 = vsel %vm1258, %v2606, 0
        %v2717 = vsel %vm1726, %v2712, 0
        %2719 = vmatprep.subr.bf16.mxu0 0
        %2720 = vmatpush1.bf16.msra.mxu0 %v2717
        %2721 = vmatprep.subr.bf16.mxu0 0
        %2722 = vmatpush1.bf16.msra.mxu0 0
        %2723 = vmatprep.subr.bf16.mxu0 0
        %2724 = vmatpush1.bf16.msra.mxu0 0
        %2725 = vmatprep.subr.bf16.mxu0 0
        %2726 = vmatpush1.bf16.msra.mxu0 0
        %2727 = vmatprep.subr.bf16.mxu0 0
        %2728 = vmatpush1.bf16.msra.mxu0 0
        %2729 = vmatprep.subr.bf16.mxu0 0
        %2730 = vmatpush1.bf16.msra.mxu0 0
        %2731 = vmatprep.subr.bf16.mxu0 0
        %2732 = vmatpush1.bf16.msra.mxu0 0
        %2733 = vmatprep.subr.bf16.mxu0 0
        %2734 = vmatpush1.bf16.msra.mxu0 0
        %2735 = vmatprep.subr.bf16.mxu0 0
        %2736 = vmatpush1.bf16.msra.mxu0 0
        %2737 = vmatprep.subr.bf16.mxu0 0
        %2738 = vmatpush1.bf16.msra.mxu0 0
        %2739 = vmatprep.subr.bf16.mxu0 0
        %2740 = vmatpush1.bf16.msra.mxu0 0
        %2741 = vmatprep.subr.bf16.mxu0 0
        %2742 = vmatpush1.bf16.msra.mxu0 0
        %2743 = vmatprep.subr.bf16.mxu0 0
        %2744 = vmatpush1.bf16.msra.mxu0 0
        %2745 = vmatprep.subr.bf16.mxu0 0
        %2746 = vmatpush1.bf16.msra.mxu0 0
        %2747 = vmatprep.subr.bf16.mxu0 0
        %2748 = vmatpush1.bf16.msra.mxu0 0
        %2749 = vmatprep.subr.bf16.mxu0 0
        %2750 = vmatpush1.bf16.msra.mxu0 0
        %2751 = vmatprep.mubr.bf16.mxu0 0
        %2752 = vmatmul.mubr.bf16.gmra.mrb[0].mxu0 %v2714
        %v2753 = vpop.f32.mrb[0].mxu0
        %v2754 = vadd.f32 0.0, %v2753
        %v2755 = vpop.f32.mrb[0].mxu0
        %v2756 = vpop.f32.mrb[0].mxu0
        %v2757 = vpop.f32.mrb[0].mxu0
        %2758 = vdwg.mxu0
        %2760 = vrot.lane.b32.xlu0 %v1205, 120
        %v2761 = vpop.permute.xlu0 %2760
        %v2763 = vsel %vm1258, %v2607, 0
        %v2766 = vsel %vm1726, %v2761, 0
        %2768 = vmatprep.subr.bf16.mxu0 0
        %2769 = vmatpush1.bf16.msra.mxu0 %v2766
        %2770 = vmatprep.subr.bf16.mxu0 0
        %2771 = vmatpush1.bf16.msra.mxu0 0
        %2772 = vmatprep.subr.bf16.mxu0 0
        %2773 = vmatpush1.bf16.msra.mxu0 0
        %2774 = vmatprep.subr.bf16.mxu0 0
        %2775 = vmatpush1.bf16.msra.mxu0 0
        %2776 = vmatprep.subr.bf16.mxu0 0
        %2777 = vmatpush1.bf16.msra.mxu0 0
        %2778 = vmatprep.subr.bf16.mxu0 0
        %2779 = vmatpush1.bf16.msra.mxu0 0
        %2780 = vmatprep.subr.bf16.mxu0 0
        %2781 = vmatpush1.bf16.msra.mxu0 0
        %2782 = vmatprep.subr.bf16.mxu0 0
        %2783 = vmatpush1.bf16.msra.mxu0 0
        %2784 = vmatprep.subr.bf16.mxu0 0
        %2785 = vmatpush1.bf16.msra.mxu0 0
        %2786 = vmatprep.subr.bf16.mxu0 0
        %2787 = vmatpush1.bf16.msra.mxu0 0
        %2788 = vmatprep.subr.bf16.mxu0 0
        %2789 = vmatpush1.bf16.msra.mxu0 0
        %2790 = vmatprep.subr.bf16.mxu0 0
        %2791 = vmatpush1.bf16.msra.mxu0 0
        %2792 = vmatprep.subr.bf16.mxu0 0
        %2793 = vmatpush1.bf16.msra.mxu0 0
        %2794 = vmatprep.subr.bf16.mxu0 0
        %2795 = vmatpush1.bf16.msra.mxu0 0
        %2796 = vmatprep.subr.bf16.mxu0 0
        %2797 = vmatpush1.bf16.msra.mxu0 0
        %2798 = vmatprep.subr.bf16.mxu0 0
        %2799 = vmatpush1.bf16.msra.mxu0 0
        %2800 = vmatprep.mubr.bf16.mxu0 0
        %2801 = vmatmul.mubr.bf16.gmra.mrb[0].mxu0 %v2763
        %v2802 = vpop.f32.mrb[0].mxu0
        %v2803 = vadd.f32 0.0, %v2802
        %v2804 = vpop.f32.mrb[0].mxu0
        %v2805 = vpop.f32.mrb[0].mxu0
        %v2806 = vpop.f32.mrb[0].mxu0
        %2807 = vdwg.mxu0
        %2809 = vrot.lane.b32.xlu0 %v1206, 120
        %v2810 = vpop.permute.xlu0 %2809
        %v2812 = vsel %vm1258, %v2608, 0
        %v2815 = vsel %vm1726, %v2810, 0
        %2817 = vmatprep.subr.bf16.mxu0 0
        %2818 = vmatpush1.bf16.msra.mxu0 %v2815
        %2819 = vmatprep.subr.bf16.mxu0 0
        %2820 = vmatpush1.bf16.msra.mxu0 0
        %2821 = vmatprep.subr.bf16.mxu0 0
        %2822 = vmatpush1.bf16.msra.mxu0 0
        %2823 = vmatprep.subr.bf16.mxu0 0
        %2824 = vmatpush1.bf16.msra.mxu0 0
        %2825 = vmatprep.subr.bf16.mxu0 0
        %2826 = vmatpush1.bf16.msra.mxu0 0
        %2827 = vmatprep.subr.bf16.mxu0 0
        %2828 = vmatpush1.bf16.msra.mxu0 0
        %2829 = vmatprep.subr.bf16.mxu0 0
        %2830 = vmatpush1.bf16.msra.mxu0 0
        %2831 = vmatprep.subr.bf16.mxu0 0
        %2832 = vmatpush1.bf16.msra.mxu0 0
        %2833 = vmatprep.subr.bf16.mxu0 0
        %2834 = vmatpush1.bf16.msra.mxu0 0
        %2835 = vmatprep.subr.bf16.mxu0 0
        %2836 = vmatpush1.bf16.msra.mxu0 0
        %2837 = vmatprep.subr.bf16.mxu0 0
        %2838 = vmatpush1.bf16.msra.mxu0 0
        %2839 = vmatprep.subr.bf16.mxu0 0
        %2840 = vmatpush1.bf16.msra.mxu0 0
        %2841 = vmatprep.subr.bf16.mxu0 0
        %2842 = vmatpush1.bf16.msra.mxu0 0
        %2843 = vmatprep.subr.bf16.mxu0 0
        %2844 = vmatpush1.bf16.msra.mxu0 0
        %2845 = vmatprep.subr.bf16.mxu0 0
        %2846 = vmatpush1.bf16.msra.mxu0 0
        %2847 = vmatprep.subr.bf16.mxu0 0
        %2848 = vmatpush1.bf16.msra.mxu0 0
        %2849 = vmatprep.mubr.bf16.mxu0 0
        %2850 = vmatmul.mubr.bf16.gmra.mrb[0].mxu0 %v2812
        %v2851 = vpop.f32.mrb[0].mxu0
        %v2852 = vadd.f32 0.0, %v2851
        %v2853 = vpop.f32.mrb[0].mxu0
        %v2854 = vpop.f32.mrb[0].mxu0
        %v2855 = vpop.f32.mrb[0].mxu0
        %2856 = vdwg.mxu0
        %2858 = vrot.lane.b32.xlu0 %v1207, 120
        %v2859 = vpop.permute.xlu0 %2858
        %v2861 = vsel %vm1258, %v2609, 0
        %v2864 = vsel %vm1726, %v2859, 0
        %2866 = vmatprep.subr.bf16.mxu0 0
        %2867 = vmatpush1.bf16.msra.mxu0 %v2864
        %2868 = vmatprep.subr.bf16.mxu0 0
        %2869 = vmatpush1.bf16.msra.mxu0 0
        %2870 = vmatprep.subr.bf16.mxu0 0
        %2871 = vmatpush1.bf16.msra.mxu0 0
        %2872 = vmatprep.subr.bf16.mxu0 0
        %2873 = vmatpush1.bf16.msra.mxu0 0
        %2874 = vmatprep.subr.bf16.mxu0 0
        %2875 = vmatpush1.bf16.msra.mxu0 0
        %2876 = vmatprep.subr.bf16.mxu0 0
        %2877 = vmatpush1.bf16.msra.mxu0 0
        %2878 = vmatprep.subr.bf16.mxu0 0
        %2879 = vmatpush1.bf16.msra.mxu0 0
        %2880 = vmatprep.subr.bf16.mxu0 0
        %2881 = vmatpush1.bf16.msra.mxu0 0
        %2882 = vmatprep.subr.bf16.mxu0 0
        %2883 = vmatpush1.bf16.msra.mxu0 0
        %2884 = vmatprep.subr.bf16.mxu0 0
        %2885 = vmatpush1.bf16.msra.mxu0 0
        %2886 = vmatprep.subr.bf16.mxu0 0
        %2887 = vmatpush1.bf16.msra.mxu0 0
        %2888 = vmatprep.subr.bf16.mxu0 0
        %2889 = vmatpush1.bf16.msra.mxu0 0
        %2890 = vmatprep.subr.bf16.mxu0 0
        %2891 = vmatpush1.bf16.msra.mxu0 0
        %2892 = vmatprep.subr.bf16.mxu0 0
        %2893 = vmatpush1.bf16.msra.mxu0 0
        %2894 = vmatprep.subr.bf16.mxu0 0
        %2895 = vmatpush1.bf16.msra.mxu0 0
        %2896 = vmatprep.subr.bf16.mxu0 0
        %2897 = vmatpush1.bf16.msra.mxu0 0
        %2898 = vmatprep.mubr.bf16.mxu0 0
        %2899 = vmatmul.mubr.bf16.gmra.mrb[0].mxu0 %v2861
        %v2900 = vpop.f32.mrb[0].mxu0
        %v2901 = vadd.f32 0.0, %v2900
        %v2902 = vpop.f32.mrb[0].mxu0
        %v2903 = vpop.f32.mrb[0].mxu0
        %v2904 = vpop.f32.mrb[0].mxu0
        %2905 = vdwg.mxu0
        %2907 = vrot.lane.b32.xlu0 %v1208, 120
        %v2908 = vpop.permute.xlu0 %2907
        %v2910 = vsel %vm1258, %v2610, 0
        %v2913 = vsel %vm1726, %v2908, 0
        %2915 = vmatprep.subr.bf16.mxu0 0
        %2916 = vmatpush1.bf16.msra.mxu0 %v2913
        %2917 = vmatprep.subr.bf16.mxu0 0
        %2918 = vmatpush1.bf16.msra.mxu0 0
        %2919 = vmatprep.subr.bf16.mxu0 0
        %2920 = vmatpush1.bf16.msra.mxu0 0
        %2921 = vmatprep.subr.bf16.mxu0 0
        %2922 = vmatpush1.bf16.msra.mxu0 0
        %2923 = vmatprep.subr.bf16.mxu0 0
        %2924 = vmatpush1.bf16.msra.mxu0 0
        %2925 = vmatprep.subr.bf16.mxu0 0
        %2926 = vmatpush1.bf16.msra.mxu0 0
        %2927 = vmatprep.subr.bf16.mxu0 0
        %2928 = vmatpush1.bf16.msra.mxu0 0
        %2929 = vmatprep.subr.bf16.mxu0 0
        %2930 = vmatpush1.bf16.msra.mxu0 0
        %2931 = vmatprep.subr.bf16.mxu0 0
        %2932 = vmatpush1.bf16.msra.mxu0 0
        %2933 = vmatprep.subr.bf16.mxu0 0
        %2934 = vmatpush1.bf16.msra.mxu0 0
        %2935 = vmatprep.subr.bf16.mxu0 0
        %2936 = vmatpush1.bf16.msra.mxu0 0
        %2937 = vmatprep.subr.bf16.mxu0 0
        %2938 = vmatpush1.bf16.msra.mxu0 0
        %2939 = vmatprep.subr.bf16.mxu0 0
        %2940 = vmatpush1.bf16.msra.mxu0 0
        %2941 = vmatprep.subr.bf16.mxu0 0
        %2942 = vmatpush1.bf16.msra.mxu0 0
        %2943 = vmatprep.subr.bf16.mxu0 0
        %2944 = vmatpush1.bf16.msra.mxu0 0
        %2945 = vmatprep.subr.bf16.mxu0 0
        %2946 = vmatpush1.bf16.msra.mxu0 0
        %2947 = vmatprep.mubr.bf16.mxu0 0
        %2948 = vmatmul.mubr.bf16.gmra.mrb[0].mxu0 %v2910
        %v2949 = vpop.f32.mrb[0].mxu0
        %v2950 = vadd.f32 0.0, %v2949
        %v2951 = vpop.f32.mrb[0].mxu0
        %v2952 = vpop.f32.mrb[0].mxu0
        %v2953 = vpop.f32.mrb[0].mxu0
        %2954 = vdwg.mxu0
        %2956 = vrot.lane.b32.xlu0 %v1209, 120
        %v2957 = vpop.permute.xlu0 %2956
        %v2959 = vsel %vm1258, %v2611, 0
        %v2962 = vsel %vm1726, %v2957, 0
        %2964 = vmatprep.subr.bf16.mxu0 0
        %2965 = vmatpush1.bf16.msra.mxu0 %v2962
        %2966 = vmatprep.subr.bf16.mxu0 0
        %2967 = vmatpush1.bf16.msra.mxu0 0
        %2968 = vmatprep.subr.bf16.mxu0 0
        %2969 = vmatpush1.bf16.msra.mxu0 0
        %2970 = vmatprep.subr.bf16.mxu0 0
        %2971 = vmatpush1.bf16.msra.mxu0 0
        %2972 = vmatprep.subr.bf16.mxu0 0
        %2973 = vmatpush1.bf16.msra.mxu0 0
        %2974 = vmatprep.subr.bf16.mxu0 0
        %2975 = vmatpush1.bf16.msra.mxu0 0
        %2976 = vmatprep.subr.bf16.mxu0 0
        %2977 = vmatpush1.bf16.msra.mxu0 0
        %2978 = vmatprep.subr.bf16.mxu0 0
        %2979 = vmatpush1.bf16.msra.mxu0 0
        %2980 = vmatprep.subr.bf16.mxu0 0
        %2981 = vmatpush1.bf16.msra.mxu0 0
        %2982 = vmatprep.subr.bf16.mxu0 0
        %2983 = vmatpush1.bf16.msra.mxu0 0
        %2984 = vmatprep.subr.bf16.mxu0 0
        %2985 = vmatpush1.bf16.msra.mxu0 0
        %2986 = vmatprep.subr.bf16.mxu0 0
        %2987 = vmatpush1.bf16.msra.mxu0 0
        %2988 = vmatprep.subr.bf16.mxu0 0
        %2989 = vmatpush1.bf16.msra.mxu0 0
        %2990 = vmatprep.subr.bf16.mxu0 0
        %2991 = vmatpush1.bf16.msra.mxu0 0
        %2992 = vmatprep.subr.bf16.mxu0 0
        %2993 = vmatpush1.bf16.msra.mxu0 0
        %2994 = vmatprep.subr.bf16.mxu0 0
        %2995 = vmatpush1.bf16.msra.mxu0 0
        %2996 = vmatprep.mubr.bf16.mxu0 0
        %2997 = vmatmul.mubr.bf16.gmra.mrb[0].mxu0 %v2959
        %v2998 = vpop.f32.mrb[0].mxu0
        %v2999 = vadd.f32 0.0, %v2998
        %v3000 = vpop.f32.mrb[0].mxu0
        %v3001 = vpop.f32.mrb[0].mxu0
        %v3002 = vpop.f32.mrb[0].mxu0
        %3003 = vdwg.mxu0
        %3012 = vrot.lane.b32.xlu0 %v2656, 8
        %v3013 = vpop.permute.xlu0 %3012
        %3014 = vrot.lane.b32.xlu0 %v2705, 8
        %v3015 = vpop.permute.xlu0 %3014
        %3016 = vrot.lane.b32.xlu0 %v2754, 8
        %v3017 = vpop.permute.xlu0 %3016
        %3018 = vrot.lane.b32.xlu0 %v2803, 8
        %v3019 = vpop.permute.xlu0 %3018
        %3020 = vrot.lane.b32.xlu0 %v2852, 8
        %v3021 = vpop.permute.xlu0 %3020
        %3022 = vrot.lane.b32.xlu0 %v2901, 8
        %v3023 = vpop.permute.xlu0 %3022
        %3024 = vrot.lane.b32.xlu0 %v2950, 8
        %v3025 = vpop.permute.xlu0 %3024
        %3026 = vrot.lane.b32.xlu0 %v2999, 8
        %v3027 = vpop.permute.xlu0 %3026
        %vm3036 = vcmask 130112
        %3037 = vst.msk [vmem:[#allocation3] sm:$0xff] %vm3036, %v3013
        %3038 = vst.msk [vmem:[#allocation3 + $0x8] sm:$0xff] %vm3036, %v3015
        %3039 = vst.msk [vmem:[#allocation3 + $0x10] sm:$0xff] %vm3036, %v3017
        %3040 = vst.msk [vmem:[#allocation3 + $0x18] sm:$0xff] %vm3036, %v3019
        %3041 = vst.msk [vmem:[#allocation3 + $0x20] sm:$0xff] %vm3036, %v3021
        %3042 = vst.msk [vmem:[#allocation3 + $0x28] sm:$0xff] %vm3036, %v3023
        %3043 = vst.msk [vmem:[#allocation3 + $0x30] sm:$0xff] %vm3036, %v3025
        %3044 = vst.msk [vmem:[#allocation3 + $0x38] sm:$0xff] %vm3036, %v3027
        %3045 = vrot.lane.b32.xlu0 %v1186, 112
        %v3046 = vpop.permute.xlu0 %3045
        %3047 = vrot.lane.b32.xlu0 %v1194, 112
        %v3048 = vpop.permute.xlu0 %3047
        %v3050 = vsel %vm1258, %v3046, 0
        %v3053 = vsel %vm1258, %v3048, 0
        %3055 = vmatprep.subr.bf16.mxu0 0
        %3056 = vmatpush1.bf16.xpose.msra.mxu0 %v3053
        %3057 = vmatprep.subr.bf16.mxu0 0
        %3058 = vmatpush1.bf16.xpose.msra.mxu0 0
        %3059 = vmatprep.subr.bf16.mxu0 0
        %3060 = vmatpush1.bf16.xpose.msra.mxu0 0
        %3061 = vmatprep.subr.bf16.mxu0 0
        %3062 = vmatpush1.bf16.xpose.msra.mxu0 0
        %3063 = vmatprep.subr.bf16.mxu0 0
        %3064 = vmatpush1.bf16.xpose.msra.mxu0 0
        %3065 = vmatprep.subr.bf16.mxu0 0
        %3066 = vmatpush1.bf16.xpose.msra.mxu0 0
        %3067 = vmatprep.subr.bf16.mxu0 0
        %3068 = vmatpush1.bf16.xpose.msra.mxu0 0
        %3069 = vmatprep.subr.bf16.mxu0 0
        %3070 = vmatpush1.bf16.xpose.msra.mxu0 0
        %3071 = vmatprep.subr.bf16.mxu0 0
        %3072 = vmatpush1.bf16.xpose.msra.mxu0 0
        %3073 = vmatprep.subr.bf16.mxu0 0
        %3074 = vmatpush1.bf16.xpose.msra.mxu0 0
        %3075 = vmatprep.subr.bf16.mxu0 0
        %3076 = vmatpush1.bf16.xpose.msra.mxu0 0
        %3077 = vmatprep.subr.bf16.mxu0 0
        %3078 = vmatpush1.bf16.xpose.msra.mxu0 0
        %3079 = vmatprep.subr.bf16.mxu0 0
        %3080 = vmatpush1.bf16.xpose.msra.mxu0 0
        %3081 = vmatprep.subr.bf16.mxu0 0
        %3082 = vmatpush1.bf16.xpose.msra.mxu0 0
        %3083 = vmatprep.subr.bf16.mxu0 0
        %3084 = vmatpush1.bf16.xpose.msra.mxu0 0
        %3085 = vmatprep.subr.bf16.mxu0 0
        %3086 = vmatpush1.bf16.xpose.msra.mxu0 0
        %3087 = vmatprep.mubr.bf16.mxu0 0
        %3088 = vmatmul.mubr.bf16.gmra.mrb[0].mxu0 %v3050
        %v3089 = vpop.f32.mrb[0].mxu0
        %v3090 = vadd.f32 %v1221, %v3089
        %v3091 = vpop.f32.mrb[0].mxu0
        %v3092 = vpop.f32.mrb[0].mxu0
        %v3093 = vpop.f32.mrb[0].mxu0
        %3094 = vdwg.mxu0
        %3095 = vrot.lane.b32.xlu0 %v1187, 112
        %v3096 = vpop.permute.xlu0 %3095
        %3097 = vrot.lane.b32.xlu0 %v1195, 112
        %v3098 = vpop.permute.xlu0 %3097
        %v3100 = vsel %vm1258, %v3096, 0
        %v3103 = vsel %vm1258, %v3098, 0
        %3105 = vmatprep.subr.bf16.mxu0 0
        %3106 = vmatpush1.bf16.xpose.msra.mxu0 %v3103
        %3107 = vmatprep.subr.bf16.mxu0 0
        %3108 = vmatpush1.bf16.xpose.msra.mxu0 0
        %3109 = vmatprep.subr.bf16.mxu0 0
        %3110 = vmatpush1.bf16.xpose.msra.mxu0 0
        %3111 = vmatprep.subr.bf16.mxu0 0
        %3112 = vmatpush1.bf16.xpose.msra.mxu0 0
        %3113 = vmatprep.subr.bf16.mxu0 0
        %3114 = vmatpush1.bf16.xpose.msra.mxu0 0
        %3115 = vmatprep.subr.bf16.mxu0 0
        %3116 = vmatpush1.bf16.xpose.msra.mxu0 0
        %3117 = vmatprep.subr.bf16.mxu0 0
        %3118 = vmatpush1.bf16.xpose.msra.mxu0 0
        %3119 = vmatprep.subr.bf16.mxu0 0
        %3120 = vmatpush1.bf16.xpose.msra.mxu0 0
        %3121 = vmatprep.subr.bf16.mxu0 0
        %3122 = vmatpush1.bf16.xpose.msra.mxu0 0
        %3123 = vmatprep.subr.bf16.mxu0 0
        %3124 = vmatpush1.bf16.xpose.msra.mxu0 0
        %3125 = vmatprep.subr.bf16.mxu0 0
        %3126 = vmatpush1.bf16.xpose.msra.mxu0 0
        %3127 = vmatprep.subr.bf16.mxu0 0
        %3128 = vmatpush1.bf16.xpose.msra.mxu0 0
        %3129 = vmatprep.subr.bf16.mxu0 0
        %3130 = vmatpush1.bf16.xpose.msra.mxu0 0
        %3131 = vmatprep.subr.bf16.mxu0 0
        %3132 = vmatpush1.bf16.xpose.msra.mxu0 0
        %3133 = vmatprep.subr.bf16.mxu0 0
        %3134 = vmatpush1.bf16.xpose.msra.mxu0 0
        %3135 = vmatprep.subr.bf16.mxu0 0
        %3136 = vmatpush1.bf16.xpose.msra.mxu0 0
        %3137 = vmatprep.mubr.bf16.mxu0 0
        %3138 = vmatmul.mubr.bf16.gmra.mrb[0].mxu0 %v3100
        %v3139 = vpop.f32.mrb[0].mxu0
        %v3140 = vadd.f32 %v1225, %v3139
        %v3141 = vpop.f32.mrb[0].mxu0
        %v3142 = vpop.f32.mrb[0].mxu0
        %v3143 = vpop.f32.mrb[0].mxu0
        %3144 = vdwg.mxu0
        %3145 = vrot.lane.b32.xlu0 %v1188, 112
        %v3146 = vpop.permute.xlu0 %3145
        %3147 = vrot.lane.b32.xlu0 %v1196, 112
        %v3148 = vpop.permute.xlu0 %3147
        %v3150 = vsel %vm1258, %v3146, 0
        %v3153 = vsel %vm1258, %v3148, 0
        %3155 = vmatprep.subr.bf16.mxu0 0
        %3156 = vmatpush1.bf16.xpose.msra.mxu0 %v3153
        %3157 = vmatprep.subr.bf16.mxu0 0
        %3158 = vmatpush1.bf16.xpose.msra.mxu0 0
        %3159 = vmatprep.subr.bf16.mxu0 0
        %3160 = vmatpush1.bf16.xpose.msra.mxu0 0
        %3161 = vmatprep.subr.bf16.mxu0 0
        %3162 = vmatpush1.bf16.xpose.msra.mxu0 0
        %3163 = vmatprep.subr.bf16.mxu0 0
        %3164 = vmatpush1.bf16.xpose.msra.mxu0 0
        %3165 = vmatprep.subr.bf16.mxu0 0
        %3166 = vmatpush1.bf16.xpose.msra.mxu0 0
        %3167 = vmatprep.subr.bf16.mxu0 0
        %3168 = vmatpush1.bf16.xpose.msra.mxu0 0
        %3169 = vmatprep.subr.bf16.mxu0 0
        %3170 = vmatpush1.bf16.xpose.msra.mxu0 0
        %3171 = vmatprep.subr.bf16.mxu0 0
        %3172 = vmatpush1.bf16.xpose.msra.mxu0 0
        %3173 = vmatprep.subr.bf16.mxu0 0
        %3174 = vmatpush1.bf16.xpose.msra.mxu0 0
        %3175 = vmatprep.subr.bf16.mxu0 0
        %3176 = vmatpush1.bf16.xpose.msra.mxu0 0
        %3177 = vmatprep.subr.bf16.mxu0 0
        %3178 = vmatpush1.bf16.xpose.msra.mxu0 0
        %3179 = vmatprep.subr.bf16.mxu0 0
        %3180 = vmatpush1.bf16.xpose.msra.mxu0 0
        %3181 = vmatprep.subr.bf16.mxu0 0
        %3182 = vmatpush1.bf16.xpose.msra.mxu0 0
        %3183 = vmatprep.subr.bf16.mxu0 0
        %3184 = vmatpush1.bf16.xpose.msra.mxu0 0
        %3185 = vmatprep.subr.bf16.mxu0 0
        %3186 = vmatpush1.bf16.xpose.msra.mxu0 0
        %3187 = vmatprep.mubr.bf16.mxu0 0
        %3188 = vmatmul.mubr.bf16.gmra.mrb[0].mxu0 %v3150
        %v3189 = vpop.f32.mrb[0].mxu0
        %v3190 = vadd.f32 %v1229, %v3189
        %v3191 = vpop.f32.mrb[0].mxu0
        %v3192 = vpop.f32.mrb[0].mxu0
        %v3193 = vpop.f32.mrb[0].mxu0
        %3194 = vdwg.mxu0
        %3195 = vrot.lane.b32.xlu0 %v1189, 112
        %v3196 = vpop.permute.xlu0 %3195
        %3197 = vrot.lane.b32.xlu0 %v1197, 112
        %v3198 = vpop.permute.xlu0 %3197
        %v3200 = vsel %vm1258, %v3196, 0
        %v3203 = vsel %vm1258, %v3198, 0
        %3205 = vmatprep.subr.bf16.mxu0 0
        %3206 = vmatpush1.bf16.xpose.msra.mxu0 %v3203
        %3207 = vmatprep.subr.bf16.mxu0 0
        %3208 = vmatpush1.bf16.xpose.msra.mxu0 0
        %3209 = vmatprep.subr.bf16.mxu0 0
        %3210 = vmatpush1.bf16.xpose.msra.mxu0 0
        %3211 = vmatprep.subr.bf16.mxu0 0
        %3212 = vmatpush1.bf16.xpose.msra.mxu0 0
        %3213 = vmatprep.subr.bf16.mxu0 0
        %3214 = vmatpush1.bf16.xpose.msra.mxu0 0
        %3215 = vmatprep.subr.bf16.mxu0 0
        %3216 = vmatpush1.bf16.xpose.msra.mxu0 0
        %3217 = vmatprep.subr.bf16.mxu0 0
        %3218 = vmatpush1.bf16.xpose.msra.mxu0 0
        %3219 = vmatprep.subr.bf16.mxu0 0
        %3220 = vmatpush1.bf16.xpose.msra.mxu0 0
        %3221 = vmatprep.subr.bf16.mxu0 0
        %3222 = vmatpush1.bf16.xpose.msra.mxu0 0
        %3223 = vmatprep.subr.bf16.mxu0 0
        %3224 = vmatpush1.bf16.xpose.msra.mxu0 0
        %3225 = vmatprep.subr.bf16.mxu0 0
        %3226 = vmatpush1.bf16.xpose.msra.mxu0 0
        %3227 = vmatprep.subr.bf16.mxu0 0
        %3228 = vmatpush1.bf16.xpose.msra.mxu0 0
        %3229 = vmatprep.subr.bf16.mxu0 0
        %3230 = vmatpush1.bf16.xpose.msra.mxu0 0
        %3231 = vmatprep.subr.bf16.mxu0 0
        %3232 = vmatpush1.bf16.xpose.msra.mxu0 0
        %3233 = vmatprep.subr.bf16.mxu0 0
        %3234 = vmatpush1.bf16.xpose.msra.mxu0 0
        %3235 = vmatprep.subr.bf16.mxu0 0
        %3236 = vmatpush1.bf16.xpose.msra.mxu0 0
        %3237 = vmatprep.mubr.bf16.mxu0 0
        %3238 = vmatmul.mubr.bf16.gmra.mrb[0].mxu0 %v3200
        %v3239 = vpop.f32.mrb[0].mxu0
        %v3240 = vadd.f32 %v1233, %v3239
        %v3241 = vpop.f32.mrb[0].mxu0
        %v3242 = vpop.f32.mrb[0].mxu0
        %v3243 = vpop.f32.mrb[0].mxu0
        %3244 = vdwg.mxu0
        %3245 = vrot.lane.b32.xlu0 %v1190, 112
        %v3246 = vpop.permute.xlu0 %3245
        %3247 = vrot.lane.b32.xlu0 %v1198, 112
        %v3248 = vpop.permute.xlu0 %3247
        %v3250 = vsel %vm1258, %v3246, 0
        %v3253 = vsel %vm1258, %v3248, 0
        %3255 = vmatprep.subr.bf16.mxu0 0
        %3256 = vmatpush1.bf16.xpose.msra.mxu0 %v3253
        %3257 = vmatprep.subr.bf16.mxu0 0
        %3258 = vmatpush1.bf16.xpose.msra.mxu0 0
        %3259 = vmatprep.subr.bf16.mxu0 0
        %3260 = vmatpush1.bf16.xpose.msra.mxu0 0
        %3261 = vmatprep.subr.bf16.mxu0 0
        %3262 = vmatpush1.bf16.xpose.msra.mxu0 0
        %3263 = vmatprep.subr.bf16.mxu0 0
        %3264 = vmatpush1.bf16.xpose.msra.mxu0 0
        %3265 = vmatprep.subr.bf16.mxu0 0
        %3266 = vmatpush1.bf16.xpose.msra.mxu0 0
        %3267 = vmatprep.subr.bf16.mxu0 0
        %3268 = vmatpush1.bf16.xpose.msra.mxu0 0
        %3269 = vmatprep.subr.bf16.mxu0 0
        %3270 = vmatpush1.bf16.xpose.msra.mxu0 0
        %3271 = vmatprep.subr.bf16.mxu0 0
        %3272 = vmatpush1.bf16.xpose.msra.mxu0 0
        %3273 = vmatprep.subr.bf16.mxu0 0
        %3274 = vmatpush1.bf16.xpose.msra.mxu0 0
        %3275 = vmatprep.subr.bf16.mxu0 0
        %3276 = vmatpush1.bf16.xpose.msra.mxu0 0
        %3277 = vmatprep.subr.bf16.mxu0 0
        %3278 = vmatpush1.bf16.xpose.msra.mxu0 0
        %3279 = vmatprep.subr.bf16.mxu0 0
        %3280 = vmatpush1.bf16.xpose.msra.mxu0 0
        %3281 = vmatprep.subr.bf16.mxu0 0
        %3282 = vmatpush1.bf16.xpose.msra.mxu0 0
        %3283 = vmatprep.subr.bf16.mxu0 0
        %3284 = vmatpush1.bf16.xpose.msra.mxu0 0
        %3285 = vmatprep.subr.bf16.mxu0 0
        %3286 = vmatpush1.bf16.xpose.msra.mxu0 0
        %3287 = vmatprep.mubr.bf16.mxu0 0
        %3288 = vmatmul.mubr.bf16.gmra.mrb[0].mxu0 %v3250
        %v3289 = vpop.f32.mrb[0].mxu0
        %v3290 = vadd.f32 %v1237, %v3289
        %v3291 = vpop.f32.mrb[0].mxu0
        %v3292 = vpop.f32.mrb[0].mxu0
        %v3293 = vpop.f32.mrb[0].mxu0
        %3294 = vdwg.mxu0
        %3295 = vrot.lane.b32.xlu0 %v1191, 112
        %v3296 = vpop.permute.xlu0 %3295
        %3297 = vrot.lane.b32.xlu0 %v1199, 112
        %v3298 = vpop.permute.xlu0 %3297
        %v3300 = vsel %vm1258, %v3296, 0
        %v3303 = vsel %vm1258, %v3298, 0
        %3305 = vmatprep.subr.bf16.mxu0 0
        %3306 = vmatpush1.bf16.xpose.msra.mxu0 %v3303
        %3307 = vmatprep.subr.bf16.mxu0 0
        %3308 = vmatpush1.bf16.xpose.msra.mxu0 0
        %3309 = vmatprep.subr.bf16.mxu0 0
        %3310 = vmatpush1.bf16.xpose.msra.mxu0 0
        %3311 = vmatprep.subr.bf16.mxu0 0
        %3312 = vmatpush1.bf16.xpose.msra.mxu0 0
        %3313 = vmatprep.subr.bf16.mxu0 0
        %3314 = vmatpush1.bf16.xpose.msra.mxu0 0
        %3315 = vmatprep.subr.bf16.mxu0 0
        %3316 = vmatpush1.bf16.xpose.msra.mxu0 0
        %3317 = vmatprep.subr.bf16.mxu0 0
        %3318 = vmatpush1.bf16.xpose.msra.mxu0 0
        %3319 = vmatprep.subr.bf16.mxu0 0
        %3320 = vmatpush1.bf16.xpose.msra.mxu0 0
        %3321 = vmatprep.subr.bf16.mxu0 0
        %3322 = vmatpush1.bf16.xpose.msra.mxu0 0
        %3323 = vmatprep.subr.bf16.mxu0 0
        %3324 = vmatpush1.bf16.xpose.msra.mxu0 0
        %3325 = vmatprep.subr.bf16.mxu0 0
        %3326 = vmatpush1.bf16.xpose.msra.mxu0 0
        %3327 = vmatprep.subr.bf16.mxu0 0
        %3328 = vmatpush1.bf16.xpose.msra.mxu0 0
        %3329 = vmatprep.subr.bf16.mxu0 0
        %3330 = vmatpush1.bf16.xpose.msra.mxu0 0
        %3331 = vmatprep.subr.bf16.mxu0 0
        %3332 = vmatpush1.bf16.xpose.msra.mxu0 0
        %3333 = vmatprep.subr.bf16.mxu0 0
        %3334 = vmatpush1.bf16.xpose.msra.mxu0 0
        %3335 = vmatprep.subr.bf16.mxu0 0
        %3336 = vmatpush1.bf16.xpose.msra.mxu0 0
        %3337 = vmatprep.mubr.bf16.mxu0 0
        %3338 = vmatmul.mubr.bf16.gmra.mrb[0].mxu0 %v3300
        %v3339 = vpop.f32.mrb[0].mxu0
        %v3340 = vadd.f32 %v1241, %v3339
        %v3341 = vpop.f32.mrb[0].mxu0
        %v3342 = vpop.f32.mrb[0].mxu0
        %v3343 = vpop.f32.mrb[0].mxu0
        %3344 = vdwg.mxu0
        %3345 = vrot.lane.b32.xlu0 %v1192, 112
        %v3346 = vpop.permute.xlu0 %3345
        %3347 = vrot.lane.b32.xlu0 %v1200, 112
        %v3348 = vpop.permute.xlu0 %3347
        %v3350 = vsel %vm1258, %v3346, 0
        %v3353 = vsel %vm1258, %v3348, 0
        %3355 = vmatprep.subr.bf16.mxu0 0
        %3356 = vmatpush1.bf16.xpose.msra.mxu0 %v3353
        %3357 = vmatprep.subr.bf16.mxu0 0
        %3358 = vmatpush1.bf16.xpose.msra.mxu0 0
        %3359 = vmatprep.subr.bf16.mxu0 0
        %3360 = vmatpush1.bf16.xpose.msra.mxu0 0
        %3361 = vmatprep.subr.bf16.mxu0 0
        %3362 = vmatpush1.bf16.xpose.msra.mxu0 0
        %3363 = vmatprep.subr.bf16.mxu0 0
        %3364 = vmatpush1.bf16.xpose.msra.mxu0 0
        %3365 = vmatprep.subr.bf16.mxu0 0
        %3366 = vmatpush1.bf16.xpose.msra.mxu0 0
        %3367 = vmatprep.subr.bf16.mxu0 0
        %3368 = vmatpush1.bf16.xpose.msra.mxu0 0
        %3369 = vmatprep.subr.bf16.mxu0 0
        %3370 = vmatpush1.bf16.xpose.msra.mxu0 0
        %3371 = vmatprep.subr.bf16.mxu0 0
        %3372 = vmatpush1.bf16.xpose.msra.mxu0 0
        %3373 = vmatprep.subr.bf16.mxu0 0
        %3374 = vmatpush1.bf16.xpose.msra.mxu0 0
        %3375 = vmatprep.subr.bf16.mxu0 0
        %3376 = vmatpush1.bf16.xpose.msra.mxu0 0
        %3377 = vmatprep.subr.bf16.mxu0 0
        %3378 = vmatpush1.bf16.xpose.msra.mxu0 0
        %3379 = vmatprep.subr.bf16.mxu0 0
        %3380 = vmatpush1.bf16.xpose.msra.mxu0 0
        %3381 = vmatprep.subr.bf16.mxu0 0
        %3382 = vmatpush1.bf16.xpose.msra.mxu0 0
        %3383 = vmatprep.subr.bf16.mxu0 0
        %3384 = vmatpush1.bf16.xpose.msra.mxu0 0
        %3385 = vmatprep.subr.bf16.mxu0 0
        %3386 = vmatpush1.bf16.xpose.msra.mxu0 0
        %3387 = vmatprep.mubr.bf16.mxu0 0
        %3388 = vmatmul.mubr.bf16.gmra.mrb[0].mxu0 %v3350
        %v3389 = vpop.f32.mrb[0].mxu0
        %v3390 = vadd.f32 %v1245, %v3389
        %v3391 = vpop.f32.mrb[0].mxu0
        %v3392 = vpop.f32.mrb[0].mxu0
        %v3393 = vpop.f32.mrb[0].mxu0
        %3394 = vdwg.mxu0
        %3395 = vrot.lane.b32.xlu0 %v1193, 112
        %v3396 = vpop.permute.xlu0 %3395
        %3397 = vrot.lane.b32.xlu0 %v1201, 112
        %v3398 = vpop.permute.xlu0 %3397
        %v3400 = vsel %vm1258, %v3396, 0
        %v3403 = vsel %vm1258, %v3398, 0
        %3405 = vmatprep.subr.bf16.mxu0 0
        %3406 = vmatpush1.bf16.xpose.msra.mxu0 %v3403
        %3407 = vmatprep.subr.bf16.mxu0 0
        %3408 = vmatpush1.bf16.xpose.msra.mxu0 0
        %3409 = vmatprep.subr.bf16.mxu0 0
        %3410 = vmatpush1.bf16.xpose.msra.mxu0 0
        %3411 = vmatprep.subr.bf16.mxu0 0
        %3412 = vmatpush1.bf16.xpose.msra.mxu0 0
        %3413 = vmatprep.subr.bf16.mxu0 0
        %3414 = vmatpush1.bf16.xpose.msra.mxu0 0
        %3415 = vmatprep.subr.bf16.mxu0 0
        %3416 = vmatpush1.bf16.xpose.msra.mxu0 0
        %3417 = vmatprep.subr.bf16.mxu0 0
        %3418 = vmatpush1.bf16.xpose.msra.mxu0 0
        %3419 = vmatprep.subr.bf16.mxu0 0
        %3420 = vmatpush1.bf16.xpose.msra.mxu0 0
        %3421 = vmatprep.subr.bf16.mxu0 0
        %3422 = vmatpush1.bf16.xpose.msra.mxu0 0
        %3423 = vmatprep.subr.bf16.mxu0 0
        %3424 = vmatpush1.bf16.xpose.msra.mxu0 0
        %3425 = vmatprep.subr.bf16.mxu0 0
        %3426 = vmatpush1.bf16.xpose.msra.mxu0 0
        %3427 = vmatprep.subr.bf16.mxu0 0
        %3428 = vmatpush1.bf16.xpose.msra.mxu0 0
        %3429 = vmatprep.subr.bf16.mxu0 0
        %3430 = vmatpush1.bf16.xpose.msra.mxu0 0
        %3431 = vmatprep.subr.bf16.mxu0 0
        %3432 = vmatpush1.bf16.xpose.msra.mxu0 0
        %3433 = vmatprep.subr.bf16.mxu0 0
        %3434 = vmatpush1.bf16.xpose.msra.mxu0 0
        %3435 = vmatprep.subr.bf16.mxu0 0
        %3436 = vmatpush1.bf16.xpose.msra.mxu0 0
        %3437 = vmatprep.mubr.bf16.mxu0 0
        %3438 = vmatmul.mubr.bf16.gmra.mrb[0].mxu0 %v3400
        %v3439 = vpop.f32.mrb[0].mxu0
        %v3440 = vadd.f32 %v1249, %v3439
        %v3441 = vpop.f32.mrb[0].mxu0
        %v3442 = vpop.f32.mrb[0].mxu0
        %v3443 = vpop.f32.mrb[0].mxu0
        %3444 = vdwg.mxu0
        %v3445 = vsel %vm1258, %v3090, -inf
        %3446 = vmax.xlane.f32.xlu0 %v3445
        %v3447 = vpop.xlane.xlu0 %3446
        %v3448 = vsel %vm1258, %v3140, -inf
        %3449 = vmax.xlane.f32.xlu0 %v3448
        %v3450 = vpop.xlane.xlu0 %3449
        %v3451 = vsel %vm1258, %v3190, -inf
        %3452 = vmax.xlane.f32.xlu0 %v3451
        %v3453 = vpop.xlane.xlu0 %3452
        %v3454 = vsel %vm1258, %v3240, -inf
        %3455 = vmax.xlane.f32.xlu0 %v3454
        %v3456 = vpop.xlane.xlu0 %3455
        %v3457 = vsel %vm1258, %v3290, -inf
        %3458 = vmax.xlane.f32.xlu0 %v3457
        %v3459 = vpop.xlane.xlu0 %3458
        %v3460 = vsel %vm1258, %v3340, -inf
        %3461 = vmax.xlane.f32.xlu0 %v3460
        %v3462 = vpop.xlane.xlu0 %3461
        %v3463 = vsel %vm1258, %v3390, -inf
        %3464 = vmax.xlane.f32.xlu0 %v3463
        %v3465 = vpop.xlane.xlu0 %3464
        %v3466 = vsel %vm1258, %v3440, -inf
        %3467 = vmax.xlane.f32.xlu0 %v3466
        %v3468 = vpop.xlane.xlu0 %3467
        %v3469 = vsub.f32 %v3090, %v3447
        %v3470 = vsub.f32 %v3140, %v3450
        %v3471 = vsub.f32 %v3190, %v3453
        %v3472 = vsub.f32 %v3240, %v3456
        %v3473 = vsub.f32 %v3290, %v3459
        %v3474 = vsub.f32 %v3340, %v3462
        %v3475 = vsub.f32 %v3390, %v3465
        %v3476 = vsub.f32 %v3440, %v3468
        %v3477 = vmul.f32 %v3469, 1.442695
        %v3478 = vpow.pop %v3477
        %v3479 = vmul.f32 %v3470, 1.442695
        %v3480 = vpow.pop %v3479
        %v3481 = vmul.f32 %v3471, 1.442695
        %v3482 = vpow.pop %v3481
        %v3483 = vmul.f32 %v3472, 1.442695
        %v3484 = vpow.pop %v3483
        %v3485 = vmul.f32 %v3473, 1.442695
        %v3486 = vpow.pop %v3485
        %v3487 = vmul.f32 %v3474, 1.442695
        %v3488 = vpow.pop %v3487
        %v3489 = vmul.f32 %v3475, 1.442695
        %v3490 = vpow.pop %v3489
        %v3491 = vmul.f32 %v3476, 1.442695
        %v3492 = vpow.pop %v3491
        %v3493 = vsel %vm1258, %v3478, 0.0
        %3494 = vadd.xlane.f32.xlu0 %v3493
        %v3495 = vpop.xlane.xlu0 %3494
        %v3496 = vsel %vm1258, %v3480, 0.0
        %3497 = vadd.xlane.f32.xlu0 %v3496
        %v3498 = vpop.xlane.xlu0 %3497
        %v3499 = vsel %vm1258, %v3482, 0.0
        %3500 = vadd.xlane.f32.xlu0 %v3499
        %v3501 = vpop.xlane.xlu0 %3500
        %v3502 = vsel %vm1258, %v3484, 0.0
        %3503 = vadd.xlane.f32.xlu0 %v3502
        %v3504 = vpop.xlane.xlu0 %3503
        %v3505 = vsel %vm1258, %v3486, 0.0
        %3506 = vadd.xlane.f32.xlu0 %v3505
        %v3507 = vpop.xlane.xlu0 %3506
        %v3508 = vsel %vm1258, %v3488, 0.0
        %3509 = vadd.xlane.f32.xlu0 %v3508
        %v3510 = vpop.xlane.xlu0 %3509
        %v3511 = vsel %vm1258, %v3490, 0.0
        %3512 = vadd.xlane.f32.xlu0 %v3511
        %v3513 = vpop.xlane.xlu0 %3512
        %v3514 = vsel %vm1258, %v3492, 0.0
        %3515 = vadd.xlane.f32.xlu0 %v3514
        %v3516 = vpop.xlane.xlu0 %3515
        %v3517 = vrcp.pop %v3495
        %v3518 = vrcp.pop %v3498
        %v3519 = vrcp.pop %v3501
        %v3520 = vrcp.pop %v3504
        %v3521 = vrcp.pop %v3507
        %v3522 = vrcp.pop %v3510
        %v3523 = vrcp.pop %v3513
        %v3524 = vrcp.pop %v3516
        %v3525 = vmul.f32 %v3478, %v3517
        %v3526 = vmul.f32 %v3480, %v3518
        %v3527 = vmul.f32 %v3482, %v3519
        %v3528 = vmul.f32 %v3484, %v3520
        %v3529 = vmul.f32 %v3486, %v3521
        %v3530 = vmul.f32 %v3488, %v3522
        %v3531 = vmul.f32 %v3490, %v3523
        %v3532 = vmul.f32 %v3492, %v3524
        %v3533 = vpack.c.bf16 %v3525, %v3525
        %v3534 = vpack.c.bf16 %v3526, %v3526
        %v3535 = vpack.c.bf16 %v3527, %v3527
        %v3536 = vpack.c.bf16 %v3528, %v3528
        %v3537 = vpack.c.bf16 %v3529, %v3529
        %v3538 = vpack.c.bf16 %v3530, %v3530
        %v3539 = vpack.c.bf16 %v3531, %v3531
        %v3540 = vpack.c.bf16 %v3532, %v3532
        %3541 = vrot.lane.b32.xlu0 %v1202, 112
        %v3542 = vpop.permute.xlu0 %3541
        %v3544 = vsel %vm1258, %v3533, 0
        %v3547 = vsel %vm1726, %v3542, 0
        %3549 = vmatprep.subr.bf16.mxu0 0
        %3550 = vmatpush1.bf16.msra.mxu0 %v3547
        %3551 = vmatprep.subr.bf16.mxu0 0
        %3552 = vmatpush1.bf16.msra.mxu0 0
        %3553 = vmatprep.subr.bf16.mxu0 0
        %3554 = vmatpush1.bf16.msra.mxu0 0
        %3555 = vmatprep.subr.bf16.mxu0 0
        %3556 = vmatpush1.bf16.msra.mxu0 0
        %3557 = vmatprep.subr.bf16.mxu0 0
        %3558 = vmatpush1.bf16.msra.mxu0 0
        %3559 = vmatprep.subr.bf16.mxu0 0
        %3560 = vmatpush1.bf16.msra.mxu0 0
        %3561 = vmatprep.subr.bf16.mxu0 0
        %3562 = vmatpush1.bf16.msra.mxu0 0
        %3563 = vmatprep.subr.bf16.mxu0 0
        %3564 = vmatpush1.bf16.msra.mxu0 0
        %3565 = vmatprep.subr.bf16.mxu0 0
        %3566 = vmatpush1.bf16.msra.mxu0 0
        %3567 = vmatprep.subr.bf16.mxu0 0
        %3568 = vmatpush1.bf16.msra.mxu0 0
        %3569 = vmatprep.subr.bf16.mxu0 0
        %3570 = vmatpush1.bf16.msra.mxu0 0
        %3571 = vmatprep.subr.bf16.mxu0 0
        %3572 = vmatpush1.bf16.msra.mxu0 0
        %3573 = vmatprep.subr.bf16.mxu0 0
        %3574 = vmatpush1.bf16.msra.mxu0 0
        %3575 = vmatprep.subr.bf16.mxu0 0
        %3576 = vmatpush1.bf16.msra.mxu0 0
        %3577 = vmatprep.subr.bf16.mxu0 0
        %3578 = vmatpush1.bf16.msra.mxu0 0
        %3579 = vmatprep.subr.bf16.mxu0 0
        %3580 = vmatpush1.bf16.msra.mxu0 0
        %3581 = vmatprep.mubr.bf16.mxu0 0
        %3582 = vmatmul.mubr.bf16.gmra.mrb[0].mxu0 %v3544
        %v3583 = vpop.f32.mrb[0].mxu0
        %v3584 = vadd.f32 0.0, %v3583
        %v3585 = vpop.f32.mrb[0].mxu0
        %v3586 = vpop.f32.mrb[0].mxu0
        %v3587 = vpop.f32.mrb[0].mxu0
        %3588 = vdwg.mxu0
        %3589 = vrot.lane.b32.xlu0 %v1203, 112
        %v3590 = vpop.permute.xlu0 %3589
        %v3592 = vsel %vm1258, %v3534, 0
        %v3595 = vsel %vm1726, %v3590, 0
        %3597 = vmatprep.subr.bf16.mxu0 0
        %3598 = vmatpush1.bf16.msra.mxu0 %v3595
        %3599 = vmatprep.subr.bf16.mxu0 0
        %3600 = vmatpush1.bf16.msra.mxu0 0
        %3601 = vmatprep.subr.bf16.mxu0 0
        %3602 = vmatpush1.bf16.msra.mxu0 0
        %3603 = vmatprep.subr.bf16.mxu0 0
        %3604 = vmatpush1.bf16.msra.mxu0 0
        %3605 = vmatprep.subr.bf16.mxu0 0
        %3606 = vmatpush1.bf16.msra.mxu0 0
        %3607 = vmatprep.subr.bf16.mxu0 0
        %3608 = vmatpush1.bf16.msra.mxu0 0
        %3609 = vmatprep.subr.bf16.mxu0 0
        %3610 = vmatpush1.bf16.msra.mxu0 0
        %3611 = vmatprep.subr.bf16.mxu0 0
        %3612 = vmatpush1.bf16.msra.mxu0 0
        %3613 = vmatprep.subr.bf16.mxu0 0
        %3614 = vmatpush1.bf16.msra.mxu0 0
        %3615 = vmatprep.subr.bf16.mxu0 0
        %3616 = vmatpush1.bf16.msra.mxu0 0
        %3617 = vmatprep.subr.bf16.mxu0 0
        %3618 = vmatpush1.bf16.msra.mxu0 0
        %3619 = vmatprep.subr.bf16.mxu0 0
        %3620 = vmatpush1.bf16.msra.mxu0 0
        %3621 = vmatprep.subr.bf16.mxu0 0
        %3622 = vmatpush1.bf16.msra.mxu0 0
        %3623 = vmatprep.subr.bf16.mxu0 0
        %3624 = vmatpush1.bf16.msra.mxu0 0
        %3625 = vmatprep.subr.bf16.mxu0 0
        %3626 = vmatpush1.bf16.msra.mxu0 0
        %3627 = vmatprep.subr.bf16.mxu0 0
        %3628 = vmatpush1.bf16.msra.mxu0 0
        %3629 = vmatprep.mubr.bf16.mxu0 0
        %3630 = vmatmul.mubr.bf16.gmra.mrb[0].mxu0 %v3592
        %v3631 = vpop.f32.mrb[0].mxu0
        %v3632 = vadd.f32 0.0, %v3631
        %v3633 = vpop.f32.mrb[0].mxu0
        %v3634 = vpop.f32.mrb[0].mxu0
        %v3635 = vpop.f32.mrb[0].mxu0
        %3636 = vdwg.mxu0
        %3637 = vrot.lane.b32.xlu0 %v1204, 112
        %v3638 = vpop.permute.xlu0 %3637
        %v3640 = vsel %vm1258, %v3535, 0
        %v3643 = vsel %vm1726, %v3638, 0
        %3645 = vmatprep.subr.bf16.mxu0 0
        %3646 = vmatpush1.bf16.msra.mxu0 %v3643
        %3647 = vmatprep.subr.bf16.mxu0 0
        %3648 = vmatpush1.bf16.msra.mxu0 0
        %3649 = vmatprep.subr.bf16.mxu0 0
        %3650 = vmatpush1.bf16.msra.mxu0 0
        %3651 = vmatprep.subr.bf16.mxu0 0
        %3652 = vmatpush1.bf16.msra.mxu0 0
        %3653 = vmatprep.subr.bf16.mxu0 0
        %3654 = vmatpush1.bf16.msra.mxu0 0
        %3655 = vmatprep.subr.bf16.mxu0 0
        %3656 = vmatpush1.bf16.msra.mxu0 0
        %3657 = vmatprep.subr.bf16.mxu0 0
        %3658 = vmatpush1.bf16.msra.mxu0 0
        %3659 = vmatprep.subr.bf16.mxu0 0
        %3660 = vmatpush1.bf16.msra.mxu0 0
        %3661 = vmatprep.subr.bf16.mxu0 0
        %3662 = vmatpush1.bf16.msra.mxu0 0
        %3663 = vmatprep.subr.bf16.mxu0 0
        %3664 = vmatpush1.bf16.msra.mxu0 0
        %3665 = vmatprep.subr.bf16.mxu0 0
        %3666 = vmatpush1.bf16.msra.mxu0 0
        %3667 = vmatprep.subr.bf16.mxu0 0
        %3668 = vmatpush1.bf16.msra.mxu0 0
        %3669 = vmatprep.subr.bf16.mxu0 0
        %3670 = vmatpush1.bf16.msra.mxu0 0
        %3671 = vmatprep.subr.bf16.mxu0 0
        %3672 = vmatpush1.bf16.msra.mxu0 0
        %3673 = vmatprep.subr.bf16.mxu0 0
        %3674 = vmatpush1.bf16.msra.mxu0 0
        %3675 = vmatprep.subr.bf16.mxu0 0
        %3676 = vmatpush1.bf16.msra.mxu0 0
        %3677 = vmatprep.mubr.bf16.mxu0 0
        %3678 = vmatmul.mubr.bf16.gmra.mrb[0].mxu0 %v3640
        %v3679 = vpop.f32.mrb[0].mxu0
        %v3680 = vadd.f32 0.0, %v3679
        %v3681 = vpop.f32.mrb[0].mxu0
        %v3682 = vpop.f32.mrb[0].mxu0
        %v3683 = vpop.f32.mrb[0].mxu0
        %3684 = vdwg.mxu0
        %3685 = vrot.lane.b32.xlu0 %v1205, 112
        %v3686 = vpop.permute.xlu0 %3685
        %v3688 = vsel %vm1258, %v3536, 0
        %v3691 = vsel %vm1726, %v3686, 0
        %3693 = vmatprep.subr.bf16.mxu0 0
        %3694 = vmatpush1.bf16.msra.mxu0 %v3691
        %3695 = vmatprep.subr.bf16.mxu0 0
        %3696 = vmatpush1.bf16.msra.mxu0 0
        %3697 = vmatprep.subr.bf16.mxu0 0
        %3698 = vmatpush1.bf16.msra.mxu0 0
        %3699 = vmatprep.subr.bf16.mxu0 0
        %3700 = vmatpush1.bf16.msra.mxu0 0
        %3701 = vmatprep.subr.bf16.mxu0 0
        %3702 = vmatpush1.bf16.msra.mxu0 0
        %3703 = vmatprep.subr.bf16.mxu0 0
        %3704 = vmatpush1.bf16.msra.mxu0 0
        %3705 = vmatprep.subr.bf16.mxu0 0
        %3706 = vmatpush1.bf16.msra.mxu0 0
        %3707 = vmatprep.subr.bf16.mxu0 0
        %3708 = vmatpush1.bf16.msra.mxu0 0
        %3709 = vmatprep.subr.bf16.mxu0 0
        %3710 = vmatpush1.bf16.msra.mxu0 0
        %3711 = vmatprep.subr.bf16.mxu0 0
        %3712 = vmatpush1.bf16.msra.mxu0 0
        %3713 = vmatprep.subr.bf16.mxu0 0
        %3714 = vmatpush1.bf16.msra.mxu0 0
        %3715 = vmatprep.subr.bf16.mxu0 0
        %3716 = vmatpush1.bf16.msra.mxu0 0
        %3717 = vmatprep.subr.bf16.mxu0 0
        %3718 = vmatpush1.bf16.msra.mxu0 0
        %3719 = vmatprep.subr.bf16.mxu0 0
        %3720 = vmatpush1.bf16.msra.mxu0 0
        %3721 = vmatprep.subr.bf16.mxu0 0
        %3722 = vmatpush1.bf16.msra.mxu0 0
        %3723 = vmatprep.subr.bf16.mxu0 0
        %3724 = vmatpush1.bf16.msra.mxu0 0
        %3725 = vmatprep.mubr.bf16.mxu0 0
        %3726 = vmatmul.mubr.bf16.gmra.mrb[0].mxu0 %v3688
        %v3727 = vpop.f32.mrb[0].mxu0
        %v3728 = vadd.f32 0.0, %v3727
        %v3729 = vpop.f32.mrb[0].mxu0
        %v3730 = vpop.f32.mrb[0].mxu0
        %v3731 = vpop.f32.mrb[0].mxu0
        %3732 = vdwg.mxu0
        %3733 = vrot.lane.b32.xlu0 %v1206, 112
        %v3734 = vpop.permute.xlu0 %3733
        %v3736 = vsel %vm1258, %v3537, 0
        %v3739 = vsel %vm1726, %v3734, 0
        %3741 = vmatprep.subr.bf16.mxu0 0
        %3742 = vmatpush1.bf16.msra.mxu0 %v3739
        %3743 = vmatprep.subr.bf16.mxu0 0
        %3744 = vmatpush1.bf16.msra.mxu0 0
        %3745 = vmatprep.subr.bf16.mxu0 0
        %3746 = vmatpush1.bf16.msra.mxu0 0
        %3747 = vmatprep.subr.bf16.mxu0 0
        %3748 = vmatpush1.bf16.msra.mxu0 0
        %3749 = vmatprep.subr.bf16.mxu0 0
        %3750 = vmatpush1.bf16.msra.mxu0 0
        %3751 = vmatprep.subr.bf16.mxu0 0
        %3752 = vmatpush1.bf16.msra.mxu0 0
        %3753 = vmatprep.subr.bf16.mxu0 0
        %3754 = vmatpush1.bf16.msra.mxu0 0
        %3755 = vmatprep.subr.bf16.mxu0 0
        %3756 = vmatpush1.bf16.msra.mxu0 0
        %3757 = vmatprep.subr.bf16.mxu0 0
        %3758 = vmatpush1.bf16.msra.mxu0 0
        %3759 = vmatprep.subr.bf16.mxu0 0
        %3760 = vmatpush1.bf16.msra.mxu0 0
        %3761 = vmatprep.subr.bf16.mxu0 0
        %3762 = vmatpush1.bf16.msra.mxu0 0
        %3763 = vmatprep.subr.bf16.mxu0 0
        %3764 = vmatpush1.bf16.msra.mxu0 0
        %3765 = vmatprep.subr.bf16.mxu0 0
        %3766 = vmatpush1.bf16.msra.mxu0 0
        %3767 = vmatprep.subr.bf16.mxu0 0
        %3768 = vmatpush1.bf16.msra.mxu0 0
        %3769 = vmatprep.subr.bf16.mxu0 0
        %3770 = vmatpush1.bf16.msra.mxu0 0
        %3771 = vmatprep.subr.bf16.mxu0 0
        %3772 = vmatpush1.bf16.msra.mxu0 0
        %3773 = vmatprep.mubr.bf16.mxu0 0
        %3774 = vmatmul.mubr.bf16.gmra.mrb[0].mxu0 %v3736
        %v3775 = vpop.f32.mrb[0].mxu0
        %v3776 = vadd.f32 0.0, %v3775
        %v3777 = vpop.f32.mrb[0].mxu0
        %v3778 = vpop.f32.mrb[0].mxu0
        %v3779 = vpop.f32.mrb[0].mxu0
        %3780 = vdwg.mxu0
        %3781 = vrot.lane.b32.xlu0 %v1207, 112
        %v3782 = vpop.permute.xlu0 %3781
        %v3784 = vsel %vm1258, %v3538, 0
        %v3787 = vsel %vm1726, %v3782, 0
        %3789 = vmatprep.subr.bf16.mxu0 0
        %3790 = vmatpush1.bf16.msra.mxu0 %v3787
        %3791 = vmatprep.subr.bf16.mxu0 0
        %3792 = vmatpush1.bf16.msra.mxu0 0
        %3793 = vmatprep.subr.bf16.mxu0 0
        %3794 = vmatpush1.bf16.msra.mxu0 0
        %3795 = vmatprep.subr.bf16.mxu0 0
        %3796 = vmatpush1.bf16.msra.mxu0 0
        %3797 = vmatprep.subr.bf16.mxu0 0
        %3798 = vmatpush1.bf16.msra.mxu0 0
        %3799 = vmatprep.subr.bf16.mxu0 0
        %3800 = vmatpush1.bf16.msra.mxu0 0
        %3801 = vmatprep.subr.bf16.mxu0 0
        %3802 = vmatpush1.bf16.msra.mxu0 0
        %3803 = vmatprep.subr.bf16.mxu0 0
        %3804 = vmatpush1.bf16.msra.mxu0 0
        %3805 = vmatprep.subr.bf16.mxu0 0
        %3806 = vmatpush1.bf16.msra.mxu0 0
        %3807 = vmatprep.subr.bf16.mxu0 0
        %3808 = vmatpush1.bf16.msra.mxu0 0
        %3809 = vmatprep.subr.bf16.mxu0 0
        %3810 = vmatpush1.bf16.msra.mxu0 0
        %3811 = vmatprep.subr.bf16.mxu0 0
        %3812 = vmatpush1.bf16.msra.mxu0 0
        %3813 = vmatprep.subr.bf16.mxu0 0
        %3814 = vmatpush1.bf16.msra.mxu0 0
        %3815 = vmatprep.subr.bf16.mxu0 0
        %3816 = vmatpush1.bf16.msra.mxu0 0
        %3817 = vmatprep.subr.bf16.mxu0 0
        %3818 = vmatpush1.bf16.msra.mxu0 0
        %3819 = vmatprep.subr.bf16.mxu0 0
        %3820 = vmatpush1.bf16.msra.mxu0 0
        %3821 = vmatprep.mubr.bf16.mxu0 0
        %3822 = vmatmul.mubr.bf16.gmra.mrb[0].mxu0 %v3784
        %v3823 = vpop.f32.mrb[0].mxu0
        %v3824 = vadd.f32 0.0, %v3823
        %v3825 = vpop.f32.mrb[0].mxu0
        %v3826 = vpop.f32.mrb[0].mxu0
        %v3827 = vpop.f32.mrb[0].mxu0
        %3828 = vdwg.mxu0
        %3829 = vrot.lane.b32.xlu0 %v1208, 112
        %v3830 = vpop.permute.xlu0 %3829
        %v3832 = vsel %vm1258, %v3539, 0
        %v3835 = vsel %vm1726, %v3830, 0
        %3837 = vmatprep.subr.bf16.mxu0 0
        %3838 = vmatpush1.bf16.msra.mxu0 %v3835
        %3839 = vmatprep.subr.bf16.mxu0 0
        %3840 = vmatpush1.bf16.msra.mxu0 0
        %3841 = vmatprep.subr.bf16.mxu0 0
        %3842 = vmatpush1.bf16.msra.mxu0 0
        %3843 = vmatprep.subr.bf16.mxu0 0
        %3844 = vmatpush1.bf16.msra.mxu0 0
        %3845 = vmatprep.subr.bf16.mxu0 0
        %3846 = vmatpush1.bf16.msra.mxu0 0
        %3847 = vmatprep.subr.bf16.mxu0 0
        %3848 = vmatpush1.bf16.msra.mxu0 0
        %3849 = vmatprep.subr.bf16.mxu0 0
        %3850 = vmatpush1.bf16.msra.mxu0 0
        %3851 = vmatprep.subr.bf16.mxu0 0
        %3852 = vmatpush1.bf16.msra.mxu0 0
        %3853 = vmatprep.subr.bf16.mxu0 0
        %3854 = vmatpush1.bf16.msra.mxu0 0
        %3855 = vmatprep.subr.bf16.mxu0 0
        %3856 = vmatpush1.bf16.msra.mxu0 0
        %3857 = vmatprep.subr.bf16.mxu0 0
        %3858 = vmatpush1.bf16.msra.mxu0 0
        %3859 = vmatprep.subr.bf16.mxu0 0
        %3860 = vmatpush1.bf16.msra.mxu0 0
        %3861 = vmatprep.subr.bf16.mxu0 0
        %3862 = vmatpush1.bf16.msra.mxu0 0
        %3863 = vmatprep.subr.bf16.mxu0 0
        %3864 = vmatpush1.bf16.msra.mxu0 0
        %3865 = vmatprep.subr.bf16.mxu0 0
        %3866 = vmatpush1.bf16.msra.mxu0 0
        %3867 = vmatprep.subr.bf16.mxu0 0
        %3868 = vmatpush1.bf16.msra.mxu0 0
        %3869 = vmatprep.mubr.bf16.mxu0 0
        %3870 = vmatmul.mubr.bf16.gmra.mrb[0].mxu0 %v3832
        %v3871 = vpop.f32.mrb[0].mxu0
        %v3872 = vadd.f32 0.0, %v3871
        %v3873 = vpop.f32.mrb[0].mxu0
        %v3874 = vpop.f32.mrb[0].mxu0
        %v3875 = vpop.f32.mrb[0].mxu0
        %3876 = vdwg.mxu0
        %3877 = vrot.lane.b32.xlu0 %v1209, 112
        %v3878 = vpop.permute.xlu0 %3877
        %v3880 = vsel %vm1258, %v3540, 0
        %v3883 = vsel %vm1726, %v3878, 0
        %3885 = vmatprep.subr.bf16.mxu0 0
        %3886 = vmatpush1.bf16.msra.mxu0 %v3883
        %3887 = vmatprep.subr.bf16.mxu0 0
        %3888 = vmatpush1.bf16.msra.mxu0 0
        %3889 = vmatprep.subr.bf16.mxu0 0
        %3890 = vmatpush1.bf16.msra.mxu0 0
        %3891 = vmatprep.subr.bf16.mxu0 0
        %3892 = vmatpush1.bf16.msra.mxu0 0
        %3893 = vmatprep.subr.bf16.mxu0 0
        %3894 = vmatpush1.bf16.msra.mxu0 0
        %3895 = vmatprep.subr.bf16.mxu0 0
        %3896 = vmatpush1.bf16.msra.mxu0 0
        %3897 = vmatprep.subr.bf16.mxu0 0
        %3898 = vmatpush1.bf16.msra.mxu0 0
        %3899 = vmatprep.subr.bf16.mxu0 0
        %3900 = vmatpush1.bf16.msra.mxu0 0
        %3901 = vmatprep.subr.bf16.mxu0 0
        %3902 = vmatpush1.bf16.msra.mxu0 0
        %3903 = vmatprep.subr.bf16.mxu0 0
        %3904 = vmatpush1.bf16.msra.mxu0 0
        %3905 = vmatprep.subr.bf16.mxu0 0
        %3906 = vmatpush1.bf16.msra.mxu0 0
        %3907 = vmatprep.subr.bf16.mxu0 0
        %3908 = vmatpush1.bf16.msra.mxu0 0
        %3909 = vmatprep.subr.bf16.mxu0 0
        %3910 = vmatpush1.bf16.msra.mxu0 0
        %3911 = vmatprep.subr.bf16.mxu0 0
        %3912 = vmatpush1.bf16.msra.mxu0 0
        %3913 = vmatprep.subr.bf16.mxu0 0
        %3914 = vmatpush1.bf16.msra.mxu0 0
        %3915 = vmatprep.subr.bf16.mxu0 0
        %3916 = vmatpush1.bf16.msra.mxu0 0
        %3917 = vmatprep.mubr.bf16.mxu0 0
        %3918 = vmatmul.mubr.bf16.gmra.mrb[0].mxu0 %v3880
        %v3919 = vpop.f32.mrb[0].mxu0
        %v3920 = vadd.f32 0.0, %v3919
        %v3921 = vpop.f32.mrb[0].mxu0
        %v3922 = vpop.f32.mrb[0].mxu0
        %v3923 = vpop.f32.mrb[0].mxu0
        %3924 = vdwg.mxu0
        %3933 = vrot.lane.b32.xlu0 %v3584, 16
        %v3934 = vpop.permute.xlu0 %3933
        %3935 = vrot.lane.b32.xlu0 %v3632, 16
        %v3936 = vpop.permute.xlu0 %3935
        %3937 = vrot.lane.b32.xlu0 %v3680, 16
        %v3938 = vpop.permute.xlu0 %3937
        %3939 = vrot.lane.b32.xlu0 %v3728, 16
        %v3940 = vpop.permute.xlu0 %3939
        %3941 = vrot.lane.b32.xlu0 %v3776, 16
        %v3942 = vpop.permute.xlu0 %3941
        %3943 = vrot.lane.b32.xlu0 %v3824, 16
        %v3944 = vpop.permute.xlu0 %3943
        %3945 = vrot.lane.b32.xlu0 %v3872, 16
        %v3946 = vpop.permute.xlu0 %3945
        %3947 = vrot.lane.b32.xlu0 %v3920, 16
        %v3948 = vpop.permute.xlu0 %3947
        %vm3957 = vcmask 195712
        %3958 = vst.msk [vmem:[#allocation3] sm:$0xff] %vm3957, %v3934
        %3959 = vst.msk [vmem:[#allocation3 + $0x8] sm:$0xff] %vm3957, %v3936
        %3960 = vst.msk [vmem:[#allocation3 + $0x10] sm:$0xff] %vm3957, %v3938
        %3961 = vst.msk [vmem:[#allocation3 + $0x18] sm:$0xff] %vm3957, %v3940
        %3962 = vst.msk [vmem:[#allocation3 + $0x20] sm:$0xff] %vm3957, %v3942
        %3963 = vst.msk [vmem:[#allocation3 + $0x28] sm:$0xff] %vm3957, %v3944
        %3964 = vst.msk [vmem:[#allocation3 + $0x30] sm:$0xff] %vm3957, %v3946
        %3965 = vst.msk [vmem:[#allocation3 + $0x38] sm:$0xff] %vm3957, %v3948
        %3966 = vrot.lane.b32.xlu0 %v1186, 104
        %v3967 = vpop.permute.xlu0 %3966
        %3968 = vrot.lane.b32.xlu0 %v1194, 104
        %v3969 = vpop.permute.xlu0 %3968
        %v3971 = vsel %vm1258, %v3967, 0
        %v3974 = vsel %vm1258, %v3969, 0
        %3976 = vmatprep.subr.bf16.mxu0 0
        %3977 = vmatpush1.bf16.xpose.msra.mxu0 %v3974
        %3978 = vmatprep.subr.bf16.mxu0 0
        %3979 = vmatpush1.bf16.xpose.msra.mxu0 0
        %3980 = vmatprep.subr.bf16.mxu0 0
        %3981 = vmatpush1.bf16.xpose.msra.mxu0 0
        %3982 = vmatprep.subr.bf16.mxu0 0
        %3983 = vmatpush1.bf16.xpose.msra.mxu0 0
        %3984 = vmatprep.subr.bf16.mxu0 0
        %3985 = vmatpush1.bf16.xpose.msra.mxu0 0
        %3986 = vmatprep.subr.bf16.mxu0 0
        %3987 = vmatpush1.bf16.xpose.msra.mxu0 0
        %3988 = vmatprep.subr.bf16.mxu0 0
        %3989 = vmatpush1.bf16.xpose.msra.mxu0 0
        %3990 = vmatprep.subr.bf16.mxu0 0
        %3991 = vmatpush1.bf16.xpose.msra.mxu0 0
        %3992 = vmatprep.subr.bf16.mxu0 0
        %3993 = vmatpush1.bf16.xpose.msra.mxu0 0
        %3994 = vmatprep.subr.bf16.mxu0 0
        %3995 = vmatpush1.bf16.xpose.msra.mxu0 0
        %3996 = vmatprep.subr.bf16.mxu0 0
        %3997 = vmatpush1.bf16.xpose.msra.mxu0 0
        %3998 = vmatprep.subr.bf16.mxu0 0
        %3999 = vmatpush1.bf16.xpose.msra.mxu0 0
        %4000 = vmatprep.subr.bf16.mxu0 0
        %4001 = vmatpush1.bf16.xpose.msra.mxu0 0
        %4002 = vmatprep.subr.bf16.mxu0 0
        %4003 = vmatpush1.bf16.xpose.msra.mxu0 0
        %4004 = vmatprep.subr.bf16.mxu0 0
        %4005 = vmatpush1.bf16.xpose.msra.mxu0 0
        %4006 = vmatprep.subr.bf16.mxu0 0
        %4007 = vmatpush1.bf16.xpose.msra.mxu0 0
        %4008 = vmatprep.mubr.bf16.mxu0 0
        %4009 = vmatmul.mubr.bf16.gmra.mrb[0].mxu0 %v3971
        %v4010 = vpop.f32.mrb[0].mxu0
        %v4011 = vadd.f32 %v1221, %v4010
        %v4012 = vpop.f32.mrb[0].mxu0
        %v4013 = vpop.f32.mrb[0].mxu0
        %v4014 = vpop.f32.mrb[0].mxu0
        %4015 = vdwg.mxu0
        %4016 = vrot.lane.b32.xlu0 %v1187, 104
        %v4017 = vpop.permute.xlu0 %4016
        %4018 = vrot.lane.b32.xlu0 %v1195, 104
        %v4019 = vpop.permute.xlu0 %4018
        %v4021 = vsel %vm1258, %v4017, 0
        %v4024 = vsel %vm1258, %v4019, 0
        %4026 = vmatprep.subr.bf16.mxu0 0
        %4027 = vmatpush1.bf16.xpose.msra.mxu0 %v4024
        %4028 = vmatprep.subr.bf16.mxu0 0
        %4029 = vmatpush1.bf16.xpose.msra.mxu0 0
        %4030 = vmatprep.subr.bf16.mxu0 0
        %4031 = vmatpush1.bf16.xpose.msra.mxu0 0
        %4032 = vmatprep.subr.bf16.mxu0 0
        %4033 = vmatpush1.bf16.xpose.msra.mxu0 0
        %4034 = vmatprep.subr.bf16.mxu0 0
        %4035 = vmatpush1.bf16.xpose.msra.mxu0 0
        %4036 = vmatprep.subr.bf16.mxu0 0
        %4037 = vmatpush1.bf16.xpose.msra.mxu0 0
        %4038 = vmatprep.subr.bf16.mxu0 0
        %4039 = vmatpush1.bf16.xpose.msra.mxu0 0
        %4040 = vmatprep.subr.bf16.mxu0 0
        %4041 = vmatpush1.bf16.xpose.msra.mxu0 0
        %4042 = vmatprep.subr.bf16.mxu0 0
        %4043 = vmatpush1.bf16.xpose.msra.mxu0 0
        %4044 = vmatprep.subr.bf16.mxu0 0
        %4045 = vmatpush1.bf16.xpose.msra.mxu0 0
        %4046 = vmatprep.subr.bf16.mxu0 0
        %4047 = vmatpush1.bf16.xpose.msra.mxu0 0
        %4048 = vmatprep.subr.bf16.mxu0 0
        %4049 = vmatpush1.bf16.xpose.msra.mxu0 0
        %4050 = vmatprep.subr.bf16.mxu0 0
        %4051 = vmatpush1.bf16.xpose.msra.mxu0 0
        %4052 = vmatprep.subr.bf16.mxu0 0
        %4053 = vmatpush1.bf16.xpose.msra.mxu0 0
        %4054 = vmatprep.subr.bf16.mxu0 0
        %4055 = vmatpush1.bf16.xpose.msra.mxu0 0
        %4056 = vmatprep.subr.bf16.mxu0 0
        %4057 = vmatpush1.bf16.xpose.msra.mxu0 0
        %4058 = vmatprep.mubr.bf16.mxu0 0
        %4059 = vmatmul.mubr.bf16.gmra.mrb[0].mxu0 %v4021
        %v4060 = vpop.f32.mrb[0].mxu0
        %v4061 = vadd.f32 %v1225, %v4060
        %v4062 = vpop.f32.mrb[0].mxu0
        %v4063 = vpop.f32.mrb[0].mxu0
        %v4064 = vpop.f32.mrb[0].mxu0
        %4065 = vdwg.mxu0
        %4066 = vrot.lane.b32.xlu0 %v1188, 104
        %v4067 = vpop.permute.xlu0 %4066
        %4068 = vrot.lane.b32.xlu0 %v1196, 104
        %v4069 = vpop.permute.xlu0 %4068
        %v4071 = vsel %vm1258, %v4067, 0
        %v4074 = vsel %vm1258, %v4069, 0
        %4076 = vmatprep.subr.bf16.mxu0 0
        %4077 = vmatpush1.bf16.xpose.msra.mxu0 %v4074
        %4078 = vmatprep.subr.bf16.mxu0 0
        %4079 = vmatpush1.bf16.xpose.msra.mxu0 0
        %4080 = vmatprep.subr.bf16.mxu0 0
        %4081 = vmatpush1.bf16.xpose.msra.mxu0 0
        %4082 = vmatprep.subr.bf16.mxu0 0
        %4083 = vmatpush1.bf16.xpose.msra.mxu0 0
        %4084 = vmatprep.subr.bf16.mxu0 0
        %4085 = vmatpush1.bf16.xpose.msra.mxu0 0
        %4086 = vmatprep.subr.bf16.mxu0 0
        %4087 = vmatpush1.bf16.xpose.msra.mxu0 0
        %4088 = vmatprep.subr.bf16.mxu0 0
        %4089 = vmatpush1.bf16.xpose.msra.mxu0 0
        %4090 = vmatprep.subr.bf16.mxu0 0
        %4091 = vmatpush1.bf16.xpose.msra.mxu0 0
        %4092 = vmatprep.subr.bf16.mxu0 0
        %4093 = vmatpush1.bf16.xpose.msra.mxu0 0
        %4094 = vmatprep.subr.bf16.mxu0 0
        %4095 = vmatpush1.bf16.xpose.msra.mxu0 0
        %4096 = vmatprep.subr.bf16.mxu0 0
        %4097 = vmatpush1.bf16.xpose.msra.mxu0 0
        %4098 = vmatprep.subr.bf16.mxu0 0
        %4099 = vmatpush1.bf16.xpose.msra.mxu0 0
        %4100 = vmatprep.subr.bf16.mxu0 0
        %4101 = vmatpush1.bf16.xpose.msra.mxu0 0
        %4102 = vmatprep.subr.bf16.mxu0 0
        %4103 = vmatpush1.bf16.xpose.msra.mxu0 0
        %4104 = vmatprep.subr.bf16.mxu0 0
        %4105 = vmatpush1.bf16.xpose.msra.mxu0 0
        %4106 = vmatprep.subr.bf16.mxu0 0
        %4107 = vmatpush1.bf16.xpose.msra.mxu0 0
        %4108 = vmatprep.mubr.bf16.mxu0 0
        %4109 = vmatmul.mubr.bf16.gmra.mrb[0].mxu0 %v4071
        %v4110 = vpop.f32.mrb[0].mxu0
        %v4111 = vadd.f32 %v1229, %v4110
        %v4112 = vpop.f32.mrb[0].mxu0
        %v4113 = vpop.f32.mrb[0].mxu0
        %v4114 = vpop.f32.mrb[0].mxu0
        %4115 = vdwg.mxu0
        %4116 = vrot.lane.b32.xlu0 %v1189, 104
        %v4117 = vpop.permute.xlu0 %4116
        %4118 = vrot.lane.b32.xlu0 %v1197, 104
        %v4119 = vpop.permute.xlu0 %4118
        %v4121 = vsel %vm1258, %v4117, 0
        %v4124 = vsel %vm1258, %v4119, 0
        %4126 = vmatprep.subr.bf16.mxu0 0
        %4127 = vmatpush1.bf16.xpose.msra.mxu0 %v4124
        %4128 = vmatprep.subr.bf16.mxu0 0
        %4129 = vmatpush1.bf16.xpose.msra.mxu0 0
        %4130 = vmatprep.subr.bf16.mxu0 0
        %4131 = vmatpush1.bf16.xpose.msra.mxu0 0
        %4132 = vmatprep.subr.bf16.mxu0 0
        %4133 = vmatpush1.bf16.xpose.msra.mxu0 0
        %4134 = vmatprep.subr.bf16.mxu0 0
        %4135 = vmatpush1.bf16.xpose.msra.mxu0 0
        %4136 = vmatprep.subr.bf16.mxu0 0
        %4137 = vmatpush1.bf16.xpose.msra.mxu0 0
        %4138 = vmatprep.subr.bf16.mxu0 0
        %4139 = vmatpush1.bf16.xpose.msra.mxu0 0
        %4140 = vmatprep.subr.bf16.mxu0 0
        %4141 = vmatpush1.bf16.xpose.msra.mxu0 0
        %4142 = vmatprep.subr.bf16.mxu0 0
        %4143 = vmatpush1.bf16.xpose.msra.mxu0 0
        %4144 = vmatprep.subr.bf16.mxu0 0
        %4145 = vmatpush1.bf16.xpose.msra.mxu0 0
        %4146 = vmatprep.subr.bf16.mxu0 0
        %4147 = vmatpush1.bf16.xpose.msra.mxu0 0
        %4148 = vmatprep.subr.bf16.mxu0 0
        %4149 = vmatpush1.bf16.xpose.msra.mxu0 0
        %4150 = vmatprep.subr.bf16.mxu0 0
        %4151 = vmatpush1.bf16.xpose.msra.mxu0 0
        %4152 = vmatprep.subr.bf16.mxu0 0
        %4153 = vmatpush1.bf16.xpose.msra.mxu0 0
        %4154 = vmatprep.subr.bf16.mxu0 0
        %4155 = vmatpush1.bf16.xpose.msra.mxu0 0
        %4156 = vmatprep.subr.bf16.mxu0 0
        %4157 = vmatpush1.bf16.xpose.msra.mxu0 0
        %4158 = vmatprep.mubr.bf16.mxu0 0
        %4159 = vmatmul.mubr.bf16.gmra.mrb[0].mxu0 %v4121
        %v4160 = vpop.f32.mrb[0].mxu0
        %v4161 = vadd.f32 %v1233, %v4160
        %v4162 = vpop.f32.mrb[0].mxu0
        %v4163 = vpop.f32.mrb[0].mxu0
        %v4164 = vpop.f32.mrb[0].mxu0
        %4165 = vdwg.mxu0
        %4166 = vrot.lane.b32.xlu0 %v1190, 104
        %v4167 = vpop.permute.xlu0 %4166
        %4168 = vrot.lane.b32.xlu0 %v1198, 104
        %v4169 = vpop.permute.xlu0 %4168
        %v4171 = vsel %vm1258, %v4167, 0
        %v4174 = vsel %vm1258, %v4169, 0
        %4176 = vmatprep.subr.bf16.mxu0 0
        %4177 = vmatpush1.bf16.xpose.msra.mxu0 %v4174
        %4178 = vmatprep.subr.bf16.mxu0 0
        %4179 = vmatpush1.bf16.xpose.msra.mxu0 0
        %4180 = vmatprep.subr.bf16.mxu0 0
        %4181 = vmatpush1.bf16.xpose.msra.mxu0 0
        %4182 = vmatprep.subr.bf16.mxu0 0
        %4183 = vmatpush1.bf16.xpose.msra.mxu0 0
        %4184 = vmatprep.subr.bf16.mxu0 0
        %4185 = vmatpush1.bf16.xpose.msra.mxu0 0
        %4186 = vmatprep.subr.bf16.mxu0 0
        %4187 = vmatpush1.bf16.xpose.msra.mxu0 0
        %4188 = vmatprep.subr.bf16.mxu0 0
        %4189 = vmatpush1.bf16.xpose.msra.mxu0 0
        %4190 = vmatprep.subr.bf16.mxu0 0
        %4191 = vmatpush1.bf16.xpose.msra.mxu0 0
        %4192 = vmatprep.subr.bf16.mxu0 0
        %4193 = vmatpush1.bf16.xpose.msra.mxu0 0
        %4194 = vmatprep.subr.bf16.mxu0 0
        %4195 = vmatpush1.bf16.xpose.msra.mxu0 0
        %4196 = vmatprep.subr.bf16.mxu0 0
        %4197 = vmatpush1.bf16.xpose.msra.mxu0 0
        %4198 = vmatprep.subr.bf16.mxu0 0
        %4199 = vmatpush1.bf16.xpose.msra.mxu0 0
        %4200 = vmatprep.subr.bf16.mxu0 0
        %4201 = vmatpush1.bf16.xpose.msra.mxu0 0
        %4202 = vmatprep.subr.bf16.mxu0 0
        %4203 = vmatpush1.bf16.xpose.msra.mxu0 0
        %4204 = vmatprep.subr.bf16.mxu0 0
        %4205 = vmatpush1.bf16.xpose.msra.mxu0 0
        %4206 = vmatprep.subr.bf16.mxu0 0
        %4207 = vmatpush1.bf16.xpose.msra.mxu0 0
        %4208 = vmatprep.mubr.bf16.mxu0 0
        %4209 = vmatmul.mubr.bf16.gmra.mrb[0].mxu0 %v4171
        %v4210 = vpop.f32.mrb[0].mxu0
        %v4211 = vadd.f32 %v1237, %v4210
        %v4212 = vpop.f32.mrb[0].mxu0
        %v4213 = vpop.f32.mrb[0].mxu0
        %v4214 = vpop.f32.mrb[0].mxu0
        %4215 = vdwg.mxu0
        %4216 = vrot.lane.b32.xlu0 %v1191, 104
        %v4217 = vpop.permute.xlu0 %4216
        %4218 = vrot.lane.b32.xlu0 %v1199, 104
        %v4219 = vpop.permute.xlu0 %4218
        %v4221 = vsel %vm1258, %v4217, 0
        %v4224 = vsel %vm1258, %v4219, 0
        %4226 = vmatprep.subr.bf16.mxu0 0
        %4227 = vmatpush1.bf16.xpose.msra.mxu0 %v4224
        %4228 = vmatprep.subr.bf16.mxu0 0
        %4229 = vmatpush1.bf16.xpose.msra.mxu0 0
        %4230 = vmatprep.subr.bf16.mxu0 0
        %4231 = vmatpush1.bf16.xpose.msra.mxu0 0
        %4232 = vmatprep.subr.bf16.mxu0 0
        %4233 = vmatpush1.bf16.xpose.msra.mxu0 0
        %4234 = vmatprep.subr.bf16.mxu0 0
        %4235 = vmatpush1.bf16.xpose.msra.mxu0 0
        %4236 = vmatprep.subr.bf16.mxu0 0
        %4237 = vmatpush1.bf16.xpose.msra.mxu0 0
        %4238 = vmatprep.subr.bf16.mxu0 0
        %4239 = vmatpush1.bf16.xpose.msra.mxu0 0
        %4240 = vmatprep.subr.bf16.mxu0 0
        %4241 = vmatpush1.bf16.xpose.msra.mxu0 0
        %4242 = vmatprep.subr.bf16.mxu0 0
        %4243 = vmatpush1.bf16.xpose.msra.mxu0 0
        %4244 = vmatprep.subr.bf16.mxu0 0
        %4245 = vmatpush1.bf16.xpose.msra.mxu0 0
        %4246 = vmatprep.subr.bf16.mxu0 0
        %4247 = vmatpush1.bf16.xpose.msra.mxu0 0
        %4248 = vmatprep.subr.bf16.mxu0 0
        %4249 = vmatpush1.bf16.xpose.msra.mxu0 0
        %4250 = vmatprep.subr.bf16.mxu0 0
        %4251 = vmatpush1.bf16.xpose.msra.mxu0 0
        %4252 = vmatprep.subr.bf16.mxu0 0
        %4253 = vmatpush1.bf16.xpose.msra.mxu0 0
        %4254 = vmatprep.subr.bf16.mxu0 0
        %4255 = vmatpush1.bf16.xpose.msra.mxu0 0
        %4256 = vmatprep.subr.bf16.mxu0 0
        %4257 = vmatpush1.bf16.xpose.msra.mxu0 0
        %4258 = vmatprep.mubr.bf16.mxu0 0
        %4259 = vmatmul.mubr.bf16.gmra.mrb[0].mxu0 %v4221
        %v4260 = vpop.f32.mrb[0].mxu0
        %v4261 = vadd.f32 %v1241, %v4260
        %v4262 = vpop.f32.mrb[0].mxu0
        %v4263 = vpop.f32.mrb[0].mxu0
        %v4264 = vpop.f32.mrb[0].mxu0
        %4265 = vdwg.mxu0
        %4266 = vrot.lane.b32.xlu0 %v1192, 104
        %v4267 = vpop.permute.xlu0 %4266
        %4268 = vrot.lane.b32.xlu0 %v1200, 104
        %v4269 = vpop.permute.xlu0 %4268
        %v4271 = vsel %vm1258, %v4267, 0
        %v4274 = vsel %vm1258, %v4269, 0
        %4276 = vmatprep.subr.bf16.mxu0 0
        %4277 = vmatpush1.bf16.xpose.msra.mxu0 %v4274
        %4278 = vmatprep.subr.bf16.mxu0 0
        %4279 = vmatpush1.bf16.xpose.msra.mxu0 0
        %4280 = vmatprep.subr.bf16.mxu0 0
        %4281 = vmatpush1.bf16.xpose.msra.mxu0 0
        %4282 = vmatprep.subr.bf16.mxu0 0
        %4283 = vmatpush1.bf16.xpose.msra.mxu0 0
        %4284 = vmatprep.subr.bf16.mxu0 0
        %4285 = vmatpush1.bf16.xpose.msra.mxu0 0
        %4286 = vmatprep.subr.bf16.mxu0 0
        %4287 = vmatpush1.bf16.xpose.msra.mxu0 0
        %4288 = vmatprep.subr.bf16.mxu0 0
        %4289 = vmatpush1.bf16.xpose.msra.mxu0 0
        %4290 = vmatprep.subr.bf16.mxu0 0
        %4291 = vmatpush1.bf16.xpose.msra.mxu0 0
        %4292 = vmatprep.subr.bf16.mxu0 0
        %4293 = vmatpush1.bf16.xpose.msra.mxu0 0
        %4294 = vmatprep.subr.bf16.mxu0 0
        %4295 = vmatpush1.bf16.xpose.msra.mxu0 0
        %4296 = vmatprep.subr.bf16.mxu0 0
        %4297 = vmatpush1.bf16.xpose.msra.mxu0 0
        %4298 = vmatprep.subr.bf16.mxu0 0
        %4299 = vmatpush1.bf16.xpose.msra.mxu0 0
        %4300 = vmatprep.subr.bf16.mxu0 0
        %4301 = vmatpush1.bf16.xpose.msra.mxu0 0
        %4302 = vmatprep.subr.bf16.mxu0 0
        %4303 = vmatpush1.bf16.xpose.msra.mxu0 0
        %4304 = vmatprep.subr.bf16.mxu0 0
        %4305 = vmatpush1.bf16.xpose.msra.mxu0 0
        %4306 = vmatprep.subr.bf16.mxu0 0
        %4307 = vmatpush1.bf16.xpose.msra.mxu0 0
        %4308 = vmatprep.mubr.bf16.mxu0 0
        %4309 = vmatmul.mubr.bf16.gmra.mrb[0].mxu0 %v4271
        %v4310 = vpop.f32.mrb[0].mxu0
        %v4311 = vadd.f32 %v1245, %v4310
        %v4312 = vpop.f32.mrb[0].mxu0
        %v4313 = vpop.f32.mrb[0].mxu0
        %v4314 = vpop.f32.mrb[0].mxu0
        %4315 = vdwg.mxu0
        %4316 = vrot.lane.b32.xlu0 %v1193, 104
        %v4317 = vpop.permute.xlu0 %4316
        %4318 = vrot.lane.b32.xlu0 %v1201, 104
        %v4319 = vpop.permute.xlu0 %4318
        %v4321 = vsel %vm1258, %v4317, 0
        %v4324 = vsel %vm1258, %v4319, 0
        %4326 = vmatprep.subr.bf16.mxu0 0
        %4327 = vmatpush1.bf16.xpose.msra.mxu0 %v4324
        %4328 = vmatprep.subr.bf16.mxu0 0
        %4329 = vmatpush1.bf16.xpose.msra.mxu0 0
        %4330 = vmatprep.subr.bf16.mxu0 0
        %4331 = vmatpush1.bf16.xpose.msra.mxu0 0
        %4332 = vmatprep.subr.bf16.mxu0 0
        %4333 = vmatpush1.bf16.xpose.msra.mxu0 0
        %4334 = vmatprep.subr.bf16.mxu0 0
        %4335 = vmatpush1.bf16.xpose.msra.mxu0 0
        %4336 = vmatprep.subr.bf16.mxu0 0
        %4337 = vmatpush1.bf16.xpose.msra.mxu0 0
        %4338 = vmatprep.subr.bf16.mxu0 0
        %4339 = vmatpush1.bf16.xpose.msra.mxu0 0
        %4340 = vmatprep.subr.bf16.mxu0 0
        %4341 = vmatpush1.bf16.xpose.msra.mxu0 0
        %4342 = vmatprep.subr.bf16.mxu0 0
        %4343 = vmatpush1.bf16.xpose.msra.mxu0 0
        %4344 = vmatprep.subr.bf16.mxu0 0
        %4345 = vmatpush1.bf16.xpose.msra.mxu0 0
        %4346 = vmatprep.subr.bf16.mxu0 0
        %4347 = vmatpush1.bf16.xpose.msra.mxu0 0
        %4348 = vmatprep.subr.bf16.mxu0 0
        %4349 = vmatpush1.bf16.xpose.msra.mxu0 0
        %4350 = vmatprep.subr.bf16.mxu0 0
        %4351 = vmatpush1.bf16.xpose.msra.mxu0 0
        %4352 = vmatprep.subr.bf16.mxu0 0
        %4353 = vmatpush1.bf16.xpose.msra.mxu0 0
        %4354 = vmatprep.subr.bf16.mxu0 0
        %4355 = vmatpush1.bf16.xpose.msra.mxu0 0
        %4356 = vmatprep.subr.bf16.mxu0 0
        %4357 = vmatpush1.bf16.xpose.msra.mxu0 0
        %4358 = vmatprep.mubr.bf16.mxu0 0
        %4359 = vmatmul.mubr.bf16.gmra.mrb[0].mxu0 %v4321
        %v4360 = vpop.f32.mrb[0].mxu0
        %v4361 = vadd.f32 %v1249, %v4360
        %v4362 = vpop.f32.mrb[0].mxu0
        %v4363 = vpop.f32.mrb[0].mxu0
        %v4364 = vpop.f32.mrb[0].mxu0
        %4365 = vdwg.mxu0
        %v4366 = vsel %vm1258, %v4011, -inf
        %4367 = vmax.xlane.f32.xlu0 %v4366
        %v4368 = vpop.xlane.xlu0 %4367
        %v4369 = vsel %vm1258, %v4061, -inf
        %4370 = vmax.xlane.f32.xlu0 %v4369
        %v4371 = vpop.xlane.xlu0 %4370
        %v4372 = vsel %vm1258, %v4111, -inf
        %4373 = vmax.xlane.f32.xlu0 %v4372
        %v4374 = vpop.xlane.xlu0 %4373
        %v4375 = vsel %vm1258, %v4161, -inf
        %4376 = vmax.xlane.f32.xlu0 %v4375
        %v4377 = vpop.xlane.xlu0 %4376
        %v4378 = vsel %vm1258, %v4211, -inf
        %4379 = vmax.xlane.f32.xlu0 %v4378
        %v4380 = vpop.xlane.xlu0 %4379
        %v4381 = vsel %vm1258, %v4261, -inf
        %4382 = vmax.xlane.f32.xlu0 %v4381
        %v4383 = vpop.xlane.xlu0 %4382
        %v4384 = vsel %vm1258, %v4311, -inf
        %4385 = vmax.xlane.f32.xlu0 %v4384
        %v4386 = vpop.xlane.xlu0 %4385
        %v4387 = vsel %vm1258, %v4361, -inf
        %4388 = vmax.xlane.f32.xlu0 %v4387
        %v4389 = vpop.xlane.xlu0 %4388
        %v4390 = vsub.f32 %v4011, %v4368
        %v4391 = vsub.f32 %v4061, %v4371
        %v4392 = vsub.f32 %v4111, %v4374
        %v4393 = vsub.f32 %v4161, %v4377
        %v4394 = vsub.f32 %v4211, %v4380
        %v4395 = vsub.f32 %v4261, %v4383
        %v4396 = vsub.f32 %v4311, %v4386
        %v4397 = vsub.f32 %v4361, %v4389
        %v4398 = vmul.f32 %v4390, 1.442695
        %v4399 = vpow.pop %v4398
        %v4400 = vmul.f32 %v4391, 1.442695
        %v4401 = vpow.pop %v4400
        %v4402 = vmul.f32 %v4392, 1.442695
        %v4403 = vpow.pop %v4402
        %v4404 = vmul.f32 %v4393, 1.442695
        %v4405 = vpow.pop %v4404
        %v4406 = vmul.f32 %v4394, 1.442695
        %v4407 = vpow.pop %v4406
        %v4408 = vmul.f32 %v4395, 1.442695
        %v4409 = vpow.pop %v4408
        %v4410 = vmul.f32 %v4396, 1.442695
        %v4411 = vpow.pop %v4410
        %v4412 = vmul.f32 %v4397, 1.442695
        %v4413 = vpow.pop %v4412
        %v4414 = vsel %vm1258, %v4399, 0.0
        %4415 = vadd.xlane.f32.xlu0 %v4414
        %v4416 = vpop.xlane.xlu0 %4415
        %v4417 = vsel %vm1258, %v4401, 0.0
        %4418 = vadd.xlane.f32.xlu0 %v4417
        %v4419 = vpop.xlane.xlu0 %4418
        %v4420 = vsel %vm1258, %v4403, 0.0
        %4421 = vadd.xlane.f32.xlu0 %v4420
        %v4422 = vpop.xlane.xlu0 %4421
        %v4423 = vsel %vm1258, %v4405, 0.0
        %4424 = vadd.xlane.f32.xlu0 %v4423
        %v4425 = vpop.xlane.xlu0 %4424
        %v4426 = vsel %vm1258, %v4407, 0.0
        %4427 = vadd.xlane.f32.xlu0 %v4426
        %v4428 = vpop.xlane.xlu0 %4427
        %v4429 = vsel %vm1258, %v4409, 0.0
        %4430 = vadd.xlane.f32.xlu0 %v4429
        %v4431 = vpop.xlane.xlu0 %4430
        %v4432 = vsel %vm1258, %v4411, 0.0
        %4433 = vadd.xlane.f32.xlu0 %v4432
        %v4434 = vpop.xlane.xlu0 %4433
        %v4435 = vsel %vm1258, %v4413, 0.0
        %4436 = vadd.xlane.f32.xlu0 %v4435
        %v4437 = vpop.xlane.xlu0 %4436
        %v4438 = vrcp.pop %v4416
        %v4439 = vrcp.pop %v4419
        %v4440 = vrcp.pop %v4422
        %v4441 = vrcp.pop %v4425
        %v4442 = vrcp.pop %v4428
        %v4443 = vrcp.pop %v4431
        %v4444 = vrcp.pop %v4434
        %v4445 = vrcp.pop %v4437
        %v4446 = vmul.f32 %v4399, %v4438
        %v4447 = vmul.f32 %v4401, %v4439
        %v4448 = vmul.f32 %v4403, %v4440
        %v4449 = vmul.f32 %v4405, %v4441
        %v4450 = vmul.f32 %v4407, %v4442
        %v4451 = vmul.f32 %v4409, %v4443
        %v4452 = vmul.f32 %v4411, %v4444
        %v4453 = vmul.f32 %v4413, %v4445
        %v4454 = vpack.c.bf16 %v4446, %v4446
        %v4455 = vpack.c.bf16 %v4447, %v4447
        %v4456 = vpack.c.bf16 %v4448, %v4448
        %v4457 = vpack.c.bf16 %v4449, %v4449
        %v4458 = vpack.c.bf16 %v4450, %v4450
        %v4459 = vpack.c.bf16 %v4451, %v4451
        %v4460 = vpack.c.bf16 %v4452, %v4452
        %v4461 = vpack.c.bf16 %v4453, %v4453
        %4462 = vrot.lane.b32.xlu0 %v1202, 104
        %v4463 = vpop.permute.xlu0 %4462
        %v4465 = vsel %vm1258, %v4454, 0
        %v4468 = vsel %vm1726, %v4463, 0
        %4470 = vmatprep.subr.bf16.mxu0 0
        %4471 = vmatpush1.bf16.msra.mxu0 %v4468
        %4472 = vmatprep.subr.bf16.mxu0 0
        %4473 = vmatpush1.bf16.msra.mxu0 0
        %4474 = vmatprep.subr.bf16.mxu0 0
        %4475 = vmatpush1.bf16.msra.mxu0 0
        %4476 = vmatprep.subr.bf16.mxu0 0
        %4477 = vmatpush1.bf16.msra.mxu0 0
        %4478 = vmatprep.subr.bf16.mxu0 0
        %4479 = vmatpush1.bf16.msra.mxu0 0
        %4480 = vmatprep.subr.bf16.mxu0 0
        %4481 = vmatpush1.bf16.msra.mxu0 0
        %4482 = vmatprep.subr.bf16.mxu0 0
        %4483 = vmatpush1.bf16.msra.mxu0 0
        %4484 = vmatprep.subr.bf16.mxu0 0
        %4485 = vmatpush1.bf16.msra.mxu0 0
        %4486 = vmatprep.subr.bf16.mxu0 0
        %4487 = vmatpush1.bf16.msra.mxu0 0
        %4488 = vmatprep.subr.bf16.mxu0 0
        %4489 = vmatpush1.bf16.msra.mxu0 0
        %4490 = vmatprep.subr.bf16.mxu0 0
        %4491 = vmatpush1.bf16.msra.mxu0 0
        %4492 = vmatprep.subr.bf16.mxu0 0
        %4493 = vmatpush1.bf16.msra.mxu0 0
        %4494 = vmatprep.subr.bf16.mxu0 0
        %4495 = vmatpush1.bf16.msra.mxu0 0
        %4496 = vmatprep.subr.bf16.mxu0 0
        %4497 = vmatpush1.bf16.msra.mxu0 0
        %4498 = vmatprep.subr.bf16.mxu0 0
        %4499 = vmatpush1.bf16.msra.mxu0 0
        %4500 = vmatprep.subr.bf16.mxu0 0
        %4501 = vmatpush1.bf16.msra.mxu0 0
        %4502 = vmatprep.mubr.bf16.mxu0 0
        %4503 = vmatmul.mubr.bf16.gmra.mrb[0].mxu0 %v4465
        %v4504 = vpop.f32.mrb[0].mxu0
        %v4505 = vadd.f32 0.0, %v4504
        %v4506 = vpop.f32.mrb[0].mxu0
        %v4507 = vpop.f32.mrb[0].mxu0
        %v4508 = vpop.f32.mrb[0].mxu0
        %4509 = vdwg.mxu0
        %4510 = vrot.lane.b32.xlu0 %v1203, 104
        %v4511 = vpop.permute.xlu0 %4510
        %v4513 = vsel %vm1258, %v4455, 0
        %v4516 = vsel %vm1726, %v4511, 0
        %4518 = vmatprep.subr.bf16.mxu0 0
        %4519 = vmatpush1.bf16.msra.mxu0 %v4516
        %4520 = vmatprep.subr.bf16.mxu0 0
        %4521 = vmatpush1.bf16.msra.mxu0 0
        %4522 = vmatprep.subr.bf16.mxu0 0
        %4523 = vmatpush1.bf16.msra.mxu0 0
        %4524 = vmatprep.subr.bf16.mxu0 0
        %4525 = vmatpush1.bf16.msra.mxu0 0
        %4526 = vmatprep.subr.bf16.mxu0 0
        %4527 = vmatpush1.bf16.msra.mxu0 0
        %4528 = vmatprep.subr.bf16.mxu0 0
        %4529 = vmatpush1.bf16.msra.mxu0 0
        %4530 = vmatprep.subr.bf16.mxu0 0
        %4531 = vmatpush1.bf16.msra.mxu0 0
        %4532 = vmatprep.subr.bf16.mxu0 0
        %4533 = vmatpush1.bf16.msra.mxu0 0
        %4534 = vmatprep.subr.bf16.mxu0 0
        %4535 = vmatpush1.bf16.msra.mxu0 0
        %4536 = vmatprep.subr.bf16.mxu0 0
        %4537 = vmatpush1.bf16.msra.mxu0 0
        %4538 = vmatprep.subr.bf16.mxu0 0
        %4539 = vmatpush1.bf16.msra.mxu0 0
        %4540 = vmatprep.subr.bf16.mxu0 0
        %4541 = vmatpush1.bf16.msra.mxu0 0
        %4542 = vmatprep.subr.bf16.mxu0 0
        %4543 = vmatpush1.bf16.msra.mxu0 0
        %4544 = vmatprep.subr.bf16.mxu0 0
        %4545 = vmatpush1.bf16.msra.mxu0 0
        %4546 = vmatprep.subr.bf16.mxu0 0
        %4547 = vmatpush1.bf16.msra.mxu0 0
        %4548 = vmatprep.subr.bf16.mxu0 0
        %4549 = vmatpush1.bf16.msra.mxu0 0
        %4550 = vmatprep.mubr.bf16.mxu0 0
        %4551 = vmatmul.mubr.bf16.gmra.mrb[0].mxu0 %v4513
        %v4552 = vpop.f32.mrb[0].mxu0
        %v4553 = vadd.f32 0.0, %v4552
        %v4554 = vpop.f32.mrb[0].mxu0
        %v4555 = vpop.f32.mrb[0].mxu0
        %v4556 = vpop.f32.mrb[0].mxu0
        %4557 = vdwg.mxu0
        %4558 = vrot.lane.b32.xlu0 %v1204, 104
        %v4559 = vpop.permute.xlu0 %4558
        %v4561 = vsel %vm1258, %v4456, 0
        %v4564 = vsel %vm1726, %v4559, 0
        %4566 = vmatprep.subr.bf16.mxu0 0
        %4567 = vmatpush1.bf16.msra.mxu0 %v4564
        %4568 = vmatprep.subr.bf16.mxu0 0
        %4569 = vmatpush1.bf16.msra.mxu0 0
        %4570 = vmatprep.subr.bf16.mxu0 0
        %4571 = vmatpush1.bf16.msra.mxu0 0
        %4572 = vmatprep.subr.bf16.mxu0 0
        %4573 = vmatpush1.bf16.msra.mxu0 0
        %4574 = vmatprep.subr.bf16.mxu0 0
        %4575 = vmatpush1.bf16.msra.mxu0 0
        %4576 = vmatprep.subr.bf16.mxu0 0
        %4577 = vmatpush1.bf16.msra.mxu0 0
        %4578 = vmatprep.subr.bf16.mxu0 0
        %4579 = vmatpush1.bf16.msra.mxu0 0
        %4580 = vmatprep.subr.bf16.mxu0 0
        %4581 = vmatpush1.bf16.msra.mxu0 0
        %4582 = vmatprep.subr.bf16.mxu0 0
        %4583 = vmatpush1.bf16.msra.mxu0 0
        %4584 = vmatprep.subr.bf16.mxu0 0
        %4585 = vmatpush1.bf16.msra.mxu0 0
        %4586 = vmatprep.subr.bf16.mxu0 0
        %4587 = vmatpush1.bf16.msra.mxu0 0
        %4588 = vmatprep.subr.bf16.mxu0 0
        %4589 = vmatpush1.bf16.msra.mxu0 0
        %4590 = vmatprep.subr.bf16.mxu0 0
        %4591 = vmatpush1.bf16.msra.mxu0 0
        %4592 = vmatprep.subr.bf16.mxu0 0
        %4593 = vmatpush1.bf16.msra.mxu0 0
        %4594 = vmatprep.subr.bf16.mxu0 0
        %4595 = vmatpush1.bf16.msra.mxu0 0
        %4596 = vmatprep.subr.bf16.mxu0 0
        %4597 = vmatpush1.bf16.msra.mxu0 0
        %4598 = vmatprep.mubr.bf16.mxu0 0
        %4599 = vmatmul.mubr.bf16.gmra.mrb[0].mxu0 %v4561
        %v4600 = vpop.f32.mrb[0].mxu0
        %v4601 = vadd.f32 0.0, %v4600
        %v4602 = vpop.f32.mrb[0].mxu0
        %v4603 = vpop.f32.mrb[0].mxu0
        %v4604 = vpop.f32.mrb[0].mxu0
        %4605 = vdwg.mxu0
        %4606 = vrot.lane.b32.xlu0 %v1205, 104
        %v4607 = vpop.permute.xlu0 %4606
        %v4609 = vsel %vm1258, %v4457, 0
        %v4612 = vsel %vm1726, %v4607, 0
        %4614 = vmatprep.subr.bf16.mxu0 0
        %4615 = vmatpush1.bf16.msra.mxu0 %v4612
        %4616 = vmatprep.subr.bf16.mxu0 0
        %4617 = vmatpush1.bf16.msra.mxu0 0
        %4618 = vmatprep.subr.bf16.mxu0 0
        %4619 = vmatpush1.bf16.msra.mxu0 0
        %4620 = vmatprep.subr.bf16.mxu0 0
        %4621 = vmatpush1.bf16.msra.mxu0 0
        %4622 = vmatprep.subr.bf16.mxu0 0
        %4623 = vmatpush1.bf16.msra.mxu0 0
        %4624 = vmatprep.subr.bf16.mxu0 0
        %4625 = vmatpush1.bf16.msra.mxu0 0
        %4626 = vmatprep.subr.bf16.mxu0 0
        %4627 = vmatpush1.bf16.msra.mxu0 0
        %4628 = vmatprep.subr.bf16.mxu0 0
        %4629 = vmatpush1.bf16.msra.mxu0 0
        %4630 = vmatprep.subr.bf16.mxu0 0
        %4631 = vmatpush1.bf16.msra.mxu0 0
        %4632 = vmatprep.subr.bf16.mxu0 0
        %4633 = vmatpush1.bf16.msra.mxu0 0
        %4634 = vmatprep.subr.bf16.mxu0 0
        %4635 = vmatpush1.bf16.msra.mxu0 0
        %4636 = vmatprep.subr.bf16.mxu0 0
        %4637 = vmatpush1.bf16.msra.mxu0 0
        %4638 = vmatprep.subr.bf16.mxu0 0
        %4639 = vmatpush1.bf16.msra.mxu0 0
        %4640 = vmatprep.subr.bf16.mxu0 0
        %4641 = vmatpush1.bf16.msra.mxu0 0
        %4642 = vmatprep.subr.bf16.mxu0 0
        %4643 = vmatpush1.bf16.msra.mxu0 0
        %4644 = vmatprep.subr.bf16.mxu0 0
        %4645 = vmatpush1.bf16.msra.mxu0 0
        %4646 = vmatprep.mubr.bf16.mxu0 0
        %4647 = vmatmul.mubr.bf16.gmra.mrb[0].mxu0 %v4609
        %v4648 = vpop.f32.mrb[0].mxu0
        %v4649 = vadd.f32 0.0, %v4648
        %v4650 = vpop.f32.mrb[0].mxu0
        %v4651 = vpop.f32.mrb[0].mxu0
        %v4652 = vpop.f32.mrb[0].mxu0
        %4653 = vdwg.mxu0
        %4654 = vrot.lane.b32.xlu0 %v1206, 104
        %v4655 = vpop.permute.xlu0 %4654
        %v4657 = vsel %vm1258, %v4458, 0
        %v4660 = vsel %vm1726, %v4655, 0
        %4662 = vmatprep.subr.bf16.mxu0 0
        %4663 = vmatpush1.bf16.msra.mxu0 %v4660
        %4664 = vmatprep.subr.bf16.mxu0 0
        %4665 = vmatpush1.bf16.msra.mxu0 0
        %4666 = vmatprep.subr.bf16.mxu0 0
        %4667 = vmatpush1.bf16.msra.mxu0 0
        %4668 = vmatprep.subr.bf16.mxu0 0
        %4669 = vmatpush1.bf16.msra.mxu0 0
        %4670 = vmatprep.subr.bf16.mxu0 0
        %4671 = vmatpush1.bf16.msra.mxu0 0
        %4672 = vmatprep.subr.bf16.mxu0 0
        %4673 = vmatpush1.bf16.msra.mxu0 0
        %4674 = vmatprep.subr.bf16.mxu0 0
        %4675 = vmatpush1.bf16.msra.mxu0 0
        %4676 = vmatprep.subr.bf16.mxu0 0
        %4677 = vmatpush1.bf16.msra.mxu0 0
        %4678 = vmatprep.subr.bf16.mxu0 0
        %4679 = vmatpush1.bf16.msra.mxu0 0
        %4680 = vmatprep.subr.bf16.mxu0 0
        %4681 = vmatpush1.bf16.msra.mxu0 0
        %4682 = vmatprep.subr.bf16.mxu0 0
        %4683 = vmatpush1.bf16.msra.mxu0 0
        %4684 = vmatprep.subr.bf16.mxu0 0
        %4685 = vmatpush1.bf16.msra.mxu0 0
        %4686 = vmatprep.subr.bf16.mxu0 0
        %4687 = vmatpush1.bf16.msra.mxu0 0
        %4688 = vmatprep.subr.bf16.mxu0 0
        %4689 = vmatpush1.bf16.msra.mxu0 0
        %4690 = vmatprep.subr.bf16.mxu0 0
        %4691 = vmatpush1.bf16.msra.mxu0 0
        %4692 = vmatprep.subr.bf16.mxu0 0
        %4693 = vmatpush1.bf16.msra.mxu0 0
        %4694 = vmatprep.mubr.bf16.mxu0 0
        %4695 = vmatmul.mubr.bf16.gmra.mrb[0].mxu0 %v4657
        %v4696 = vpop.f32.mrb[0].mxu0
        %v4697 = vadd.f32 0.0, %v4696
        %v4698 = vpop.f32.mrb[0].mxu0
        %v4699 = vpop.f32.mrb[0].mxu0
        %v4700 = vpop.f32.mrb[0].mxu0
        %4701 = vdwg.mxu0
        %4702 = vrot.lane.b32.xlu0 %v1207, 104
        %v4703 = vpop.permute.xlu0 %4702
        %v4705 = vsel %vm1258, %v4459, 0
        %v4708 = vsel %vm1726, %v4703, 0
        %4710 = vmatprep.subr.bf16.mxu0 0
        %4711 = vmatpush1.bf16.msra.mxu0 %v4708
        %4712 = vmatprep.subr.bf16.mxu0 0
        %4713 = vmatpush1.bf16.msra.mxu0 0
        %4714 = vmatprep.subr.bf16.mxu0 0
        %4715 = vmatpush1.bf16.msra.mxu0 0
        %4716 = vmatprep.subr.bf16.mxu0 0
        %4717 = vmatpush1.bf16.msra.mxu0 0
        %4718 = vmatprep.subr.bf16.mxu0 0
        %4719 = vmatpush1.bf16.msra.mxu0 0
        %4720 = vmatprep.subr.bf16.mxu0 0
        %4721 = vmatpush1.bf16.msra.mxu0 0
        %4722 = vmatprep.subr.bf16.mxu0 0
        %4723 = vmatpush1.bf16.msra.mxu0 0
        %4724 = vmatprep.subr.bf16.mxu0 0
        %4725 = vmatpush1.bf16.msra.mxu0 0
        %4726 = vmatprep.subr.bf16.mxu0 0
        %4727 = vmatpush1.bf16.msra.mxu0 0
        %4728 = vmatprep.subr.bf16.mxu0 0
        %4729 = vmatpush1.bf16.msra.mxu0 0
        %4730 = vmatprep.subr.bf16.mxu0 0
        %4731 = vmatpush1.bf16.msra.mxu0 0
        %4732 = vmatprep.subr.bf16.mxu0 0
        %4733 = vmatpush1.bf16.msra.mxu0 0
        %4734 = vmatprep.subr.bf16.mxu0 0
        %4735 = vmatpush1.bf16.msra.mxu0 0
        %4736 = vmatprep.subr.bf16.mxu0 0
        %4737 = vmatpush1.bf16.msra.mxu0 0
        %4738 = vmatprep.subr.bf16.mxu0 0
        %4739 = vmatpush1.bf16.msra.mxu0 0
        %4740 = vmatprep.subr.bf16.mxu0 0
        %4741 = vmatpush1.bf16.msra.mxu0 0
        %4742 = vmatprep.mubr.bf16.mxu0 0
        %4743 = vmatmul.mubr.bf16.gmra.mrb[0].mxu0 %v4705
        %v4744 = vpop.f32.mrb[0].mxu0
        %v4745 = vadd.f32 0.0, %v4744
        %v4746 = vpop.f32.mrb[0].mxu0
        %v4747 = vpop.f32.mrb[0].mxu0
        %v4748 = vpop.f32.mrb[0].mxu0
        %4749 = vdwg.mxu0
        %4750 = vrot.lane.b32.xlu0 %v1208, 104
        %v4751 = vpop.permute.xlu0 %4750
        %v4753 = vsel %vm1258, %v4460, 0
        %v4756 = vsel %vm1726, %v4751, 0
        %4758 = vmatprep.subr.bf16.mxu0 0
        %4759 = vmatpush1.bf16.msra.mxu0 %v4756
        %4760 = vmatprep.subr.bf16.mxu0 0
        %4761 = vmatpush1.bf16.msra.mxu0 0
        %4762 = vmatprep.subr.bf16.mxu0 0
        %4763 = vmatpush1.bf16.msra.mxu0 0
        %4764 = vmatprep.subr.bf16.mxu0 0
        %4765 = vmatpush1.bf16.msra.mxu0 0
        %4766 = vmatprep.subr.bf16.mxu0 0
        %4767 = vmatpush1.bf16.msra.mxu0 0
        %4768 = vmatprep.subr.bf16.mxu0 0
        %4769 = vmatpush1.bf16.msra.mxu0 0
        %4770 = vmatprep.subr.bf16.mxu0 0
        %4771 = vmatpush1.bf16.msra.mxu0 0
        %4772 = vmatprep.subr.bf16.mxu0 0
        %4773 = vmatpush1.bf16.msra.mxu0 0
        %4774 = vmatprep.subr.bf16.mxu0 0
        %4775 = vmatpush1.bf16.msra.mxu0 0
        %4776 = vmatprep.subr.bf16.mxu0 0
        %4777 = vmatpush1.bf16.msra.mxu0 0
        %4778 = vmatprep.subr.bf16.mxu0 0
        %4779 = vmatpush1.bf16.msra.mxu0 0
        %4780 = vmatprep.subr.bf16.mxu0 0
        %4781 = vmatpush1.bf16.msra.mxu0 0
        %4782 = vmatprep.subr.bf16.mxu0 0
        %4783 = vmatpush1.bf16.msra.mxu0 0
        %4784 = vmatprep.subr.bf16.mxu0 0
        %4785 = vmatpush1.bf16.msra.mxu0 0
        %4786 = vmatprep.subr.bf16.mxu0 0
        %4787 = vmatpush1.bf16.msra.mxu0 0
        %4788 = vmatprep.subr.bf16.mxu0 0
        %4789 = vmatpush1.bf16.msra.mxu0 0
        %4790 = vmatprep.mubr.bf16.mxu0 0
        %4791 = vmatmul.mubr.bf16.gmra.mrb[0].mxu0 %v4753
        %v4792 = vpop.f32.mrb[0].mxu0
        %v4793 = vadd.f32 0.0, %v4792
        %v4794 = vpop.f32.mrb[0].mxu0
        %v4795 = vpop.f32.mrb[0].mxu0
        %v4796 = vpop.f32.mrb[0].mxu0
        %4797 = vdwg.mxu0
        %4798 = vrot.lane.b32.xlu0 %v1209, 104
        %v4799 = vpop.permute.xlu0 %4798
        %v4801 = vsel %vm1258, %v4461, 0
        %v4804 = vsel %vm1726, %v4799, 0
        %4806 = vmatprep.subr.bf16.mxu0 0
        %4807 = vmatpush1.bf16.msra.mxu0 %v4804
        %4808 = vmatprep.subr.bf16.mxu0 0
        %4809 = vmatpush1.bf16.msra.mxu0 0
        %4810 = vmatprep.subr.bf16.mxu0 0
        %4811 = vmatpush1.bf16.msra.mxu0 0
        %4812 = vmatprep.subr.bf16.mxu0 0
        %4813 = vmatpush1.bf16.msra.mxu0 0
        %4814 = vmatprep.subr.bf16.mxu0 0
        %4815 = vmatpush1.bf16.msra.mxu0 0
        %4816 = vmatprep.subr.bf16.mxu0 0
        %4817 = vmatpush1.bf16.msra.mxu0 0
        %4818 = vmatprep.subr.bf16.mxu0 0
        %4819 = vmatpush1.bf16.msra.mxu0 0
        %4820 = vmatprep.subr.bf16.mxu0 0
        %4821 = vmatpush1.bf16.msra.mxu0 0
        %4822 = vmatprep.subr.bf16.mxu0 0
        %4823 = vmatpush1.bf16.msra.mxu0 0
        %4824 = vmatprep.subr.bf16.mxu0 0
        %4825 = vmatpush1.bf16.msra.mxu0 0
        %4826 = vmatprep.subr.bf16.mxu0 0
        %4827 = vmatpush1.bf16.msra.mxu0 0
        %4828 = vmatprep.subr.bf16.mxu0 0
        %4829 = vmatpush1.bf16.msra.mxu0 0
        %4830 = vmatprep.subr.bf16.mxu0 0
        %4831 = vmatpush1.bf16.msra.mxu0 0
        %4832 = vmatprep.subr.bf16.mxu0 0
        %4833 = vmatpush1.bf16.msra.mxu0 0
        %4834 = vmatprep.subr.bf16.mxu0 0
        %4835 = vmatpush1.bf16.msra.mxu0 0
        %4836 = vmatprep.subr.bf16.mxu0 0
        %4837 = vmatpush1.bf16.msra.mxu0 0
        %4838 = vmatprep.mubr.bf16.mxu0 0
        %4839 = vmatmul.mubr.bf16.gmra.mrb[0].mxu0 %v4801
        %v4840 = vpop.f32.mrb[0].mxu0
        %v4841 = vadd.f32 0.0, %v4840
        %v4842 = vpop.f32.mrb[0].mxu0
        %v4843 = vpop.f32.mrb[0].mxu0
        %v4844 = vpop.f32.mrb[0].mxu0
        %4845 = vdwg.mxu0
        %4854 = vrot.lane.b32.xlu0 %v4505, 24
        %v4855 = vpop.permute.xlu0 %4854
        %4856 = vrot.lane.b32.xlu0 %v4553, 24
        %v4857 = vpop.permute.xlu0 %4856
        %4858 = vrot.lane.b32.xlu0 %v4601, 24
        %v4859 = vpop.permute.xlu0 %4858
        %4860 = vrot.lane.b32.xlu0 %v4649, 24
        %v4861 = vpop.permute.xlu0 %4860
        %4862 = vrot.lane.b32.xlu0 %v4697, 24
        %v4863 = vpop.permute.xlu0 %4862
        %4864 = vrot.lane.b32.xlu0 %v4745, 24
        %v4865 = vpop.permute.xlu0 %4864
        %4866 = vrot.lane.b32.xlu0 %v4793, 24
        %v4867 = vpop.permute.xlu0 %4866
        %4868 = vrot.lane.b32.xlu0 %v4841, 24
        %v4869 = vpop.permute.xlu0 %4868
        %vm4878 = vcmask 261312
        %4879 = vst.msk [vmem:[#allocation3] sm:$0xff] %vm4878, %v4855
        %4880 = vst.msk [vmem:[#allocation3 + $0x8] sm:$0xff] %vm4878, %v4857
        %4881 = vst.msk [vmem:[#allocation3 + $0x10] sm:$0xff] %vm4878, %v4859
        %4882 = vst.msk [vmem:[#allocation3 + $0x18] sm:$0xff] %vm4878, %v4861
        %4883 = vst.msk [vmem:[#allocation3 + $0x20] sm:$0xff] %vm4878, %v4863
        %4884 = vst.msk [vmem:[#allocation3 + $0x28] sm:$0xff] %vm4878, %v4865
        %4885 = vst.msk [vmem:[#allocation3 + $0x30] sm:$0xff] %vm4878, %v4867
        %4886 = vst.msk [vmem:[#allocation3 + $0x38] sm:$0xff] %vm4878, %v4869
        %v4887 = vld [vmem:[#allocation3] sm:$0xff]
        %v4888 = vld [vmem:[#allocation3 + $0x8] sm:$0xff]
        %v4889 = vld [vmem:[#allocation3 + $0x10] sm:$0xff]
        %v4890 = vld [vmem:[#allocation3 + $0x18] sm:$0xff]
        %v4891 = vld [vmem:[#allocation3 + $0x20] sm:$0xff]
        %v4892 = vld [vmem:[#allocation3 + $0x28] sm:$0xff]
        %v4893 = vld [vmem:[#allocation3 + $0x30] sm:$0xff]
        %v4894 = vld [vmem:[#allocation3 + $0x38] sm:$0xff]
        %v4895 = vpack.c.bf16 %v4888, %v4887
        %v4896 = vpack.c.bf16 %v4890, %v4889
        %v4897 = vpack.c.bf16 %v4892, %v4891
        %v4898 = vpack.c.bf16 %v4894, %v4893
        %v4899 = vld [vmem:[%s567] sm:$0xf]
        %v4900 = vld [vmem:[%s567 + $0x4] sm:$0xf]
        %v4901 = vld [vmem:[%s567 + $0x8] sm:$0xf]
        %v4902 = vld [vmem:[%s567 + $0xc] sm:$0xf]
        %v4903 = vld [vmem:[%s681] sm:$0x1]
        %v4905 = vlaneseq
        %v4906 = vshrl.u32 %v4905, 7
        %v4907 = vsub.s32 0, %v4906
        %v4908 = vrot.slane %v4903, %v4907
        %v4914 = vunpack.c.l.b16 %v4899
        %v4915 = vunpack.c.l.b16 %v4900
        %v4916 = vunpack.c.l.b16 %v4901
        %v4917 = vunpack.c.l.b16 %v4902
        %v4918 = vpack.c.b16 %v4915, %v4914
        %v4919 = vpack.c.b16 %v4917, %v4916
        %v4923 = vsel %vm920, %v4895, 0
        %v4926 = vsel %vm920, %v4896, 0
        %v4929 = vsel %vm920, %v4897, 0
        %v4932 = vsel %vm920, %v4898, 0
        %4934 = vmatprep.subr.bf16.mxu0 0
        %4935 = vmatpush1.bf16.msra.mxu0 %v4918
        %4936 = vmatprep.subr.bf16.mxu0 0
        %4937 = vmatpush1.bf16.msra.mxu0 %v4919
        %4938 = vmatprep.subr.bf16.mxu0 0
        %4939 = vmatpush1.bf16.msra.mxu0 0
        %4940 = vmatprep.subr.bf16.mxu0 0
        %4941 = vmatpush1.bf16.msra.mxu0 0
        %4942 = vmatprep.subr.bf16.mxu0 0
        %4943 = vmatpush1.bf16.msra.mxu0 0
        %4944 = vmatprep.subr.bf16.mxu0 0
        %4945 = vmatpush1.bf16.msra.mxu0 0
        %4946 = vmatprep.subr.bf16.mxu0 0
        %4947 = vmatpush1.bf16.msra.mxu0 0
        %4948 = vmatprep.subr.bf16.mxu0 0
        %4949 = vmatpush1.bf16.msra.mxu0 0
        %4950 = vmatprep.subr.bf16.mxu0 0
        %4951 = vmatpush1.bf16.msra.mxu0 0
        %4952 = vmatprep.subr.bf16.mxu0 0
        %4953 = vmatpush1.bf16.msra.mxu0 0
        %4954 = vmatprep.subr.bf16.mxu0 0
        %4955 = vmatpush1.bf16.msra.mxu0 0
        %4956 = vmatprep.subr.bf16.mxu0 0
        %4957 = vmatpush1.bf16.msra.mxu0 0
        %4958 = vmatprep.subr.bf16.mxu0 0
        %4959 = vmatpush1.bf16.msra.mxu0 0
        %4960 = vmatprep.subr.bf16.mxu0 0
        %4961 = vmatpush1.bf16.msra.mxu0 0
        %4962 = vmatprep.subr.bf16.mxu0 0
        %4963 = vmatpush1.bf16.msra.mxu0 0
        %4964 = vmatprep.subr.bf16.mxu0 0
        %4965 = vmatpush1.bf16.msra.mxu0 0
        %4966 = vmatprep.mubr.bf16.mxu0 0
        %4967 = vmatmul.mubr.bf16.gmra.mrb[0].mxu0 %v4923
        %v4968 = vpop.f32.mrb[0].mxu0
        %v4969 = vadd.f32 %v4908, %v4968
        %v4970 = vpop.f32.mrb[0].mxu0
        %v4971 = vpop.f32.mrb[0].mxu0
        %v4972 = vadd.f32 %v4908, %v4971
        %v4973 = vpop.f32.mrb[0].mxu0
        %4974 = vmatprep.mubr.bf16.mxu0 0
        %4975 = vmatmul.mubr.bf16.gmra.mrb[0].mxu0 %v4926
        %v4976 = vpop.f32.mrb[0].mxu0
        %v4977 = vadd.f32 %v4908, %v4976
        %v4978 = vpop.f32.mrb[0].mxu0
        %v4979 = vpop.f32.mrb[0].mxu0
        %v4980 = vadd.f32 %v4908, %v4979
        %v4981 = vpop.f32.mrb[0].mxu0
        %4982 = vmatprep.mubr.bf16.mxu0 0
        %4983 = vmatmul.mubr.bf16.gmra.mrb[0].mxu0 %v4929
        %v4984 = vpop.f32.mrb[0].mxu0
        %v4985 = vadd.f32 %v4908, %v4984
        %v4986 = vpop.f32.mrb[0].mxu0
        %v4987 = vpop.f32.mrb[0].mxu0
        %v4988 = vadd.f32 %v4908, %v4987
        %v4989 = vpop.f32.mrb[0].mxu0
        %4990 = vmatprep.mubr.bf16.mxu0 0
        %4991 = vmatmul.mubr.bf16.gmra.mrb[0].mxu0 %v4932
        %v4992 = vpop.f32.mrb[0].mxu0
        %v4993 = vadd.f32 %v4908, %v4992
        %v4994 = vpop.f32.mrb[0].mxu0
        %v4995 = vpop.f32.mrb[0].mxu0
        %v4996 = vadd.f32 %v4908, %v4995
        %v4997 = vpop.f32.mrb[0].mxu0
        %4998 = vdwg.mxu0
        %v4999 = vld [vmem:[%s685] sm:$0x3]
        %v5000 = vadd.f32 %v885, %v4969
        %v5001 = vadd.f32 %v886, %v4972
        %v5002 = vadd.f32 %v887, %v4977
        %v5003 = vadd.f32 %v888, %v4980
        %v5004 = vadd.f32 %v889, %v4985
        %v5005 = vadd.f32 %v890, %v4988
        %v5006 = vadd.f32 %v891, %v4993
        %v5007 = vadd.f32 %v892, %v4996
        %v5008 = vsel %vm920, %v5000, 0.0
        %5009 = vadd.xlane.f32.xlu0 %v5008
        %v5010 = vpop.xlane.xlu0 %5009
        %v5011 = vsel %vm920, %v5001, 0.0
        %5012 = vadd.xlane.f32.xlu0 %v5011
        %v5013 = vpop.xlane.xlu0 %5012
        %v5014 = vsel %vm920, %v5002, 0.0
        %5015 = vadd.xlane.f32.xlu0 %v5014
        %v5016 = vpop.xlane.xlu0 %5015
        %v5017 = vsel %vm920, %v5003, 0.0
        %5018 = vadd.xlane.f32.xlu0 %v5017
        %v5019 = vpop.xlane.xlu0 %5018
        %v5020 = vsel %vm920, %v5004, 0.0
        %5021 = vadd.xlane.f32.xlu0 %v5020
        %v5022 = vpop.xlane.xlu0 %5021
        %v5023 = vsel %vm920, %v5005, 0.0
        %5024 = vadd.xlane.f32.xlu0 %v5023
        %v5025 = vpop.xlane.xlu0 %5024
        %v5026 = vsel %vm920, %v5006, 0.0
        %5027 = vadd.xlane.f32.xlu0 %v5026
        %v5028 = vpop.xlane.xlu0 %5027
        %v5029 = vsel %vm920, %v5007, 0.0
        %5030 = vadd.xlane.f32.xlu0 %v5029
        %v5031 = vpop.xlane.xlu0 %5030
        %v5032 = vrcp.pop 32.0
        %v5033 = vmul.f32 %v5010, %v5032
        %v5034 = vmul.f32 %v5013, %v5032
        %v5035 = vmul.f32 %v5016, %v5032
        %v5036 = vmul.f32 %v5019, %v5032
        %v5037 = vmul.f32 %v5022, %v5032
        %v5038 = vmul.f32 %v5025, %v5032
        %v5039 = vmul.f32 %v5028, %v5032
        %v5040 = vmul.f32 %v5031, %v5032
        %v5041 = vsub.f32 %v5000, %v5033
        %v5042 = vsub.f32 %v5001, %v5034
        %v5043 = vsub.f32 %v5002, %v5035
        %v5044 = vsub.f32 %v5003, %v5036
        %v5045 = vsub.f32 %v5004, %v5037
        %v5046 = vsub.f32 %v5005, %v5038
        %v5047 = vsub.f32 %v5006, %v5039
        %v5048 = vsub.f32 %v5007, %v5040
        %v5049 = vmul.f32 %v5041, %v5041
        %v5050 = vmul.f32 %v5042, %v5042
        %v5051 = vmul.f32 %v5043, %v5043
        %v5052 = vmul.f32 %v5044, %v5044
        %v5053 = vmul.f32 %v5045, %v5045
        %v5054 = vmul.f32 %v5046, %v5046
        %v5055 = vmul.f32 %v5047, %v5047
        %v5056 = vmul.f32 %v5048, %v5048
        %v5057 = vsel %vm920, %v5049, 0.0
        %5058 = vadd.xlane.f32.xlu0 %v5057
        %v5059 = vpop.xlane.xlu0 %5058
        %v5060 = vsel %vm920, %v5050, 0.0
        %5061 = vadd.xlane.f32.xlu0 %v5060
        %v5062 = vpop.xlane.xlu0 %5061
        %v5063 = vsel %vm920, %v5051, 0.0
        %5064 = vadd.xlane.f32.xlu0 %v5063
        %v5065 = vpop.xlane.xlu0 %5064
        %v5066 = vsel %vm920, %v5052, 0.0
        %5067 = vadd.xlane.f32.xlu0 %v5066
        %v5068 = vpop.xlane.xlu0 %5067
        %v5069 = vsel %vm920, %v5053, 0.0
        %5070 = vadd.xlane.f32.xlu0 %v5069
        %v5071 = vpop.xlane.xlu0 %5070
        %v5072 = vsel %vm920, %v5054, 0.0
        %5073 = vadd.xlane.f32.xlu0 %v5072
        %v5074 = vpop.xlane.xlu0 %5073
        %v5075 = vsel %vm920, %v5055, 0.0
        %5076 = vadd.xlane.f32.xlu0 %v5075
        %v5077 = vpop.xlane.xlu0 %5076
        %v5078 = vsel %vm920, %v5056, 0.0
        %5079 = vadd.xlane.f32.xlu0 %v5078
        %v5080 = vpop.xlane.xlu0 %5079
        %v5081 = vmul.f32 %v5059, %v5032
        %v5082 = vmul.f32 %v5062, %v5032
        %v5083 = vmul.f32 %v5065, %v5032
        %v5084 = vmul.f32 %v5068, %v5032
        %v5085 = vmul.f32 %v5071, %v5032
        %v5086 = vmul.f32 %v5074, %v5032
        %v5087 = vmul.f32 %v5077, %v5032
        %v5088 = vmul.f32 %v5080, %v5032
        %v5089 = vadd.f32 %v5081, 1e-12
        %v5090 = vadd.f32 %v5082, 1e-12
        %v5091 = vadd.f32 %v5083, 1e-12
        %v5092 = vadd.f32 %v5084, 1e-12
        %v5093 = vadd.f32 %v5085, 1e-12
        %v5094 = vadd.f32 %v5086, 1e-12
        %v5095 = vadd.f32 %v5087, 1e-12
        %v5096 = vadd.f32 %v5088, 1e-12
        %v5097 = vrsqrt.pop %v5089
        %v5098 = vrsqrt.pop %v5090
        %v5099 = vrsqrt.pop %v5091
        %v5100 = vrsqrt.pop %v5092
        %v5101 = vrsqrt.pop %v5093
        %v5102 = vrsqrt.pop %v5094
        %v5103 = vrsqrt.pop %v5095
        %v5104 = vrsqrt.pop %v5096
        %v5105 = vmul.f32 %v5041, %v5097
        %v5106 = vmul.f32 %v5042, %v5098
        %v5107 = vmul.f32 %v5043, %v5099
        %v5108 = vmul.f32 %v5044, %v5100
        %v5109 = vmul.f32 %v5045, %v5101
        %v5110 = vmul.f32 %v5046, %v5102
        %v5111 = vmul.f32 %v5047, %v5103
        %v5112 = vmul.f32 %v5048, %v5104
        %v5113 = vlaneseq
        %v5114 = vshrl.u32 %v5113, 7
        %v5115 = vsub.s32 0, %v5114
        %v5116 = vrot.slane %v4999, %v5115
        %v5117 = vmul.f32 %v5105, %v5116
        %v5118 = vmul.f32 %v5106, %v5116
        %v5119 = vmul.f32 %v5107, %v5116
        %v5120 = vmul.f32 %v5108, %v5116
        %v5121 = vmul.f32 %v5109, %v5116
        %v5122 = vmul.f32 %v5110, %v5116
        %v5123 = vmul.f32 %v5111, %v5116
        %v5124 = vmul.f32 %v5112, %v5116
        %v5125 = vlaneseq
        %v5126 = vshrl.u32 %v5125, 7
        %v5127 = vsub.s32 1, %v5126
        %v5128 = vrot.slane %v4999, %v5127
        %v5129 = vadd.f32 %v5117, %v5128
        %v5130 = vadd.f32 %v5118, %v5128
        %v5131 = vadd.f32 %v5119, %v5128
        %v5132 = vadd.f32 %v5120, %v5128
        %v5133 = vadd.f32 %v5121, %v5128
        %v5134 = vadd.f32 %v5122, %v5128
        %v5135 = vadd.f32 %v5123, %v5128
        %v5136 = vadd.f32 %v5124, %v5128
        %v5137 = vpack.c.bf16 %v5130, %v5129
        %v5138 = vpack.c.bf16 %v5132, %v5131
        %v5139 = vpack.c.bf16 %v5134, %v5133
        %v5140 = vpack.c.bf16 %v5136, %v5135
        %v5141 = vld [vmem:[%s576] sm:$0xf]
        %v5142 = vld [vmem:[%s576 + $0x4] sm:$0xf]
        %v5143 = vld [vmem:[%s576 + $0x8] sm:$0xf]
        %v5144 = vld [vmem:[%s576 + $0xc] sm:$0xf]
        %v5145 = vld [vmem:[%s688] sm:$0x1]
        %v5147 = vlaneseq
        %v5148 = vshrl.u32 %v5147, 7
        %v5149 = vsub.s32 0, %v5148
        %v5150 = vrot.slane %v5145, %v5149
        %v5156 = vunpack.c.l.b16 %v5141
        %v5157 = vunpack.c.l.b16 %v5142
        %v5158 = vunpack.c.l.b16 %v5143
        %v5159 = vunpack.c.l.b16 %v5144
        %v5160 = vpack.c.b16 %v5157, %v5156
        %v5161 = vpack.c.b16 %v5159, %v5158
        %v5165 = vsel %vm920, %v5137, 0
        %v5168 = vsel %vm920, %v5138, 0
        %v5171 = vsel %vm920, %v5139, 0
        %v5174 = vsel %vm920, %v5140, 0
        %5176 = vmatprep.subr.bf16.mxu0 0
        %5177 = vmatpush1.bf16.msra.mxu0 %v5160
        %5178 = vmatprep.subr.bf16.mxu0 0
        %5179 = vmatpush1.bf16.msra.mxu0 %v5161
        %5180 = vmatprep.subr.bf16.mxu0 0
        %5181 = vmatpush1.bf16.msra.mxu0 0
        %5182 = vmatprep.subr.bf16.mxu0 0
        %5183 = vmatpush1.bf16.msra.mxu0 0
        %5184 = vmatprep.subr.bf16.mxu0 0
        %5185 = vmatpush1.bf16.msra.mxu0 0
        %5186 = vmatprep.subr.bf16.mxu0 0
        %5187 = vmatpush1.bf16.msra.mxu0 0
        %5188 = vmatprep.subr.bf16.mxu0 0
        %5189 = vmatpush1.bf16.msra.mxu0 0
        %5190 = vmatprep.subr.bf16.mxu0 0
        %5191 = vmatpush1.bf16.msra.mxu0 0
        %5192 = vmatprep.subr.bf16.mxu0 0
        %5193 = vmatpush1.bf16.msra.mxu0 0
        %5194 = vmatprep.subr.bf16.mxu0 0
        %5195 = vmatpush1.bf16.msra.mxu0 0
        %5196 = vmatprep.subr.bf16.mxu0 0
        %5197 = vmatpush1.bf16.msra.mxu0 0
        %5198 = vmatprep.subr.bf16.mxu0 0
        %5199 = vmatpush1.bf16.msra.mxu0 0
        %5200 = vmatprep.subr.bf16.mxu0 0
        %5201 = vmatpush1.bf16.msra.mxu0 0
        %5202 = vmatprep.subr.bf16.mxu0 0
        %5203 = vmatpush1.bf16.msra.mxu0 0
        %5204 = vmatprep.subr.bf16.mxu0 0
        %5205 = vmatpush1.bf16.msra.mxu0 0
        %5206 = vmatprep.subr.bf16.mxu0 0
        %5207 = vmatpush1.bf16.msra.mxu0 0
        %5208 = vmatprep.mubr.bf16.mxu0 0
        %5209 = vmatmul.mubr.bf16.gmra.mrb[0].mxu0 %v5165
        %v5210 = vpop.f32.mrb[0].mxu0
        %v5211 = vadd.f32 %v5150, %v5210
        %v5212 = vpop.f32.mrb[0].mxu0
        %v5213 = vpop.f32.mrb[0].mxu0
        %v5214 = vadd.f32 %v5150, %v5213
        %v5215 = vpop.f32.mrb[0].mxu0
        %5216 = vmatprep.mubr.bf16.mxu0 0
        %5217 = vmatmul.mubr.bf16.gmra.mrb[0].mxu0 %v5168
        %v5218 = vpop.f32.mrb[0].mxu0
        %v5219 = vadd.f32 %v5150, %v5218
        %v5220 = vpop.f32.mrb[0].mxu0
        %v5221 = vpop.f32.mrb[0].mxu0
        %v5222 = vadd.f32 %v5150, %v5221
        %v5223 = vpop.f32.mrb[0].mxu0
        %5224 = vmatprep.mubr.bf16.mxu0 0
        %5225 = vmatmul.mubr.bf16.gmra.mrb[0].mxu0 %v5171
        %v5226 = vpop.f32.mrb[0].mxu0
        %v5227 = vadd.f32 %v5150, %v5226
        %v5228 = vpop.f32.mrb[0].mxu0
        %v5229 = vpop.f32.mrb[0].mxu0
        %v5230 = vadd.f32 %v5150, %v5229
        %v5231 = vpop.f32.mrb[0].mxu0
        %5232 = vmatprep.mubr.bf16.mxu0 0
        %5233 = vmatmul.mubr.bf16.gmra.mrb[0].mxu0 %v5174
        %v5234 = vpop.f32.mrb[0].mxu0
        %v5235 = vadd.f32 %v5150, %v5234
        %v5236 = vpop.f32.mrb[0].mxu0
        %v5237 = vpop.f32.mrb[0].mxu0
        %v5238 = vadd.f32 %v5150, %v5237
        %v5239 = vpop.f32.mrb[0].mxu0
        %5240 = vdwg.mxu0
        %v5241 = vmul.f32 %v5211, %v5211
        %v5242 = vmul.f32 %v5214, %v5214
        %v5243 = vmul.f32 %v5219, %v5219
        %v5244 = vmul.f32 %v5222, %v5222
        %v5245 = vmul.f32 %v5227, %v5227
        %v5246 = vmul.f32 %v5230, %v5230
        %v5247 = vmul.f32 %v5235, %v5235
        %v5248 = vmul.f32 %v5238, %v5238
        %v5249 = vmul.f32 %v5211, %v5241
        %v5250 = vmul.f32 %v5214, %v5242
        %v5251 = vmul.f32 %v5219, %v5243
        %v5252 = vmul.f32 %v5222, %v5244
        %v5253 = vmul.f32 %v5227, %v5245
        %v5254 = vmul.f32 %v5230, %v5246
        %v5255 = vmul.f32 %v5235, %v5247
        %v5256 = vmul.f32 %v5238, %v5248
        %v5257 = vmul.f32 %v5249, 0.044715
        %v5258 = vmul.f32 %v5250, 0.044715
        %v5259 = vmul.f32 %v5251, 0.044715
        %v5260 = vmul.f32 %v5252, 0.044715
        %v5261 = vmul.f32 %v5253, 0.044715
        %v5262 = vmul.f32 %v5254, 0.044715
        %v5263 = vmul.f32 %v5255, 0.044715
        %v5264 = vmul.f32 %v5256, 0.044715
        %v5265 = vadd.f32 %v5211, %v5257
        %v5266 = vadd.f32 %v5214, %v5258
        %v5267 = vadd.f32 %v5219, %v5259
        %v5268 = vadd.f32 %v5222, %v5260
        %v5269 = vadd.f32 %v5227, %v5261
        %v5270 = vadd.f32 %v5230, %v5262
        %v5271 = vadd.f32 %v5235, %v5263
        %v5272 = vadd.f32 %v5238, %v5264
        %v5273 = vmul.f32 %v5265, 0.7978846
        %v5274 = vmul.f32 %v5266, 0.7978846
        %v5275 = vmul.f32 %v5267, 0.7978846
        %v5276 = vmul.f32 %v5268, 0.7978846
        %v5277 = vmul.f32 %v5269, 0.7978846
        %v5278 = vmul.f32 %v5270, 0.7978846
        %v5279 = vmul.f32 %v5271, 0.7978846
        %v5280 = vmul.f32 %v5272, 0.7978846
        %v5281 = vtanh.pop %v5273
        %v5282 = vtanh.pop %v5274
        %v5283 = vtanh.pop %v5275
        %v5284 = vtanh.pop %v5276
        %v5285 = vtanh.pop %v5277
        %v5286 = vtanh.pop %v5278
        %v5287 = vtanh.pop %v5279
        %v5288 = vtanh.pop %v5280
        %v5289 = vadd.f32 %v5281, 1.0
        %v5290 = vadd.f32 %v5282, 1.0
        %v5291 = vadd.f32 %v5283, 1.0
        %v5292 = vadd.f32 %v5284, 1.0
        %v5293 = vadd.f32 %v5285, 1.0
        %v5294 = vadd.f32 %v5286, 1.0
        %v5295 = vadd.f32 %v5287, 1.0
        %v5296 = vadd.f32 %v5288, 1.0
        %v5297 = vmul.f32 %v5289, 0.5
        %v5298 = vmul.f32 %v5290, 0.5
        %v5299 = vmul.f32 %v5291, 0.5
        %v5300 = vmul.f32 %v5292, 0.5
        %v5301 = vmul.f32 %v5293, 0.5
        %v5302 = vmul.f32 %v5294, 0.5
        %v5303 = vmul.f32 %v5295, 0.5
        %v5304 = vmul.f32 %v5296, 0.5
        %v5305 = vmul.f32 %v5211, %v5297
        %v5306 = vmul.f32 %v5214, %v5298
        %v5307 = vmul.f32 %v5219, %v5299
        %v5308 = vmul.f32 %v5222, %v5300
        %v5309 = vmul.f32 %v5227, %v5301
        %v5310 = vmul.f32 %v5230, %v5302
        %v5311 = vmul.f32 %v5235, %v5303
        %v5312 = vmul.f32 %v5238, %v5304
        %v5313 = vpack.c.bf16 %v5306, %v5305
        %v5314 = vpack.c.bf16 %v5308, %v5307
        %v5315 = vpack.c.bf16 %v5310, %v5309
        %v5316 = vpack.c.bf16 %v5312, %v5311
        %v5317 = vld [vmem:[%s693] sm:$0xf]
        %v5318 = vld [vmem:[%s693 + $0x4] sm:$0xf]
        %v5319 = vld [vmem:[%s693 + $0x8] sm:$0xf]
        %v5320 = vld [vmem:[%s693 + $0xc] sm:$0xf]
        %v5321 = vld [vmem:[%s693 + $0x10] sm:$0xf]
        %v5322 = vld [vmem:[%s693 + $0x14] sm:$0xf]
        %v5323 = vld [vmem:[%s693 + $0x18] sm:$0xf]
        %v5324 = vld [vmem:[%s693 + $0x1c] sm:$0xf]
        %v5325 = vld [vmem:[%s696] sm:$0x1]
        %v5327 = vlaneseq
        %v5328 = vshrl.u32 %v5327, 7
        %v5329 = vsub.s32 0, %v5328
        %v5330 = vrot.slane %v5325, %v5329
        %v5340 = vunpack.c.l.b16 %v5317
        %v5341 = vunpack.c.l.b16 %v5318
        %v5342 = vunpack.c.l.b16 %v5319
        %v5343 = vunpack.c.l.b16 %v5320
        %v5344 = vunpack.c.l.b16 %v5321
        %v5345 = vunpack.c.l.b16 %v5322
        %v5346 = vunpack.c.l.b16 %v5323
        %v5347 = vunpack.c.l.b16 %v5324
        %v5348 = vpack.c.b16 %v5341, %v5340
        %v5349 = vpack.c.b16 %v5343, %v5342
        %v5350 = vpack.c.b16 %v5345, %v5344
        %v5351 = vpack.c.b16 %v5347, %v5346
        %vm5356 = vcmask 523264
        %v5358 = vsel %vm5356, %v5313, 0
        %v5361 = vsel %vm5356, %v5314, 0
        %v5364 = vsel %vm5356, %v5315, 0
        %v5367 = vsel %vm5356, %v5316, 0
        %5369 = vmatprep.subr.bf16.mxu0 0
        %5370 = vmatpush1.bf16.msra.mxu0 %v5348
        %5371 = vmatprep.subr.bf16.mxu0 0
        %5372 = vmatpush1.bf16.msra.mxu0 %v5349
        %5373 = vmatprep.subr.bf16.mxu0 0
        %5374 = vmatpush1.bf16.msra.mxu0 %v5350
        %5375 = vmatprep.subr.bf16.mxu0 0
        %5376 = vmatpush1.bf16.msra.mxu0 %v5351
        %5377 = vmatprep.subr.bf16.mxu0 0
        %5378 = vmatpush1.bf16.msra.mxu0 0
        %5379 = vmatprep.subr.bf16.mxu0 0
        %5380 = vmatpush1.bf16.msra.mxu0 0
        %5381 = vmatprep.subr.bf16.mxu0 0
        %5382 = vmatpush1.bf16.msra.mxu0 0
        %5383 = vmatprep.subr.bf16.mxu0 0
        %5384 = vmatpush1.bf16.msra.mxu0 0
        %5385 = vmatprep.subr.bf16.mxu0 0
        %5386 = vmatpush1.bf16.msra.mxu0 0
        %5387 = vmatprep.subr.bf16.mxu0 0
        %5388 = vmatpush1.bf16.msra.mxu0 0
        %5389 = vmatprep.subr.bf16.mxu0 0
        %5390 = vmatpush1.bf16.msra.mxu0 0
        %5391 = vmatprep.subr.bf16.mxu0 0
        %5392 = vmatpush1.bf16.msra.mxu0 0
        %5393 = vmatprep.subr.bf16.mxu0 0
        %5394 = vmatpush1.bf16.msra.mxu0 0
        %5395 = vmatprep.subr.bf16.mxu0 0
        %5396 = vmatpush1.bf16.msra.mxu0 0
        %5397 = vmatprep.subr.bf16.mxu0 0
        %5398 = vmatpush1.bf16.msra.mxu0 0
        %5399 = vmatprep.subr.bf16.mxu0 0
        %5400 = vmatpush1.bf16.msra.mxu0 0
        %5401 = vmatprep.mubr.bf16.mxu0 0
        %5402 = vmatmul.mubr.bf16.gmra.mrb[0].mxu0 %v5358
        %v5403 = vpop.f32.mrb[0].mxu0
        %v5404 = vadd.f32 %v5330, %v5403
        %v5405 = vpop.f32.mrb[0].mxu0
        %v5406 = vpop.f32.mrb[0].mxu0
        %v5407 = vadd.f32 %v5330, %v5406
        %v5408 = vpop.f32.mrb[0].mxu0
        %5409 = vmatprep.mubr.bf16.mxu0 0
        %5410 = vmatmul.mubr.bf16.gmra.mrb[0].mxu0 %v5361
        %v5411 = vpop.f32.mrb[0].mxu0
        %v5412 = vadd.f32 %v5330, %v5411
        %v5413 = vpop.f32.mrb[0].mxu0
        %v5414 = vpop.f32.mrb[0].mxu0
        %v5415 = vadd.f32 %v5330, %v5414
        %v5416 = vpop.f32.mrb[0].mxu0
        %5417 = vmatprep.mubr.bf16.mxu0 0
        %5418 = vmatmul.mubr.bf16.gmra.mrb[0].mxu0 %v5364
        %v5419 = vpop.f32.mrb[0].mxu0
        %v5420 = vadd.f32 %v5330, %v5419
        %v5421 = vpop.f32.mrb[0].mxu0
        %v5422 = vpop.f32.mrb[0].mxu0
        %v5423 = vadd.f32 %v5330, %v5422
        %v5424 = vpop.f32.mrb[0].mxu0
        %5425 = vmatprep.mubr.bf16.mxu0 0
        %5426 = vmatmul.mubr.bf16.gmra.mrb[0].mxu0 %v5367
        %v5427 = vpop.f32.mrb[0].mxu0
        %v5428 = vadd.f32 %v5330, %v5427
        %v5429 = vpop.f32.mrb[0].mxu0
        %v5430 = vpop.f32.mrb[0].mxu0
        %v5431 = vadd.f32 %v5330, %v5430
        %v5432 = vpop.f32.mrb[0].mxu0
        %5433 = vdwg.mxu0
        %v5434 = vld [vmem:[%s700] sm:$0x3]
        %v5435 = vadd.f32 %v5129, %v5404
        %v5436 = vadd.f32 %v5130, %v5407
        %v5437 = vadd.f32 %v5131, %v5412
        %v5438 = vadd.f32 %v5132, %v5415
        %v5439 = vadd.f32 %v5133, %v5420
        %v5440 = vadd.f32 %v5134, %v5423
        %v5441 = vadd.f32 %v5135, %v5428
        %v5442 = vadd.f32 %v5136, %v5431
        %v5443 = vsel %vm920, %v5435, 0.0
        %5444 = vadd.xlane.f32.xlu0 %v5443
        %v5445 = vpop.xlane.xlu0 %5444
        %v5446 = vsel %vm920, %v5436, 0.0
        %5447 = vadd.xlane.f32.xlu0 %v5446
        %v5448 = vpop.xlane.xlu0 %5447
        %v5449 = vsel %vm920, %v5437, 0.0
        %5450 = vadd.xlane.f32.xlu0 %v5449
        %v5451 = vpop.xlane.xlu0 %5450
        %v5452 = vsel %vm920, %v5438, 0.0
        %5453 = vadd.xlane.f32.xlu0 %v5452
        %v5454 = vpop.xlane.xlu0 %5453
        %v5455 = vsel %vm920, %v5439, 0.0
        %5456 = vadd.xlane.f32.xlu0 %v5455
        %v5457 = vpop.xlane.xlu0 %5456
        %v5458 = vsel %vm920, %v5440, 0.0
        %5459 = vadd.xlane.f32.xlu0 %v5458
        %v5460 = vpop.xlane.xlu0 %5459
        %v5461 = vsel %vm920, %v5441, 0.0
        %5462 = vadd.xlane.f32.xlu0 %v5461
        %v5463 = vpop.xlane.xlu0 %5462
        %v5464 = vsel %vm920, %v5442, 0.0
        %5465 = vadd.xlane.f32.xlu0 %v5464
        %v5466 = vpop.xlane.xlu0 %5465
        %v5467 = vmul.f32 %v5445, %v5032
        %v5468 = vmul.f32 %v5448, %v5032
        %v5469 = vmul.f32 %v5451, %v5032
        %v5470 = vmul.f32 %v5454, %v5032
        %v5471 = vmul.f32 %v5457, %v5032
        %v5472 = vmul.f32 %v5460, %v5032
        %v5473 = vmul.f32 %v5463, %v5032
        %v5474 = vmul.f32 %v5466, %v5032
        %v5475 = vsub.f32 %v5435, %v5467
        %v5476 = vsub.f32 %v5436, %v5468
        %v5477 = vsub.f32 %v5437, %v5469
        %v5478 = vsub.f32 %v5438, %v5470
        %v5479 = vsub.f32 %v5439, %v5471
        %v5480 = vsub.f32 %v5440, %v5472
        %v5481 = vsub.f32 %v5441, %v5473
        %v5482 = vsub.f32 %v5442, %v5474
        %v5483 = vmul.f32 %v5475, %v5475
        %v5484 = vmul.f32 %v5476, %v5476
        %v5485 = vmul.f32 %v5477, %v5477
        %v5486 = vmul.f32 %v5478, %v5478
        %v5487 = vmul.f32 %v5479, %v5479
        %v5488 = vmul.f32 %v5480, %v5480
        %v5489 = vmul.f32 %v5481, %v5481
        %v5490 = vmul.f32 %v5482, %v5482
        %v5491 = vsel %vm920, %v5483, 0.0
        %5492 = vadd.xlane.f32.xlu0 %v5491
        %v5493 = vpop.xlane.xlu0 %5492
        %v5494 = vsel %vm920, %v5484, 0.0
        %5495 = vadd.xlane.f32.xlu0 %v5494
        %v5496 = vpop.xlane.xlu0 %5495
        %v5497 = vsel %vm920, %v5485, 0.0
        %5498 = vadd.xlane.f32.xlu0 %v5497
        %v5499 = vpop.xlane.xlu0 %5498
        %v5500 = vsel %vm920, %v5486, 0.0
        %5501 = vadd.xlane.f32.xlu0 %v5500
        %v5502 = vpop.xlane.xlu0 %5501
        %v5503 = vsel %vm920, %v5487, 0.0
        %5504 = vadd.xlane.f32.xlu0 %v5503
        %v5505 = vpop.xlane.xlu0 %5504
        %v5506 = vsel %vm920, %v5488, 0.0
        %5507 = vadd.xlane.f32.xlu0 %v5506
        %v5508 = vpop.xlane.xlu0 %5507
        %v5509 = vsel %vm920, %v5489, 0.0
        %5510 = vadd.xlane.f32.xlu0 %v5509
        %v5511 = vpop.xlane.xlu0 %5510
        %v5512 = vsel %vm920, %v5490, 0.0
        %5513 = vadd.xlane.f32.xlu0 %v5512
        %v5514 = vpop.xlane.xlu0 %5513
        %v5515 = vmul.f32 %v5493, %v5032
        %v5516 = vmul.f32 %v5496, %v5032
        %v5517 = vmul.f32 %v5499, %v5032
        %v5518 = vmul.f32 %v5502, %v5032
        %v5519 = vmul.f32 %v5505, %v5032
        %v5520 = vmul.f32 %v5508, %v5032
        %v5521 = vmul.f32 %v5511, %v5032
        %v5522 = vmul.f32 %v5514, %v5032
        %v5523 = vadd.f32 %v5515, 1e-12
        %v5524 = vadd.f32 %v5516, 1e-12
        %v5525 = vadd.f32 %v5517, 1e-12
        %v5526 = vadd.f32 %v5518, 1e-12
        %v5527 = vadd.f32 %v5519, 1e-12
        %v5528 = vadd.f32 %v5520, 1e-12
        %v5529 = vadd.f32 %v5521, 1e-12
        %v5530 = vadd.f32 %v5522, 1e-12
        %v5531 = vrsqrt.pop %v5523
        %v5532 = vrsqrt.pop %v5524
        %v5533 = vrsqrt.pop %v5525
        %v5534 = vrsqrt.pop %v5526
        %v5535 = vrsqrt.pop %v5527
        %v5536 = vrsqrt.pop %v5528
        %v5537 = vrsqrt.pop %v5529
        %v5538 = vrsqrt.pop %v5530
        %v5539 = vmul.f32 %v5475, %v5531
        %v5540 = vmul.f32 %v5476, %v5532
        %v5541 = vmul.f32 %v5477, %v5533
        %v5542 = vmul.f32 %v5478, %v5534
        %v5543 = vmul.f32 %v5479, %v5535
        %v5544 = vmul.f32 %v5480, %v5536
        %v5545 = vmul.f32 %v5481, %v5537
        %v5546 = vmul.f32 %v5482, %v5538
        %v5547 = vlaneseq
        %v5548 = vshrl.u32 %v5547, 7
        %v5549 = vsub.s32 0, %v5548
        %v5550 = vrot.slane %v5434, %v5549
        %v5551 = vmul.f32 %v5539, %v5550
        %v5552 = vmul.f32 %v5540, %v5550
        %v5553 = vmul.f32 %v5541, %v5550
        %v5554 = vmul.f32 %v5542, %v5550
        %v5555 = vmul.f32 %v5543, %v5550
        %v5556 = vmul.f32 %v5544, %v5550
        %v5557 = vmul.f32 %v5545, %v5550
        %v5558 = vmul.f32 %v5546, %v5550
        %v5559 = vlaneseq
        %v5560 = vshrl.u32 %v5559, 7
        %v5561 = vsub.s32 1, %v5560
        %v5562 = vrot.slane %v5434, %v5561
        %v5563 = vadd.f32 %v5551, %v5562
        %v5564 = vadd.f32 %v5552, %v5562
        %v5565 = vadd.f32 %v5553, %v5562
        %v5566 = vadd.f32 %v5554, %v5562
        %v5567 = vadd.f32 %v5555, %v5562
        %v5568 = vadd.f32 %v5556, %v5562
        %v5569 = vadd.f32 %v5557, %v5562
        %v5570 = vadd.f32 %v5558, %v5562
        %5571 = vst.msk [vmem:[#allocation2] sm:$0xff] %vm920, %v5563
        %5572 = vst.msk [vmem:[#allocation2 + $0x8] sm:$0xff] %vm920, %v5564
        %5573 = vst.msk [vmem:[#allocation2 + $0x10] sm:$0xff] %vm920, %v5565
        %5574 = vst.msk [vmem:[#allocation2 + $0x18] sm:$0xff] %vm920, %v5566
        %5575 = vst.msk [vmem:[#allocation2 + $0x20] sm:$0xff] %vm920, %v5567
        %5576 = vst.msk [vmem:[#allocation2 + $0x28] sm:$0xff] %vm920, %v5568
        %5577 = vst.msk [vmem:[#allocation2 + $0x30] sm:$0xff] %vm920, %v5569
        %5578 = vst.msk [vmem:[#allocation2 + $0x38] sm:$0xff] %vm920, %v5570
        %p5579 = scmp.eq.s32.totalorder %s38, 1
        // Predicated region
        $region89: #{tpu_custom_call.1} parent=71 // pred_check
          %p5580 = pneg %p5579
        $region90: #{tpu_custom_call.1} parent=71 // pred_check_branch
          %5582 = sbr.rel (%p5580) target = $region92
        $region91: #{tpu_custom_call.1} parent=71 // pred_region
          %v5583 = vlaneseq
          %v5584 = vshrl.u32 %v5583, 7
          %v5585 = vsub.s32 0, %v5584
          %v5586 = vrot.slane %v702, %v5585
          %5588 = vbcast.lane.b32.xlu0 %v5586, 256
          %v5589 = vpop.permute.xlu0 %5588
          %v5590 = vlaneseq
          %v5591 = vshrl.u32 %v5590, 7
          %v5592 = vsub.s32 0, %v5591
          %v5593 = vrot.slane %v703, %v5592
          %5595 = vbcast.lane.b32.xlu0 %v5593, 256
          %v5596 = vpop.permute.xlu0 %5595
          %v5597 = vlaneseq
          %v5598 = vshrl.u32 %v5597, 7
          %v5599 = vsub.s32 0, %v5598
          %v5600 = vrot.slane %v704, %v5599
          %5602 = vbcast.lane.b32.xlu0 %v5600, 256
          %v5603 = vpop.permute.xlu0 %5602
          %v5604 = vlaneseq
          %v5605 = vshrl.u32 %v5604, 7
          %v5606 = vsub.s32 0, %v5605
          %v5607 = vrot.slane %v705, %v5606
          %5609 = vbcast.lane.b32.xlu0 %v5607, 256
          %v5610 = vpop.permute.xlu0 %5609
          %v5611 = vlaneseq
          %v5612 = vshrl.u32 %v5611, 7
          %v5613 = vsub.s32 0, %v5612
          %v5614 = vrot.slane %v706, %v5613
          %5616 = vbcast.lane.b32.xlu0 %v5614, 256
          %v5617 = vpop.permute.xlu0 %5616
          %v5618 = vlaneseq
          %v5619 = vshrl.u32 %v5618, 7
          %v5620 = vsub.s32 0, %v5619
          %v5621 = vrot.slane %v707, %v5620
          %5623 = vbcast.lane.b32.xlu0 %v5621, 256
          %v5624 = vpop.permute.xlu0 %5623
          %v5625 = vlaneseq
          %v5626 = vshrl.u32 %v5625, 7
          %v5627 = vsub.s32 0, %v5626
          %v5628 = vrot.slane %v708, %v5627
          %5630 = vbcast.lane.b32.xlu0 %v5628, 256
          %v5631 = vpop.permute.xlu0 %5630
          %v5632 = vlaneseq
          %v5633 = vshrl.u32 %v5632, 7
          %v5634 = vsub.s32 0, %v5633
          %v5635 = vrot.slane %v709, %v5634
          %5637 = vbcast.lane.b32.xlu0 %v5635, 256
          %v5638 = vpop.permute.xlu0 %5637
          %v5639 = vmul.f32 %v5563, %v5589
          %v5640 = vmul.f32 %v5564, %v5596
          %v5641 = vmul.f32 %v5565, %v5603
          %v5642 = vmul.f32 %v5566, %v5610
          %v5643 = vmul.f32 %v5567, %v5617
          %v5644 = vmul.f32 %v5568, %v5624
          %v5645 = vmul.f32 %v5569, %v5631
          %v5646 = vmul.f32 %v5570, %v5638
          %v5647 = vsel %vm920, %v5639, 0.0
          %v5648 = vrot.slane %v5647, 4
          %v5649 = vadd.f32 %v5647, %v5648
          %v5650 = vrot.slane %v5649, 2
          %v5651 = vadd.f32 %v5649, %v5650
          %v5652 = vrot.slane %v5651, 1
          %v5653 = vadd.f32 %v5651, %v5652
          %v5654 = vsel %vm920, %v5640, 0.0
          %v5655 = vrot.slane %v5654, 4
          %v5656 = vadd.f32 %v5654, %v5655
          %v5657 = vrot.slane %v5656, 2
          %v5658 = vadd.f32 %v5656, %v5657
          %v5659 = vrot.slane %v5658, 1
          %v5660 = vadd.f32 %v5658, %v5659
          %v5661 = vsel %vm920, %v5641, 0.0
          %v5662 = vrot.slane %v5661, 4
          %v5663 = vadd.f32 %v5661, %v5662
          %v5664 = vrot.slane %v5663, 2
          %v5665 = vadd.f32 %v5663, %v5664
          %v5666 = vrot.slane %v5665, 1
          %v5667 = vadd.f32 %v5665, %v5666
          %v5668 = vsel %vm920, %v5642, 0.0
          %v5669 = vrot.slane %v5668, 4
          %v5670 = vadd.f32 %v5668, %v5669
          %v5671 = vrot.slane %v5670, 2
          %v5672 = vadd.f32 %v5670, %v5671
          %v5673 = vrot.slane %v5672, 1
          %v5674 = vadd.f32 %v5672, %v5673
          %v5675 = vsel %vm920, %v5643, 0.0
          %v5676 = vrot.slane %v5675, 4
          %v5677 = vadd.f32 %v5675, %v5676
          %v5678 = vrot.slane %v5677, 2
          %v5679 = vadd.f32 %v5677, %v5678
          %v5680 = vrot.slane %v5679, 1
          %v5681 = vadd.f32 %v5679, %v5680
          %v5682 = vsel %vm920, %v5644, 0.0
          %v5683 = vrot.slane %v5682, 4
          %v5684 = vadd.f32 %v5682, %v5683
          %v5685 = vrot.slane %v5684, 2
          %v5686 = vadd.f32 %v5684, %v5685
          %v5687 = vrot.slane %v5686, 1
          %v5688 = vadd.f32 %v5686, %v5687
          %v5689 = vsel %vm920, %v5645, 0.0
          %v5690 = vrot.slane %v5689, 4
          %v5691 = vadd.f32 %v5689, %v5690
          %v5692 = vrot.slane %v5691, 2
          %v5693 = vadd.f32 %v5691, %v5692
          %v5694 = vrot.slane %v5693, 1
          %v5695 = vadd.f32 %v5693, %v5694
          %v5696 = vsel %vm920, %v5646, 0.0
          %v5697 = vrot.slane %v5696, 4
          %v5698 = vadd.f32 %v5696, %v5697
          %v5699 = vrot.slane %v5698, 2
          %v5700 = vadd.f32 %v5698, %v5699
          %v5701 = vrot.slane %v5700, 1
          %v5702 = vadd.f32 %v5700, %v5701
          %v5711 = vcombine.low %v702, %v703
          %v5712 = vcombine.low %v704, %v705
          %v5713 = vcombine.low %v706, %v707
          %v5714 = vcombine.low %v708, %v709
          %v5716 = vunpack.c.l.s4 1966171168
          %v5717 = vunpack.c.0.s8 %v5716
          %v5718 = vlaneseq
          %v5719 = vshrl.u32 %v5718, 7
          %v5720 = vsub.s32 %v5717, %v5719
          %v5721 = vrot.slane %v5711, %v5720
          %v5723 = vunpack.c.l.s4 1966171168
          %v5724 = vunpack.c.0.s8 %v5723
          %v5725 = vlaneseq
          %v5726 = vshrl.u32 %v5725, 7
          %v5727 = vsub.s32 %v5724, %v5726
          %v5728 = vrot.slane %v5712, %v5727
          %v5730 = vunpack.c.l.s4 1966171168
          %v5731 = vunpack.c.0.s8 %v5730
          %v5732 = vlaneseq
          %v5733 = vshrl.u32 %v5732, 7
          %v5734 = vsub.s32 %v5731, %v5733
          %v5735 = vrot.slane %v5713, %v5734
          %v5737 = vunpack.c.l.s4 1966171168
          %v5738 = vunpack.c.0.s8 %v5737
          %v5739 = vlaneseq
          %v5740 = vshrl.u32 %v5739, 7
          %v5741 = vsub.s32 %v5738, %v5740
          %v5742 = vrot.slane %v5714, %v5741
          %v5743 = vcombine.low %v5721, %v5728
          %v5744 = vcombine.low %v5735, %v5742
          %v5746 = vunpack.c.l.s4 1966171168
          %v5747 = vunpack.c.0.s8 %v5746
          %v5748 = vlaneseq
          %v5749 = vshrl.u32 %v5748, 7
          %v5750 = vsub.s32 %v5747, %v5749
          %v5751 = vrot.slane %v5743, %v5750
          %v5753 = vunpack.c.l.s4 1966171168
          %v5754 = vunpack.c.0.s8 %v5753
          %v5755 = vlaneseq
          %v5756 = vshrl.u32 %v5755, 7
          %v5757 = vsub.s32 %v5754, %v5756
          %v5758 = vrot.slane %v5744, %v5757
          %v5759 = vcombine.low %v5751, %v5758
          %v5761 = vsel %vm1258, %v5759, 0.0
          %5762 = vadd.xlane.f32.xlu0 %v5761
          %v5763 = vpop.xlane.xlu0 %5762
          %v5764 = vmax.f32 %v5763, 1e-09
          %v5766 = vrot.slane %v5764, 1
          %v5767 = vrot.slane %v5764, 2
          %v5768 = vrot.slane %v5764, 3
          %v5769 = vrot.slane %v5764, 4
          %v5770 = vrot.slane %v5764, 5
          %v5771 = vrot.slane %v5764, 6
          %v5772 = vrot.slane %v5764, 7
          %v5781 = vrcp.pop %v5764
          %v5782 = vmul.f32 %v5653, %v5781
          %v5783 = vrcp.pop %v5766
          %v5784 = vmul.f32 %v5660, %v5783
          %v5785 = vrcp.pop %v5767
          %v5786 = vmul.f32 %v5667, %v5785
          %v5787 = vrcp.pop %v5768
          %v5788 = vmul.f32 %v5674, %v5787
          %v5789 = vrcp.pop %v5769
          %v5790 = vmul.f32 %v5681, %v5789
          %v5791 = vrcp.pop %v5770
          %v5792 = vmul.f32 %v5688, %v5791
          %v5793 = vrcp.pop %v5771
          %v5794 = vmul.f32 %v5695, %v5793
          %v5795 = vrcp.pop %v5772
          %v5796 = vmul.f32 %v5702, %v5795
          %v5805 = vrot.slane %v5784, 7
          %vm5806 = vcmask 1041409
          %v5807 = vsel %vm5806, %v5805, %v5782
          %v5808 = vrot.slane %v5786, 6
          %vm5809 = vcmask 1042434
          %v5810 = vsel %vm5809, %v5808, %v5807
          %v5811 = vrot.slane %v5788, 5
          %vm5812 = vcmask 1043459
          %v5813 = vsel %vm5812, %v5811, %v5810
          %v5814 = vrot.slane %v5790, 4
          %vm5815 = vcmask 1044484
          %v5816 = vsel %vm5815, %v5814, %v5813
          %v5817 = vrot.slane %v5792, 3
          %vm5818 = vcmask 1045509
          %v5819 = vsel %vm5818, %v5817, %v5816
          %v5820 = vrot.slane %v5794, 2
          %vm5821 = vcmask 1046534
          %v5822 = vsel %vm5821, %v5820, %v5819
          %v5823 = vrot.slane %v5796, 1
          %vm5824 = vcmask 1047559
          %v5825 = vsel %vm5824, %v5823, %v5822
          %5827 = vst.msk [vmem:[%s663] sm:$0xff] %vm920, %v5825
        $region92: #{tpu_custom_call.1} parent=71 // pred_fallthru
          _
        %s5828 = sand.u32 %s386, 1
        %s5829 = scalar_lea.sflag [#allocation6], %s5828
        %s5830 = sand.u32 %s386, 1
        %s5831 = smul.addr %s5830, 8
        %s5832 = scalar_lea.vmem [#allocation10], %s5831
        // Predicated region
        $region93: #{tpu_custom_call.1} parent=71 // pred_check
          %p5833 = pneg %p396
        $region94: #{tpu_custom_call.1} parent=71 // pred_check_branch
          %5835 = sbr.rel (%p5833) target = $region96
        $region95: #{tpu_custom_call.1} parent=71 // pred_region
          %s5837 = ssub.s32 128, 128
          %5838 = vsyncadd %s5829, %s5837
          %s5839 = smul.addr %s37, 128
          %s5840 = scalar_lea.hbm %s13, %s5839
          %s5842 = sshll.u32 %s5832, 4
          %s5843 = int_to_ptr.vmem [resolvable:$true] %s5842
          %5845 = dma.vmem_to_hbm [thread:$0]  %s5843, 128, %s5840, %s5829
        $region96: #{tpu_custom_call.1} parent=71 // pred_fallthru
          _
      $region72: #{tpu_custom_call.1} parent=5 // pred_fallthru
        _
      %p5846 = scmp.le.s32.totalorder 2, %s28
      // Predicated region
      $region97: #{tpu_custom_call.1} parent=5 // pred_check
        %p5847 = pneg %p5846
      $region98: #{tpu_custom_call.1} parent=5 // pred_check_branch
        %5849 = sbr.rel (%p5847) target = $region100
      $region99: #{tpu_custom_call.1} parent=5 // pred_region
        %s5850 = ssub.s32 %s28, 2
        // Predicated region
        $region101: #{tpu_custom_call.1} parent=99 // pred_check
          %p5851 = pneg %p402
        $region102: #{tpu_custom_call.1} parent=99 // pred_check_branch
          %5853 = sbr.rel (%p5851) target = $region104
        $region103: #{tpu_custom_call.1} parent=99 // pred_region
          %s5854 = sand.u32 %s387, 1
          %s5855 = scalar_lea.sflag [#allocation6], %s5854
          %s5856 = sand.u32 %s387, 1
          %s5857 = smul.addr %s5856, 8
          %s5858 = scalar_lea.vmem [#allocation10], %s5857
          %5859 = dma.done %s5855, 128
        $region104: #{tpu_custom_call.1} parent=99 // pred_fallthru
          _
      $region100: #{tpu_custom_call.1} parent=5 // pred_fallthru
        _
    $region6: #{tpu_custom_call.1} parent=1 // loop_footer
      %s32 = sadd.s32 1, %s28
    $region7: #{tpu_custom_call.1} parent=1 // loop_footer_branch
      %27 = sbr.rel target = $region3
    $region8: #{tpu_custom_call.1} parent=1 // loop_exit
      _
    %5860 = vsyncpa [#allocation5], 1
    %s5861 = scalar_lea.sflag [#allocation5], 1
    %5862 = vsyncpa %s5861, 1
    %5863 = vsyncpa [#allocation8], 1
    %s5864 = scalar_lea.sflag [#allocation8], 1
    %5865 = vsyncpa %s5864, 1
    %5866 = vsyncpa [#allocation6], 1
    %s5867 = scalar_lea.sflag [#allocation6], 1
    %5868 = vsyncpa %s5867, 1

</llo_original>
